<compile_context>
chip_gen: v7x
topology: tpu7x:2x2x1
jax: 0.10.0
libtpu: 0.0.40
codegen_flags: <defaults>
</compile_context>

<pallas_src>
import functools

import jax
import jax.numpy as jnp
from jax.experimental import pallas as pl
from jax.experimental.pallas import tpu as pltpu

_VMEM_LIMIT = 64 * 1024 * 1024


def _compiler_params():
    return pltpu.CompilerParams(dimension_semantics=("parallel",),
                                vmem_limit_bytes=_VMEM_LIMIT)


def _row_tile(m):
    for t in (1024, 512, 256, 128, 64, 32, 16, 8):
        if m % t == 0:
            return t
    return m


def _pick_group(bp, l, c, budget_bytes=2 * 1024 * 1024):
    """Largest divisor of bp that fits the VMEM budget, preferring grid >= 2."""
    divs = [g for g in range(1, bp + 1)
            if bp % g == 0 and g * l * c * 4 <= budget_bytes]
    if not divs:
        return 1
    multi = [g for g in divs if bp // g >= 2]
    return max(multi) if multi else max(divs)


# ----------------------------- Pallas kernels -----------------------------

def _dyna_op_kernel(x_ref, wc_ref, bc_ref, wg_ref, bg_ref, exp_ref, wo_ref,
                    bo_ref, o_ref):
    """Fused DynaMixerOp on a (Gb, L, C) block of sequences."""
    g, l, c = x_ref.shape              # Gb, seq_len, channels
    k = wc_ref.shape[0]                # nh * rd
    nh = exp_ref.shape[0]
    rd = k // nh
    l2 = bg_ref.shape[0]               # L * L

    x = x_ref[...].astype(jnp.float32)

    # compress:  wcomp[g, l, k'] with k' = r*nh + h (weight rows pre-permuted).
    wc_b = jnp.broadcast_to(wc_ref[...], (g, k, c))
    wcomp = jnp.einsum('glc,gkc->glk', x, wc_b,
                       preferred_element_type=jnp.float32)
    wcomp = wcomp + bc_ref[...][None]                      # (1,K) -> (1,1,K)

    # generate: mixing logits gen[g, m, h],  m = i*L + j  (flat (L,L) matrix).
    gen = jnp.zeros((g, l2, nh), jnp.float32)
    for r in range(rd):
        wg_r = jnp.broadcast_to(wg_ref[r], (g, l2, l))     # (Gb, L*L, L)
        wc_r = wcomp[:, :, r * nh:(r + 1) * nh]            # (Gb, L, nh)
        gen = gen + jnp.einsum('gml,glh->gmh', wg_r, wc_r,
                               preferred_element_type=jnp.float32)
    gen = gen + bg_ref[...][None]                          # (L*L,1) -> (1,L*L,1)

    # softmax over the source index i (== dim=-2 of the (L, L) mixing matrix),
    # stabilised with the exact per-(g, j, h) max (two passes over i).
    mx = gen[:, 0:l, :]
    for i in range(1, l):
        mx = jnp.maximum(mx, gen[:, i * l:(i + 1) * l, :])

    # token mixing, accumulated per source index i; heads handled by a 0/1
    # head->channel expansion matmul (heads are contiguous along C).
    exp_b = jnp.broadcast_to(exp_ref[...], (g, nh, c))
    acc = jnp.zeros((g, l, c), jnp.float32)
    den = jnp.zeros((g, l, c), jnp.float32)
    for i in range(l):
        e_i = jnp.exp(gen[:, i * l:(i + 1) * l, :] - mx)   # (Gb, L_j, nh)
        e_ic = jnp.einsum('gjh,ghc->gjc', e_i, exp_b,
                          preferred_element_type=jnp.float32)  # (Gb, L_j, C)
        v_i = x[:, i:i + 1, :]                             # (Gb, 1, C)
        acc = acc + e_ic * v_i
        den = den + e_ic
    mixed = acc * pl.reciprocal(den, approx=True)

    # out linear
    wo_b = jnp.broadcast_to(wo_ref[...], (g, c, c))
    y = jnp.einsum('gjc,gcd->gjd', mixed, wo_b,
                   preferred_element_type=jnp.float32) + bo_ref[...][None]
    o_ref[...] = y.astype(o_ref.dtype)


def dynamixer_op_pallas(x, p, exp_mat):
    """x: (Bp, L, C) -> (Bp, L, C) via one fused pallas_call."""
    bp, l, c = x.shape
    k = p["compress_w"].shape[0]
    rd = p["generate_w"].shape[0]
    nh = exp_mat.shape[0]
    l2 = l * l
    gb = _pick_group(bp, l, c)
    return pl.pallas_call(
        _dyna_op_kernel,
        out_shape=jax.ShapeDtypeStruct((bp, l, c), x.dtype),
        grid=(bp // gb,),
        in_specs=[
            pl.BlockSpec((gb, l, c), lambda i: (i, 0, 0)),
            pl.BlockSpec((k, c), lambda i: (0, 0)),
            pl.BlockSpec((1, k), lambda i: (0, 0)),
            pl.BlockSpec((rd, l2, l), lambda i: (0, 0, 0)),
            pl.BlockSpec((l2, 1), lambda i: (0, 0)),
            pl.BlockSpec((nh, c), lambda i: (0, 0)),
            pl.BlockSpec((c, c), lambda i: (0, 0)),
            pl.BlockSpec((1, c), lambda i: (0, 0)),
        ],
        out_specs=pl.BlockSpec((gb, l, c), lambda i: (i, 0, 0)),
        compiler_params=_compiler_params(),
    )(x, p["compress_w"], p["compress_b"], p["generate_w"], p["generate_b"],
      exp_mat, p["out_w"], p["out_b"])


def _block_tail_kernel(x_ref, h_ref, w_ref, wmc_ref, w1_ref, b1_ref, w2_ref,
                       b2_ref, wp_ref, bp_ref, o_ref):
    """Fused mlp_c + reweight MLP + 3-way combine + proj for one batch element."""
    c_dim = x_ref.shape[2]
    x = x_ref[0].astype(jnp.float32)                       # (HW, C)
    h = h_ref[0].astype(jnp.float32)
    w = w_ref[0].astype(jnp.float32)

    cch = jnp.dot(x, wmc_ref[...], preferred_element_type=jnp.float32)  # mlp_c (qkv_bias=False)

    # reweight: mean over tokens -> Linear -> GELU -> Linear -> softmax over 3.
    # TODO(synk): FeedForward class not provided; assumed Linear -> GELU(tanh) -> Linear (dropout=0).
    a = jnp.mean(h + w + cch, axis=0, keepdims=True)                    # (1, C)
    a = jnp.dot(a, w1_ref[...], preferred_element_type=jnp.float32) + b1_ref[...]
    a = jax.nn.gelu(a, approximate=True)
    a = jnp.dot(a, w2_ref[...], preferred_element_type=jnp.float32) + b2_ref[...]  # (1, 3C), k-major cols
    a0 = a[:, 0:c_dim]
    a1 = a[:, c_dim:2 * c_dim]
    a2 = a[:, 2 * c_dim:3 * c_dim]
    m = jnp.maximum(jnp.maximum(a0, a1), a2)
    e0 = jnp.exp(a0 - m)
    e1 = jnp.exp(a1 - m)
    e2 = jnp.exp(a2 - m)
    rs = pl.reciprocal(e0 + e1 + e2, approx=True)

    comb = h * (e0 * rs) + w * (e1 * rs) + cch * (e2 * rs)              # (HW, C)
    y = jnp.dot(comb, wp_ref[...], preferred_element_type=jnp.float32) + bp_ref[...]
    # proj_drop: rate 0.0 -> identity
    o_ref[0] = y.astype(o_ref.dtype)


def block_tail_pallas(x_tok, h_tok, w_tok, p):
    b, hw, c = x_tok.shape
    act = pl.BlockSpec((1, hw, c), lambda i: (i, 0, 0))

    def full2(shape):
        return pl.BlockSpec(shape, lambda i: (0, 0))

    return pl.pallas_call(
        _block_tail_kernel,
        out_shape=jax.ShapeDtypeStruct((b, hw, c), x_tok.dtype),
        grid=(b,),
        in_specs=[act, act, act,
                  full2(p["mlp_c_w"].shape),
                  full2(p["rw_fc1_w"].shape), full2(p["rw_fc1_b"].shape),
                  full2(p["rw_fc2_w"].shape), full2(p["rw_fc2_b"].shape),
                  full2(p["proj_w"].shape), full2(p["proj_b"].shape)],
        out_specs=act,
        compiler_params=_compiler_params(),
    )(x_tok, h_tok, w_tok, p["mlp_c_w"], p["rw_fc1_w"], p["rw_fc1_b"],
      p["rw_fc2_w"], p["rw_fc2_b"], p["proj_w"], p["proj_b"])


def _linear_kernel(x_ref, w_ref, b_ref, o_ref):
    o_ref[...] = (jnp.dot(x_ref[...], w_ref[...],
                          preferred_element_type=jnp.float32)
                  + b_ref[...]).astype(o_ref.dtype)


def linear_pallas(x, w_t, b_row):
    """y = x @ w_t + b.   x:(M,K)  w_t:(K,N) pre-transposed  b_row:(1,N)."""
    m, k = x.shape
    n = w_t.shape[1]
    tm = _row_tile(m)
    return pl.pallas_call(
        _linear_kernel,
        out_shape=jax.ShapeDtypeStruct((m, n), x.dtype),
        grid=(m // tm,),
        in_specs=[pl.BlockSpec((tm, k), lambda i: (i, 0)),
                  pl.BlockSpec((k, n), lambda i: (0, 0)),
                  pl.BlockSpec((1, n), lambda i: (0, 0))],
        out_specs=pl.BlockSpec((tm, n), lambda i: (i, 0)),
        compiler_params=_compiler_params(),
    )(x, w_t, b_row)


def _layernorm_kernel(x_ref, g_ref, b_ref, o_ref):
    x = x_ref[...].astype(jnp.float32)
    mu = jnp.mean(x, axis=-1, keepdims=True)
    var = jnp.mean(jnp.square(x - mu), axis=-1, keepdims=True)
    y = (x - mu) * jax.lax.rsqrt(var + 1e-5)
    o_ref[...] = (y * g_ref[...] + b_ref[...]).astype(o_ref.dtype)


def layernorm_pallas(x, gamma_row, beta_row):
    m, c = x.shape
    tm = _row_tile(m)
    return pl.pallas_call(
        _layernorm_kernel,
        out_shape=jax.ShapeDtypeStruct((m, c), x.dtype),
        grid=(m // tm,),
        in_specs=[pl.BlockSpec((tm, c), lambda i: (i, 0)),
                  pl.BlockSpec((1, c), lambda i: (0, 0)),
                  pl.BlockSpec((1, c), lambda i: (0, 0))],
        out_specs=pl.BlockSpec((tm, c), lambda i: (i, 0)),
        compiler_params=_compiler_params(),
    )(x, gamma_row, beta_row)


# ----------------------------- parameter init -----------------------------

def _init_linear_raw(key, out_f, in_f, scale=0.05, bias=True):
    kw, kb = jax.random.split(key)
    w = scale * jax.random.normal(kw, (out_f, in_f), jnp.float32)
    if bias:
        b = scale * jax.random.normal(kb, (out_f,), jnp.float32)
    else:
        b = jnp.zeros((out_f,), jnp.float32)
    return w, b


def _init_mixer_op(key, dim, seq_len, num_head, reduced_dim):
    k1, k2, k3 = jax.random.split(key, 3)
    wc, bc = _init_linear_raw(k1, num_head * reduced_dim, dim)            # compress
    wg, bg = _init_linear_raw(k2, seq_len * seq_len, seq_len * reduced_dim)  # generate
    wo, bo = _init_linear_raw(k3, dim, dim)                               # out
    # compress rows permuted to r-major: new row r*nh + h <- old row h*rd + r
    perm = jnp.array([h * reduced_dim + r
                      for r in range(reduced_dim)
                      for h in range(num_head)], jnp.int32)
    # generate weight rearranged (kernel layout): wgen[r, m, l] = wg[m, l*rd + r]
    wg_r = jnp.transpose(wg.reshape(seq_len * seq_len, seq_len, reduced_dim),
                         (2, 0, 1))
    return {
        "compress_w": wc[perm],                          # (nh*rd, C)
        "compress_b": bc[perm].reshape(1, -1),           # (1, nh*rd)
        "generate_w": wg_r,                              # (rd, L*L, L)
        "generate_b": bg.reshape(seq_len * seq_len, 1),  # (L*L, 1)
        "out_w": wo.T,                                   # (C, C)
        "out_b": bo.reshape(1, -1),                      # (1, C)
    }


def _init_block(key, dim, num_patch, num_head, reduced_dim, qkv_bias=False):
    ks = jax.random.split(key, 6)
    p = {
        "mix_h": _init_mixer_op(ks[0], dim, num_patch, num_head, reduced_dim),
        "mix_w": _init_mixer_op(ks[1], dim, num_patch, num_head, reduced_dim),
    }
    wm, _ = _init_linear_raw(ks[2], dim, dim, bias=qkv_bias)
    p["mlp_c_w"] = wm.T                                   # qkv_bias=False -> no bias
    w1, b1 = _init_linear_raw(ks[3], dim // 4, dim)
    w2, b2 = _init_linear_raw(ks[4], dim * 3, dim // 4)
    # fc2 columns permuted so the 3 reweight branches are contiguous:
    # new column k*C + c <- old column c*3 + k   (matches .reshape(B, C, 3))
    perm2 = jnp.array([c * 3 + kk for kk in range(3) for c in range(dim)],
                      jnp.int32)
    p["rw_fc1_w"] = w1.T
    p["rw_fc1_b"] = b1.reshape(1, -1)
    p["rw_fc2_w"] = w2.T[:, perm2]
    p["rw_fc2_b"] = b2[perm2].reshape(1, -1)
    wp, bp_ = _init_linear_raw(ks[5], dim, dim)
    p["proj_w"] = wp.T
    p["proj_b"] = bp_.reshape(1, -1)
    # constant 0/1 head -> channel expansion matrix (heads contiguous along C)
    p["head_expand"] = jnp.repeat(jnp.eye(num_head, dtype=jnp.float32),
                                  dim // num_head, axis=1)
    return p


def init_dynamixer(key, in_channels, hidden_dim, patch_size, image_size,
                   num_mixers, num_head=8, reduced_dim=2):
    num_patch = image_size[0] // patch_size
    keys = jax.random.split(key, 1 + num_mixers)
    kw, kb = jax.random.split(keys[0])
    conv_w = 0.05 * jax.random.normal(
        kw, (hidden_dim, in_channels, patch_size, patch_size), jnp.float32)
    conv_b = 0.05 * jax.random.normal(kb, (hidden_dim,), jnp.float32)
    return {
        "patch_w": conv_w.reshape(hidden_dim, -1).T,      # (Cin*p*p, hidden)
        "patch_b": conv_b.reshape(1, -1),
        "blocks": [_init_block(k, hidden_dim, num_patch, num_head, reduced_dim)
                   for k in keys[1:]],
        "ln_g": jnp.ones((1, hidden_dim), jnp.float32),
        "ln_b": jnp.zeros((1, hidden_dim), jnp.float32),
    }


# ----------------------------- forward -----------------------------

def patch_embed_forward(x, w_t, b_row, patch):
    # NCHW -> im2col patches, then one Pallas matmul (conv with stride=kernel).
    b, cin, ih, iw = x.shape
    hp, wp = ih // patch, iw // patch
    xp = x.reshape(b, cin, hp, patch, wp, patch)
    xp = xp.transpose(0, 2, 4, 1, 3, 5).reshape(b * hp * wp, cin * patch * patch)
    y = linear_pallas(xp, w_t, b_row)
    return y.reshape(b, hp, wp, -1)


def dynamixer_block_forward(x, p):
    b, hh, ww, c = x.shape
    # H-direction mixing: small XLA transpose, then ONE fused Pallas kernel.
    xt = jnp.transpose(x, (0, 2, 1, 3)).reshape(b * ww, hh, c)
    h = dynamixer_op_pallas(xt, p["mix_h"], p["head_expand"])
    h = h.reshape(b, ww, hh, c).transpose(0, 2, 1, 3).reshape(b, hh * ww, c)
    # W-direction mixing: free reshape, ONE fused Pallas kernel.
    w = dynamixer_op_pallas(x.reshape(b * hh, ww, c), p["mix_w"],
                            p["head_expand"])
    w = w.reshape(b, hh * ww, c)
    # mlp_c + reweight + combine + proj fused per batch element.
    out = block_tail_pallas(x.reshape(b, hh * ww, c), h, w, p)
    return out.reshape(b, hh, ww, c)


def dynamixer_forward(x, params, patch_size):
    x = patch_embed_forward(x, params["patch_w"], params["patch_b"], patch_size)
    for bp in params["blocks"]:
        x = dynamixer_block_forward(x, bp)
    b, hh, ww, c = x.shape
    y = layernorm_pallas(x.reshape(-1, c), params["ln_g"], params["ln_b"])
    return y.reshape(b, hh, ww, c)


# ----------------------------- main -----------------------------

if __name__ == "__main__":
    in_channels, hidden_dim, patch_size = 3, 32, 4
    image_size = (16, 16)
    num_mixers = 2
    num_head, reduced_dim = 8, 2

    key = jax.random.PRNGKey(0)
    kp, kx = jax.random.split(key)
    params = init_dynamixer(kp, in_channels, hidden_dim, patch_size, image_size,
                            num_mixers, num_head, reduced_dim)
    x = jax.random.normal(kx, (2, in_channels, image_size[0], image_size[1]),
                          jnp.float32)

    fwd = jax.jit(functools.partial(dynamixer_forward, patch_size=patch_size))
    y = fwd(x, params)
    jax.block_until_ready(y)
    assert y.shape == (2, image_size[0] // patch_size,
                       image_size[1] // patch_size, hidden_dim)
    assert bool(jnp.all(jnp.isfinite(y)))
    print("KERNEL_OK")
</pallas_src>

<mosaic_0001>
module attributes {stable_mosaic.version = 11 : i64} {
  func.func @_linear_kernel(%arg0: i32, %arg1: memref<32x48xf32, #tpu.memory_space<vmem>>, %arg2: memref<48x32xf32, #tpu.memory_space<vmem>>, %arg3: memref<1x32xf32, #tpu.memory_space<vmem>>, %arg4: memref<32x32xf32, #tpu.memory_space<vmem>>) attributes {dimension_semantics = [#tpu.dimension_semantics<parallel>], iteration_bounds = array<i64: 1>, scalar_prefetch = 0 : i64, scratch_operands = 0 : i64, tpu.core_type = #tpu.core_type<tc>, window_params = [{transform_indices = @transform_0, window_bounds = array<i64: 32, 48>}, {pipeline_mode = #tpu.pipeline_mode<synchronous>, transform_indices = @transform_1, window_bounds = array<i64: 48, 32>}, {pipeline_mode = #tpu.pipeline_mode<synchronous>, transform_indices = @transform_2, window_bounds = array<i64: 1, 32>}, {transform_indices = @transform_3, window_bounds = array<i64: 32, 32>}]} {
    %c0 = arith.constant 0 : index
    %c0_0 = arith.constant 0 : index
    %0 = vector.load %arg1[%c0, %c0_0] : memref<32x48xf32, #tpu.memory_space<vmem>>, vector<32x48xf32>
    %c0_1 = arith.constant 0 : index
    %c0_2 = arith.constant 0 : index
    %1 = vector.load %arg2[%c0_1, %c0_2] : memref<48x32xf32, #tpu.memory_space<vmem>>, vector<48x32xf32>
    %cst = arith.constant dense<0.000000e+00> : vector<32x32xf32>
    %2 = tpu.matmul %0, %1, %cst {dimension_numbers = #tpu.dot_dimension_numbers<[1], [0], [0], [1], [0, 0, 1, 1], [], []>} : vector<32x48xf32>, vector<48x32xf32>, vector<32x32xf32> -> vector<32x32xf32>
    %c0_3 = arith.constant 0 : index
    %c0_4 = arith.constant 0 : index
    %3 = vector.load %arg3[%c0_3, %c0_4] : memref<1x32xf32, #tpu.memory_space<vmem>>, vector<1x32xf32>
    %4 = vector.broadcast %3 : vector<1x32xf32> to vector<32x32xf32>
    %5 = arith.addf %2, %4 : vector<32x32xf32>
    %c0_5 = arith.constant 0 : index
    %c0_6 = arith.constant 0 : index
    %6 = vector.load %arg4[%c0_5, %c0_6] : memref<32x32xf32, #tpu.memory_space<vmem>>, vector<32x32xf32>
    tpu.vector_store %arg4[%c0_5, %c0_6], %5 {strides = array<i32>} : memref<32x32xf32, #tpu.memory_space<vmem>>, vector<32x32xf32>,
    return
  }
  func.func @transform_0(%arg0: i32) -> (i32, i32) {
    %c0_i32 = arith.constant 0 : i32
    %c0_i32_0 = arith.constant 0 : i32
    return %arg0, %c0_i32 : i32, i32
  }
  func.func @transform_1(%arg0: i32) -> (i32, i32) {
    %c0_i32 = arith.constant 0 : i32
    %c0_i32_0 = arith.constant 0 : i32
    %c0_i32_1 = arith.constant 0 : i32
    return %c0_i32, %c0_i32_0 : i32, i32
  }
  func.func @transform_2(%arg0: i32) -> (i32, i32) {
    %c0_i32 = arith.constant 0 : i32
    %c0_i32_0 = arith.constant 0 : i32
    %c0_i32_1 = arith.constant 0 : i32
    return %c0_i32, %c0_i32_0 : i32, i32
  }
  func.func @transform_3(%arg0: i32) -> (i32, i32) {
    %c0_i32 = arith.constant 0 : i32
    %c0_i32_0 = arith.constant 0 : i32
    return %arg0, %c0_i32 : i32, i32
  }
}

module attributes {stable_mosaic.version = 11 : i64} {
  func.func @_layernorm_kernel(%arg0: i32, %arg1: memref<32x32xf32, #tpu.memory_space<vmem>>, %arg2: memref<1x32xf32, #tpu.memory_space<vmem>>, %arg3: memref<1x32xf32, #tpu.memory_space<vmem>>, %arg4: memref<32x32xf32, #tpu.memory_space<vmem>>) attributes {dimension_semantics = [#tpu.dimension_semantics<parallel>], iteration_bounds = array<i64: 1>, scalar_prefetch = 0 : i64, scratch_operands = 0 : i64, tpu.core_type = #tpu.core_type<tc>, window_params = [{transform_indices = @transform_0, window_bounds = array<i64: 32, 32>}, {pipeline_mode = #tpu.pipeline_mode<synchronous>, transform_indices = @transform_1, window_bounds = array<i64: 1, 32>}, {pipeline_mode = #tpu.pipeline_mode<synchronous>, transform_indices = @transform_2, window_bounds = array<i64: 1, 32>}, {transform_indices = @transform_3, window_bounds = array<i64: 32, 32>}]} {
    %c0 = arith.constant 0 : index
    %c0_0 = arith.constant 0 : index
    %0 = vector.load %arg1[%c0, %c0_0] : memref<32x32xf32, #tpu.memory_space<vmem>>, vector<32x32xf32>
    %cst = arith.constant dense<0.000000e+00> : vector<32xf32>
    %1 = vector.multi_reduction <add>, %0, %cst [1] : vector<32x32xf32> to vector<32xf32>
    %2 = vector.shape_cast %1 : vector<32xf32> to vector<32x1xf32>
    %cst_1 = arith.constant 3.200000e+01 : f32
    %3 = vector.broadcast %cst_1 : f32 to vector<32x1xf32>
    %4 = arith.divf %2, %3 : vector<32x1xf32>
    %5 = vector.broadcast %4 : vector<32x1xf32> to vector<32x32xf32>
    %6 = arith.subf %0, %5 : vector<32x32xf32>
    %7 = arith.mulf %6, %6 : vector<32x32xf32>
    %cst_2 = arith.constant dense<0.000000e+00> : vector<32xf32>
    %8 = vector.multi_reduction <add>, %7, %cst_2 [1] : vector<32x32xf32> to vector<32xf32>
    %9 = vector.shape_cast %8 : vector<32xf32> to vector<32x1xf32>
    %cst_3 = arith.constant 3.200000e+01 : f32
    %10 = vector.broadcast %cst_3 : f32 to vector<32x1xf32>
    %11 = arith.divf %9, %10 : vector<32x1xf32>
    %12 = vector.broadcast %4 : vector<32x1xf32> to vector<32x32xf32>
    %13 = arith.subf %0, %12 : vector<32x32xf32>
    %cst_4 = arith.constant 9.99999974E-6 : f32
    %14 = vector.broadcast %cst_4 : f32 to vector<32x1xf32>
    %15 = arith.addf %11, %14 : vector<32x1xf32>
    %16 = math.rsqrt %15 : vector<32x1xf32>
    %17 = vector.broadcast %16 : vector<32x1xf32> to vector<32x32xf32>
    %18 = arith.mulf %13, %17 : vector<32x32xf32>
    %c0_5 = arith.constant 0 : index
    %c0_6 = arith.constant 0 : index
    %19 = vector.load %arg2[%c0_5, %c0_6] : memref<1x32xf32, #tpu.memory_space<vmem>>, vector<1x32xf32>
    %20 = vector.broadcast %19 : vector<1x32xf32> to vector<32x32xf32>
    %21 = arith.mulf %18, %20 : vector<32x32xf32>
    %c0_7 = arith.constant 0 : index
    %c0_8 = arith.constant 0 : index
    %22 = vector.load %arg3[%c0_7, %c0_8] : memref<1x32xf32, #tpu.memory_space<vmem>>, vector<1x32xf32>
    %23 = vector.broadcast %22 : vector<1x32xf32> to vector<32x32xf32>
    %24 = arith.addf %21, %23 : vector<32x32xf32>
    %c0_9 = arith.constant 0 : index
    %c0_10 = arith.constant 0 : index
    %25 = vector.load %arg4[%c0_9, %c0_10] : memref<32x32xf32, #tpu.memory_space<vmem>>, vector<32x32xf32>
    tpu.vector_store %arg4[%c0_9, %c0_10], %24 {strides = array<i32>} : memref<32x32xf32, #tpu.memory_space<vmem>>, vector<32x32xf32>,
    return
  }
  func.func @transform_0(%arg0: i32) -> (i32, i32) {
    %c0_i32 = arith.constant 0 : i32
    %c0_i32_0 = arith.constant 0 : i32
    return %arg0, %c0_i32 : i32, i32
  }
  func.func @transform_1(%arg0: i32) -> (i32, i32) {
    %c0_i32 = arith.constant 0 : i32
    %c0_i32_0 = arith.constant 0 : i32
    %c0_i32_1 = arith.constant 0 : i32
    return %c0_i32, %c0_i32_0 : i32, i32
  }
  func.func @transform_2(%arg0: i32) -> (i32, i32) {
    %c0_i32 = arith.constant 0 : i32
    %c0_i32_0 = arith.constant 0 : i32
    %c0_i32_1 = arith.constant 0 : i32
    return %c0_i32, %c0_i32_0 : i32, i32
  }
  func.func @transform_3(%arg0: i32) -> (i32, i32) {
    %c0_i32 = arith.constant 0 : i32
    %c0_i32_0 = arith.constant 0 : i32
    return %arg0, %c0_i32 : i32, i32
  }
}

module attributes {stable_mosaic.version = 11 : i64} {
  func.func @_block_tail_kernel(%arg0: i32, %arg1: memref<1x16x32xf32, #tpu.memory_space<vmem>>, %arg2: memref<1x16x32xf32, #tpu.memory_space<vmem>>, %arg3: memref<1x16x32xf32, #tpu.memory_space<vmem>>, %arg4: memref<32x32xf32, #tpu.memory_space<vmem>>, %arg5: memref<32x8xf32, #tpu.memory_space<vmem>>, %arg6: memref<1x8xf32, #tpu.memory_space<vmem>>, %arg7: memref<8x96xf32, #tpu.memory_space<vmem>>, %arg8: memref<1x96xf32, #tpu.memory_space<vmem>>, %arg9: memref<32x32xf32, #tpu.memory_space<vmem>>, %arg10: memref<1x32xf32, #tpu.memory_space<vmem>>, %arg11: memref<1x16x32xf32, #tpu.memory_space<vmem>>) attributes {dimension_semantics = [#tpu.dimension_semantics<parallel>], iteration_bounds = array<i64: 2>, scalar_prefetch = 0 : i64, scratch_operands = 0 : i64, tpu.core_type = #tpu.core_type<tc>, window_params = [{transform_indices = @transform_0, window_bounds = array<i64: 1, 16, 32>}, {transform_indices = @transform_1, window_bounds = array<i64: 1, 16, 32>}, {transform_indices = @transform_2, window_bounds = array<i64: 1, 16, 32>}, {pipeline_mode = #tpu.pipeline_mode<synchronous>, transform_indices = @transform_3, window_bounds = array<i64: 32, 32>}, {pipeline_mode = #tpu.pipeline_mode<synchronous>, transform_indices = @transform_4, window_bounds = array<i64: 32, 8>}, {pipeline_mode = #tpu.pipeline_mode<synchronous>, transform_indices = @transform_5, window_bounds = array<i64: 1, 8>}, {pipeline_mode = #tpu.pipeline_mode<synchronous>, transform_indices = @transform_6, window_bounds = array<i64: 8, 96>}, {pipeline_mode = #tpu.pipeline_mode<synchronous>, transform_indices = @transform_7, window_bounds = array<i64: 1, 96>}, {pipeline_mode = #tpu.pipeline_mode<synchronous>, transform_indices = @transform_8, window_bounds = array<i64: 32, 32>}, {pipeline_mode = #tpu.pipeline_mode<synchronous>, transform_indices = @transform_9, window_bounds = array<i64: 1, 32>}, {transform_indices = @transform_10, window_bounds = array<i64: 1, 16, 32>}]} {
    %c0 = arith.constant 0 : index
    %c0_0 = arith.constant 0 : index
    %c0_1 = arith.constant 0 : index
    %0 = vector.load %arg1[%c0, %c0_0, %c0_1] : memref<1x16x32xf32, #tpu.memory_space<vmem>>, vector<1x16x32xf32>
    %1 = vector.shape_cast %0 : vector<1x16x32xf32> to vector<16x32xf32>
    %c0_2 = arith.constant 0 : index
    %c0_3 = arith.constant 0 : index
    %c0_4 = arith.constant 0 : index
    %2 = vector.load %arg2[%c0_2, %c0_3, %c0_4] : memref<1x16x32xf32, #tpu.memory_space<vmem>>, vector<1x16x32xf32>
    %3 = vector.shape_cast %2 : vector<1x16x32xf32> to vector<16x32xf32>
    %c0_5 = arith.constant 0 : index
    %c0_6 = arith.constant 0 : index
    %c0_7 = arith.constant 0 : index
    %4 = vector.load %arg3[%c0_5, %c0_6, %c0_7] : memref<1x16x32xf32, #tpu.memory_space<vmem>>, vector<1x16x32xf32>
    %5 = vector.shape_cast %4 : vector<1x16x32xf32> to vector<16x32xf32>
    %c0_8 = arith.constant 0 : index
    %c0_9 = arith.constant 0 : index
    %6 = vector.load %arg4[%c0_8, %c0_9] : memref<32x32xf32, #tpu.memory_space<vmem>>, vector<32x32xf32>
    %cst = arith.constant dense<0.000000e+00> : vector<16x32xf32>
    %7 = tpu.matmul %1, %6, %cst {dimension_numbers = #tpu.dot_dimension_numbers<[1], [0], [0], [1], [0, 0, 1, 1], [], []>} : vector<16x32xf32>, vector<32x32xf32>, vector<16x32xf32> -> vector<16x32xf32>
    %8 = arith.addf %3, %5 : vector<16x32xf32>
    %9 = arith.addf %8, %7 : vector<16x32xf32>
    %cst_10 = arith.constant dense<0.000000e+00> : vector<32xf32>
    %10 = vector.multi_reduction <add>, %9, %cst_10 [0] : vector<16x32xf32> to vector<32xf32>
    %11 = vector.shape_cast %10 : vector<32xf32> to vector<1x32xf32>
    %cst_11 = arith.constant 1.600000e+01 : f32
    %12 = vector.broadcast %cst_11 : f32 to vector<1x32xf32>
    %13 = arith.divf %11, %12 : vector<1x32xf32>
    %c0_12 = arith.constant 0 : index
    %c0_13 = arith.constant 0 : index
    %14 = vector.load %arg5[%c0_12, %c0_13] : memref<32x8xf32, #tpu.memory_space<vmem>>, vector<32x8xf32>
    %cst_14 = arith.constant dense<0.000000e+00> : vector<1x8xf32>
    %15 = tpu.matmul %13, %14, %cst_14 {dimension_numbers = #tpu.dot_dimension_numbers<[1], [0], [0], [1], [0, 0, 1, 1], [], []>} : vector<1x32xf32>, vector<32x8xf32>, vector<1x8xf32> -> vector<1x8xf32>
    %c0_15 = arith.constant 0 : index
    %c0_16 = arith.constant 0 : index
    %16 = vector.load %arg6[%c0_15, %c0_16] : memref<1x8xf32, #tpu.memory_space<vmem>>, vector<1x8xf32>
    %17 = arith.addf %15, %16 : vector<1x8xf32>
    %18 = arith.mulf %17, %17 : vector<1x8xf32>
    %19 = arith.mulf %17, %18 : vector<1x8xf32>
    %cst_17 = arith.constant 4.471500e-02 : f32
    %20 = vector.broadcast %cst_17 : f32 to vector<1x8xf32>
    %21 = arith.mulf %20, %19 : vector<1x8xf32>
    %22 = arith.addf %17, %21 : vector<1x8xf32>
    %cst_18 = arith.constant 0.797884583 : f32
    %23 = vector.broadcast %cst_18 : f32 to vector<1x8xf32>
    %24 = arith.mulf %23, %22 : vector<1x8xf32>
    %25 = math.tanh %24 : vector<1x8xf32>
    %cst_19 = arith.constant 1.000000e+00 : f32
    %26 = vector.broadcast %cst_19 : f32 to vector<1x8xf32>
    %27 = arith.addf %26, %25 : vector<1x8xf32>
    %cst_20 = arith.constant 5.000000e-01 : f32
    %28 = vector.broadcast %cst_20 : f32 to vector<1x8xf32>
    %29 = arith.mulf %28, %27 : vector<1x8xf32>
    %30 = arith.mulf %17, %29 : vector<1x8xf32>
    %c0_21 = arith.constant 0 : index
    %c0_22 = arith.constant 0 : index
    %31 = vector.load %arg7[%c0_21, %c0_22] : memref<8x96xf32, #tpu.memory_space<vmem>>, vector<8x96xf32>
    %cst_23 = arith.constant dense<0.000000e+00> : vector<1x96xf32>
    %32 = tpu.matmul %30, %31, %cst_23 {dimension_numbers = #tpu.dot_dimension_numbers<[1], [0], [0], [1], [0, 0, 1, 1], [], []>} : vector<1x8xf32>, vector<8x96xf32>, vector<1x96xf32> -> vector<1x96xf32>
    %c0_24 = arith.constant 0 : index
    %c0_25 = arith.constant 0 : index
    %33 = vector.load %arg8[%c0_24, %c0_25] : memref<1x96xf32, #tpu.memory_space<vmem>>, vector<1x96xf32>
    %34 = arith.addf %32, %33 : vector<1x96xf32>
    %35 = vector.extract_strided_slice %34 {offsets = [0, 0], sizes = [1, 32], strides = [1, 1]} : vector<1x96xf32> to vector<1x32xf32>
    %36 = vector.extract_strided_slice %34 {offsets = [0, 32], sizes = [1, 32], strides = [1, 1]} : vector<1x96xf32> to vector<1x32xf32>
    %37 = vector.extract_strided_slice %34 {offsets = [0, 64], sizes = [1, 32], strides = [1, 1]} : vector<1x96xf32> to vector<1x32xf32>
    %38 = arith.maximumf %35, %36 : vector<1x32xf32>
    %39 = arith.maximumf %38, %37 : vector<1x32xf32>
    %40 = arith.subf %35, %39 : vector<1x32xf32>
    %41 = math.exp %40 : vector<1x32xf32>
    %42 = arith.subf %36, %39 : vector<1x32xf32>
    %43 = math.exp %42 : vector<1x32xf32>
    %44 = arith.subf %37, %39 : vector<1x32xf32>
    %45 = math.exp %44 : vector<1x32xf32>
    %46 = arith.addf %41, %43 : vector<1x32xf32>
    %47 = arith.addf %46, %45 : vector<1x32xf32>
    %48 = tpu.reciprocal %47 {approx = true} : vector<1x32xf32> -> vector<1x32xf32>
    %49 = arith.mulf %41, %48 : vector<1x32xf32>
    %50 = vector.broadcast %49 : vector<1x32xf32> to vector<16x32xf32>
    %51 = arith.mulf %3, %50 : vector<16x32xf32>
    %52 = arith.mulf %43, %48 : vector<1x32xf32>
    %53 = vector.broadcast %52 : vector<1x32xf32> to vector<16x32xf32>
    %54 = arith.mulf %5, %53 : vector<16x32xf32>
    %55 = arith.addf %51, %54 : vector<16x32xf32>
    %56 = arith.mulf %45, %48 : vector<1x32xf32>
    %57 = vector.broadcast %56 : vector<1x32xf32> to vector<16x32xf32>
    %58 = arith.mulf %7, %57 : vector<16x32xf32>
    %59 = arith.addf %55, %58 : vector<16x32xf32>
    %c0_26 = arith.constant 0 : index
    %c0_27 = arith.constant 0 : index
    %60 = vector.load %arg9[%c0_26, %c0_27] : memref<32x32xf32, #tpu.memory_space<vmem>>, vector<32x32xf32>
    %cst_28 = arith.constant dense<0.000000e+00> : vector<16x32xf32>
    %61 = tpu.matmul %59, %60, %cst_28 {dimension_numbers = #tpu.dot_dimension_numbers<[1], [0], [0], [1], [0, 0, 1, 1], [], []>} : vector<16x32xf32>, vector<32x32xf32>, vector<16x32xf32> -> vector<16x32xf32>
    %c0_29 = arith.constant 0 : index
    %c0_30 = arith.constant 0 : index
    %62 = vector.load %arg10[%c0_29, %c0_30] : memref<1x32xf32, #tpu.memory_space<vmem>>, vector<1x32xf32>
    %63 = vector.broadcast %62 : vector<1x32xf32> to vector<16x32xf32>
    %64 = arith.addf %61, %63 : vector<16x32xf32>
    %c0_31 = arith.constant 0 : index
    %c0_32 = arith.constant 0 : index
    %c0_33 = arith.constant 0 : index
    %65 = vector.load %arg11[%c0_31, %c0_32, %c0_33] : memref<1x16x32xf32, #tpu.memory_space<vmem>>, vector<1x16x32xf32>
    %66 = vector.shape_cast %65 : vector<1x16x32xf32> to vector<16x32xf32>
    %67 = vector.shape_cast %64 : vector<16x32xf32> to vector<1x16x32xf32>
    tpu.vector_store %arg11[%c0_31, %c0_32, %c0_33], %67 {strides = array<i32>} : memref<1x16x32xf32, #tpu.memory_space<vmem>>, vector<1x16x32xf32>,
    return
  }
  func.func @transform_0(%arg0: i32) -> (i32, i32, i32) {
    %c0_i32 = arith.constant 0 : i32
    %c0_i32_0 = arith.constant 0 : i32
    %c0_i32_1 = arith.constant 0 : i32
    return %arg0, %c0_i32, %c0_i32_0 : i32, i32, i32
  }
  func.func @transform_1(%arg0: i32) -> (i32, i32, i32) {
    %c0_i32 = arith.constant 0 : i32
    %c0_i32_0 = arith.constant 0 : i32
    %c0_i32_1 = arith.constant 0 : i32
    return %arg0, %c0_i32, %c0_i32_0 : i32, i32, i32
  }
  func.func @transform_2(%arg0: i32) -> (i32, i32, i32) {
    %c0_i32 = arith.constant 0 : i32
    %c0_i32_0 = arith.constant 0 : i32
    %c0_i32_1 = arith.constant 0 : i32
    return %arg0, %c0_i32, %c0_i32_0 : i32, i32, i32
  }
  func.func @transform_3(%arg0: i32) -> (i32, i32) {
    %c0_i32 = arith.constant 0 : i32
    %c0_i32_0 = arith.constant 0 : i32
    %c0_i32_1 = arith.constant 0 : i32
    return %c0_i32, %c0_i32_0 : i32, i32
  }
  func.func @transform_4(%arg0: i32) -> (i32, i32) {
    %c0_i32 = arith.constant 0 : i32
    %c0_i32_0 = arith.constant 0 : i32
    %c0_i32_1 = arith.constant 0 : i32
    return %c0_i32, %c0_i32_0 : i32, i32
  }
  func.func @transform_5(%arg0: i32) -> (i32, i32) {
    %c0_i32 = arith.constant 0 : i32
    %c0_i32_0 = arith.constant 0 : i32
    %c0_i32_1 = arith.constant 0 : i32
    return %c0_i32, %c0_i32_0 : i32, i32
  }
  func.func @transform_6(%arg0: i32) -> (i32, i32) {
    %c0_i32 = arith.constant 0 : i32
    %c0_i32_0 = arith.constant 0 : i32
    %c0_i32_1 = arith.constant 0 : i32
    return %c0_i32, %c0_i32_0 : i32, i32
  }
  func.func @transform_7(%arg0: i32) -> (i32, i32) {
    %c0_i32 = arith.constant 0 : i32
    %c0_i32_0 = arith.constant 0 : i32
    %c0_i32_1 = arith.constant 0 : i32
    return %c0_i32, %c0_i32_0 : i32, i32
  }
  func.func @transform_8(%arg0: i32) -> (i32, i32) {
    %c0_i32 = arith.constant 0 : i32
    %c0_i32_0 = arith.constant 0 : i32
    %c0_i32_1 = arith.constant 0 : i32
    return %c0_i32, %c0_i32_0 : i32, i32
  }
  func.func @transform_9(%arg0: i32) -> (i32, i32) {
    %c0_i32 = arith.constant 0 : i32
    %c0_i32_0 = arith.constant 0 : i32
    %c0_i32_1 = arith.constant 0 : i32
    return %c0_i32, %c0_i32_0 : i32, i32
  }
  func.func @transform_10(%arg0: i32) -> (i32, i32, i32) {
    %c0_i32 = arith.constant 0 : i32
    %c0_i32_0 = arith.constant 0 : i32
    %c0_i32_1 = arith.constant 0 : i32
    return %arg0, %c0_i32, %c0_i32_0 : i32, i32, i32
  }
}

module attributes {stable_mosaic.version = 11 : i64} {
  func.func @_dyna_op_kernel(%arg0: i32, %arg1: memref<4x4x32xf32, #tpu.memory_space<vmem>>, %arg2: memref<16x32xf32, #tpu.memory_space<vmem>>, %arg3: memref<1x16xf32, #tpu.memory_space<vmem>>, %arg4: memref<2x16x4xf32, #tpu.memory_space<vmem>>, %arg5: memref<16x1xf32, #tpu.memory_space<vmem>>, %arg6: memref<8x32xf32, #tpu.memory_space<vmem>>, %arg7: memref<32x32xf32, #tpu.memory_space<vmem>>, %arg8: memref<1x32xf32, #tpu.memory_space<vmem>>, %arg9: memref<4x4x32xf32, #tpu.memory_space<vmem>>) attributes {dimension_semantics = [#tpu.dimension_semantics<parallel>], iteration_bounds = array<i64: 2>, scalar_prefetch = 0 : i64, scratch_operands = 0 : i64, tpu.core_type = #tpu.core_type<tc>, window_params = [{transform_indices = @transform_0, window_bounds = array<i64: 4, 4, 32>}, {pipeline_mode = #tpu.pipeline_mode<synchronous>, transform_indices = @transform_1, window_bounds = array<i64: 16, 32>}, {pipeline_mode = #tpu.pipeline_mode<synchronous>, transform_indices = @transform_2, window_bounds = array<i64: 1, 16>}, {pipeline_mode = #tpu.pipeline_mode<synchronous>, transform_indices = @transform_3, window_bounds = array<i64: 2, 16, 4>}, {pipeline_mode = #tpu.pipeline_mode<synchronous>, transform_indices = @transform_4, window_bounds = array<i64: 16, 1>}, {pipeline_mode = #tpu.pipeline_mode<synchronous>, transform_indices = @transform_5, window_bounds = array<i64: 8, 32>}, {pipeline_mode = #tpu.pipeline_mode<synchronous>, transform_indices = @transform_6, window_bounds = array<i64: 32, 32>}, {pipeline_mode = #tpu.pipeline_mode<synchronous>, transform_indices = @transform_7, window_bounds = array<i64: 1, 32>}, {transform_indices = @transform_8, window_bounds = array<i64: 4, 4, 32>}]} {
    %c0 = arith.constant 0 : index
    %c0_0 = arith.constant 0 : index
    %c0_1 = arith.constant 0 : index
    %0 = vector.load %arg1[%c0, %c0_0, %c0_1] : memref<4x4x32xf32, #tpu.memory_space<vmem>>, vector<4x4x32xf32>
    %c0_2 = arith.constant 0 : index
    %c0_3 = arith.constant 0 : index
    %1 = vector.load %arg2[%c0_2, %c0_3] : memref<16x32xf32, #tpu.memory_space<vmem>>, vector<16x32xf32>
    %2 = vector.shape_cast %1 : vector<16x32xf32> to vector<1x16x32xf32>
    %3 = vector.broadcast %2 : vector<1x16x32xf32> to vector<4x16x32xf32>
    "tpu.trace_start"() <{level = 10 : i32, message = "glc,gkc->glk"}> : () -> ()
    %cst = arith.constant dense<0.000000e+00> : vector<4x4x16xf32>
    %4 = tpu.matmul %0, %3, %cst {dimension_numbers = #tpu.dot_dimension_numbers<[2], [2], [1], [1], [0, 0, 0, 1, 1, 1], [0], [0]>} : vector<4x4x32xf32>, vector<4x16x32xf32>, vector<4x4x16xf32> -> vector<4x4x16xf32>
    "tpu.trace_stop"() : () -> ()
    %c0_4 = arith.constant 0 : index
    %c0_5 = arith.constant 0 : index
    %5 = vector.load %arg3[%c0_4, %c0_5] : memref<1x16xf32, #tpu.memory_space<vmem>>, vector<1x16xf32>
    %6 = vector.shape_cast %5 : vector<1x16xf32> to vector<1x1x16xf32>
    %7 = vector.broadcast %6 : vector<1x1x16xf32> to vector<4x4x16xf32>
    %8 = arith.addf %4, %7 : vector<4x4x16xf32>
    %cst_6 = arith.constant 0.000000e+00 : f32
    %9 = vector.broadcast %cst_6 : f32 to vector<4x16x8xf32>
    %c0_7 = arith.constant 0 : index
    %c0_8 = arith.constant 0 : index
    %c0_9 = arith.constant 0 : index
    %10 = vector.load %arg4[%c0_7, %c0_8, %c0_9] : memref<2x16x4xf32, #tpu.memory_space<vmem>>, vector<1x16x4xf32>
    %11 = vector.shape_cast %10 : vector<1x16x4xf32> to vector<16x4xf32>
    %12 = vector.shape_cast %11 : vector<16x4xf32> to vector<1x16x4xf32>
    %13 = vector.broadcast %12 : vector<1x16x4xf32> to vector<4x16x4xf32>
    %14 = vector.extract_strided_slice %8 {offsets = [0, 0, 0], sizes = [4, 4, 8], strides = [1, 1, 1]} : vector<4x4x16xf32> to vector<4x4x8xf32>
    "tpu.trace_start"() <{level = 10 : i32, message = "gml,glh->gmh"}> : () -> ()
    %cst_10 = arith.constant dense<0.000000e+00> : vector<4x16x8xf32>
    %15 = tpu.matmul %13, %14, %cst_10 {dimension_numbers = #tpu.dot_dimension_numbers<[2], [1], [1], [2], [0, 0, 0, 1, 1, 2], [0], [0]>} : vector<4x16x4xf32>, vector<4x4x8xf32>, vector<4x16x8xf32> -> vector<4x16x8xf32>
    "tpu.trace_stop"() : () -> ()
    %16 = arith.addf %9, %15 : vector<4x16x8xf32>
    %c1 = arith.constant 1 : index
    %c0_11 = arith.constant 0 : index
    %c0_12 = arith.constant 0 : index
    %17 = vector.load %arg4[%c1, %c0_11, %c0_12] : memref<2x16x4xf32, #tpu.memory_space<vmem>>, vector<1x16x4xf32>
    %18 = vector.shape_cast %17 : vector<1x16x4xf32> to vector<16x4xf32>
    %19 = vector.shape_cast %18 : vector<16x4xf32> to vector<1x16x4xf32>
    %20 = vector.broadcast %19 : vector<1x16x4xf32> to vector<4x16x4xf32>
    %21 = vector.extract_strided_slice %8 {offsets = [0, 0, 8], sizes = [4, 4, 8], strides = [1, 1, 1]} : vector<4x4x16xf32> to vector<4x4x8xf32>
    "tpu.trace_start"() <{level = 10 : i32, message = "gml,glh->gmh"}> : () -> ()
    %cst_13 = arith.constant dense<0.000000e+00> : vector<4x16x8xf32>
    %22 = tpu.matmul %20, %21, %cst_13 {dimension_numbers = #tpu.dot_dimension_numbers<[2], [1], [1], [2], [0, 0, 0, 1, 1, 2], [0], [0]>} : vector<4x16x4xf32>, vector<4x4x8xf32>, vector<4x16x8xf32> -> vector<4x16x8xf32>
    "tpu.trace_stop"() : () -> ()
    %23 = arith.addf %16, %22 : vector<4x16x8xf32>
    %c0_14 = arith.constant 0 : index
    %c0_15 = arith.constant 0 : index
    %24 = vector.load %arg5[%c0_14, %c0_15] : memref<16x1xf32, #tpu.memory_space<vmem>>, vector<16x1xf32>
    %25 = vector.shape_cast %24 : vector<16x1xf32> to vector<1x16x1xf32>
    %26 = vector.broadcast %25 : vector<1x16x1xf32> to vector<4x16x8xf32>
    %27 = arith.addf %23, %26 : vector<4x16x8xf32>
    %28 = vector.extract_strided_slice %27 {offsets = [0, 0, 0], sizes = [4, 4, 8], strides = [1, 1, 1]} : vector<4x16x8xf32> to vector<4x4x8xf32>
    %29 = vector.extract_strided_slice %27 {offsets = [0, 4, 0], sizes = [4, 4, 8], strides = [1, 1, 1]} : vector<4x16x8xf32> to vector<4x4x8xf32>
    %30 = arith.maximumf %28, %29 : vector<4x4x8xf32>
    %31 = vector.extract_strided_slice %27 {offsets = [0, 8, 0], sizes = [4, 4, 8], strides = [1, 1, 1]} : vector<4x16x8xf32> to vector<4x4x8xf32>
    %32 = arith.maximumf %30, %31 : vector<4x4x8xf32>
    %33 = vector.extract_strided_slice %27 {offsets = [0, 12, 0], sizes = [4, 4, 8], strides = [1, 1, 1]} : vector<4x16x8xf32> to vector<4x4x8xf32>
    %34 = arith.maximumf %32, %33 : vector<4x4x8xf32>
    %c0_16 = arith.constant 0 : index
    %c0_17 = arith.constant 0 : index
    %35 = vector.load %arg6[%c0_16, %c0_17] : memref<8x32xf32, #tpu.memory_space<vmem>>, vector<8x32xf32>
    %36 = vector.shape_cast %35 : vector<8x32xf32> to vector<1x8x32xf32>
    %37 = vector.broadcast %36 : vector<1x8x32xf32> to vector<4x8x32xf32>
    %cst_18 = arith.constant 0.000000e+00 : f32
    %38 = vector.broadcast %cst_18 : f32 to vector<4x4x32xf32>
    %cst_19 = arith.constant 0.000000e+00 : f32
    %39 = vector.broadcast %cst_19 : f32 to vector<4x4x32xf32>
    %40 = vector.extract_strided_slice %27 {offsets = [0, 0, 0], sizes = [4, 4, 8], strides = [1, 1, 1]} : vector<4x16x8xf32> to vector<4x4x8xf32>
    %41 = arith.subf %40, %34 : vector<4x4x8xf32>
    %42 = math.exp %41 : vector<4x4x8xf32>
    "tpu.trace_start"() <{level = 10 : i32, message = "gjh,ghc->gjc"}> : () -> ()
    %cst_20 = arith.constant dense<0.000000e+00> : vector<4x4x32xf32>
    %43 = tpu.matmul %42, %37, %cst_20 {dimension_numbers = #tpu.dot_dimension_numbers<[2], [1], [1], [2], [0, 0, 0, 1, 1, 2], [0], [0]>} : vector<4x4x8xf32>, vector<4x8x32xf32>, vector<4x4x32xf32> -> vector<4x4x32xf32>
    "tpu.trace_stop"() : () -> ()
    %44 = vector.extract_strided_slice %0 {offsets = [0, 0, 0], sizes = [4, 1, 32], strides = [1, 1, 1]} : vector<4x4x32xf32> to vector<4x1x32xf32>
    %45 = vector.broadcast %44 : vector<4x1x32xf32> to vector<4x4x32xf32>
    %46 = arith.mulf %43, %45 : vector<4x4x32xf32>
    %47 = arith.addf %38, %46 : vector<4x4x32xf32>
    %48 = arith.addf %39, %43 : vector<4x4x32xf32>
    %49 = vector.extract_strided_slice %27 {offsets = [0, 4, 0], sizes = [4, 4, 8], strides = [1, 1, 1]} : vector<4x16x8xf32> to vector<4x4x8xf32>
    %50 = arith.subf %49, %34 : vector<4x4x8xf32>
    %51 = math.exp %50 : vector<4x4x8xf32>
    "tpu.trace_start"() <{level = 10 : i32, message = "gjh,ghc->gjc"}> : () -> ()
    %cst_21 = arith.constant dense<0.000000e+00> : vector<4x4x32xf32>
    %52 = tpu.matmul %51, %37, %cst_21 {dimension_numbers = #tpu.dot_dimension_numbers<[2], [1], [1], [2], [0, 0, 0, 1, 1, 2], [0], [0]>} : vector<4x4x8xf32>, vector<4x8x32xf32>, vector<4x4x32xf32> -> vector<4x4x32xf32>
    "tpu.trace_stop"() : () -> ()
    %53 = vector.extract_strided_slice %0 {offsets = [0, 1, 0], sizes = [4, 1, 32], strides = [1, 1, 1]} : vector<4x4x32xf32> to vector<4x1x32xf32>
    %54 = vector.broadcast %53 : vector<4x1x32xf32> to vector<4x4x32xf32>
    %55 = arith.mulf %52, %54 : vector<4x4x32xf32>
    %56 = arith.addf %47, %55 : vector<4x4x32xf32>
    %57 = arith.addf %48, %52 : vector<4x4x32xf32>
    %58 = vector.extract_strided_slice %27 {offsets = [0, 8, 0], sizes = [4, 4, 8], strides = [1, 1, 1]} : vector<4x16x8xf32> to vector<4x4x8xf32>
    %59 = arith.subf %58, %34 : vector<4x4x8xf32>
    %60 = math.exp %59 : vector<4x4x8xf32>
    "tpu.trace_start"() <{level = 10 : i32, message = "gjh,ghc->gjc"}> : () -> ()
    %cst_22 = arith.constant dense<0.000000e+00> : vector<4x4x32xf32>
    %61 = tpu.matmul %60, %37, %cst_22 {dimension_numbers = #tpu.dot_dimension_numbers<[2], [1], [1], [2], [0, 0, 0, 1, 1, 2], [0], [0]>} : vector<4x4x8xf32>, vector<4x8x32xf32>, vector<4x4x32xf32> -> vector<4x4x32xf32>
    "tpu.trace_stop"() : () -> ()
    %62 = vector.extract_strided_slice %0 {offsets = [0, 2, 0], sizes = [4, 1, 32], strides = [1, 1, 1]} : vector<4x4x32xf32> to vector<4x1x32xf32>
    %63 = vector.broadcast %62 : vector<4x1x32xf32> to vector<4x4x32xf32>
    %64 = arith.mulf %61, %63 : vector<4x4x32xf32>
    %65 = arith.addf %56, %64 : vector<4x4x32xf32>
    %66 = arith.addf %57, %61 : vector<4x4x32xf32>
    %67 = vector.extract_strided_slice %27 {offsets = [0, 12, 0], sizes = [4, 4, 8], strides = [1, 1, 1]} : vector<4x16x8xf32> to vector<4x4x8xf32>
    %68 = arith.subf %67, %34 : vector<4x4x8xf32>
    %69 = math.exp %68 : vector<4x4x8xf32>
    "tpu.trace_start"() <{level = 10 : i32, message = "gjh,ghc->gjc"}> : () -> ()
    %cst_23 = arith.constant dense<0.000000e+00> : vector<4x4x32xf32>
    %70 = tpu.matmul %69, %37, %cst_23 {dimension_numbers = #tpu.dot_dimension_numbers<[2], [1], [1], [2], [0, 0, 0, 1, 1, 2], [0], [0]>} : vector<4x4x8xf32>, vector<4x8x32xf32>, vector<4x4x32xf32> -> vector<4x4x32xf32>
    "tpu.trace_stop"() : () -> ()
    %71 = vector.extract_strided_slice %0 {offsets = [0, 3, 0], sizes = [4, 1, 32], strides = [1, 1, 1]} : vector<4x4x32xf32> to vector<4x1x32xf32>
    %72 = vector.broadcast %71 : vector<4x1x32xf32> to vector<4x4x32xf32>
    %73 = arith.mulf %70, %72 : vector<4x4x32xf32>
    %74 = arith.addf %65, %73 : vector<4x4x32xf32>
    %75 = arith.addf %66, %70 : vector<4x4x32xf32>
    %76 = tpu.reciprocal %75 {approx = true} : vector<4x4x32xf32> -> vector<4x4x32xf32>
    %77 = arith.mulf %74, %76 : vector<4x4x32xf32>
    %c0_24 = arith.constant 0 : index
    %c0_25 = arith.constant 0 : index
    %78 = vector.load %arg7[%c0_24, %c0_25] : memref<32x32xf32, #tpu.memory_space<vmem>>, vector<32x32xf32>
    %79 = vector.shape_cast %78 : vector<32x32xf32> to vector<1x32x32xf32>
    %80 = vector.broadcast %79 : vector<1x32x32xf32> to vector<4x32x32xf32>
    "tpu.trace_start"() <{level = 10 : i32, message = "gjc,gcd->gjd"}> : () -> ()
    %cst_26 = arith.constant dense<0.000000e+00> : vector<4x4x32xf32>
    %81 = tpu.matmul %77, %80, %cst_26 {dimension_numbers = #tpu.dot_dimension_numbers<[2], [1], [1], [2], [0, 0, 0, 1, 1, 2], [0], [0]>} : vector<4x4x32xf32>, vector<4x32x32xf32>, vector<4x4x32xf32> -> vector<4x4x32xf32>
    "tpu.trace_stop"() : () -> ()
    %c0_27 = arith.constant 0 : index
    %c0_28 = arith.constant 0 : index
    %82 = vector.load %arg8[%c0_27, %c0_28] : memref<1x32xf32, #tpu.memory_space<vmem>>, vector<1x32xf32>
    %83 = vector.shape_cast %82 : vector<1x32xf32> to vector<1x1x32xf32>
    %84 = vector.broadcast %83 : vector<1x1x32xf32> to vector<4x4x32xf32>
    %85 = arith.addf %81, %84 : vector<4x4x32xf32>
    %c0_29 = arith.constant 0 : index
    %c0_30 = arith.constant 0 : index
    %c0_31 = arith.constant 0 : index
    %86 = vector.load %arg9[%c0_29, %c0_30, %c0_31] : memref<4x4x32xf32, #tpu.memory_space<vmem>>, vector<4x4x32xf32>
    tpu.vector_store %arg9[%c0_29, %c0_30, %c0_31], %85 {strides = array<i32>} : memref<4x4x32xf32, #tpu.memory_space<vmem>>, vector<4x4x32xf32>,
    return
  }
  func.func @transform_0(%arg0: i32) -> (i32, i32, i32) {
    %c0_i32 = arith.constant 0 : i32
    %c0_i32_0 = arith.constant 0 : i32
    %c0_i32_1 = arith.constant 0 : i32
    return %arg0, %c0_i32, %c0_i32_0 : i32, i32, i32
  }
  func.func @transform_1(%arg0: i32) -> (i32, i32) {
    %c0_i32 = arith.constant 0 : i32
    %c0_i32_0 = arith.constant 0 : i32
    %c0_i32_1 = arith.constant 0 : i32
    return %c0_i32, %c0_i32_0 : i32, i32
  }
  func.func @transform_2(%arg0: i32) -> (i32, i32) {
    %c0_i32 = arith.constant 0 : i32
    %c0_i32_0 = arith.constant 0 : i32
    %c0_i32_1 = arith.constant 0 : i32
    return %c0_i32, %c0_i32_0 : i32, i32
  }
  func.func @transform_3(%arg0: i32) -> (i32, i32, i32) {
    %c0_i32 = arith.constant 0 : i32
    %c0_i32_0 = arith.constant 0 : i32
    %c0_i32_1 = arith.constant 0 : i32
    %c0_i32_2 = arith.constant 0 : i32
    return %c0_i32, %c0_i32_0, %c0_i32_1 : i32, i32, i32
  }
  func.func @transform_4(%arg0: i32) -> (i32, i32) {
    %c0_i32 = arith.constant 0 : i32
    %c0_i32_0 = arith.constant 0 : i32
    %c0_i32_1 = arith.constant 0 : i32
    return %c0_i32, %c0_i32_0 : i32, i32
  }
  func.func @transform_5(%arg0: i32) -> (i32, i32) {
    %c0_i32 = arith.constant 0 : i32
    %c0_i32_0 = arith.constant 0 : i32
    %c0_i32_1 = arith.constant 0 : i32
    return %c0_i32, %c0_i32_0 : i32, i32
  }
  func.func @transform_6(%arg0: i32) -> (i32, i32) {
    %c0_i32 = arith.constant 0 : i32
    %c0_i32_0 = arith.constant 0 : i32
    %c0_i32_1 = arith.constant 0 : i32
    return %c0_i32, %c0_i32_0 : i32, i32
  }
  func.func @transform_7(%arg0: i32) -> (i32, i32) {
    %c0_i32 = arith.constant 0 : i32
    %c0_i32_0 = arith.constant 0 : i32
    %c0_i32_1 = arith.constant 0 : i32
    return %c0_i32, %c0_i32_0 : i32, i32
  }
  func.func @transform_8(%arg0: i32) -> (i32, i32, i32) {
    %c0_i32 = arith.constant 0 : i32
    %c0_i32_0 = arith.constant 0 : i32
    %c0_i32_1 = arith.constant 0 : i32
    return %arg0, %c0_i32, %c0_i32_0 : i32, i32, i32
  }
}

</mosaic_0001>

<llo_original>
// kernel: dynamixer_forward.15
$region0: #{dynamixer_forward.15}
  #allocation0 [shape = 'u32[]', space=smem, size = 0x4, offset = 0x4, fixed_abs, tag = 'smem constant byte address 0x4 - core index']
  #allocation1 [shape = 'u32[144,128]{1,0:T(1,128)}', space=vmem, size = 0x12000, scoped, tag = 'internal scratch']
  %s0 = inlined_call_operand.hbm [shape: f32[32,32], index: 0, kind: input, shape index: {}]
  %s1 = inlined_call_operand.hbm [shape: f32[1,32], index: 1, kind: input, shape index: {}]
  %s2 = inlined_call_operand.hbm [shape: f32[1,32], index: 2, kind: input, shape index: {}]
  %s3 = inlined_call_operand.hbm [shape: f32[32,32], index: 3, kind: output, shape index: {}]
  %s4 = sld [smem:[#allocation0]]
  $region34: #{dynamixer_forward.15} parent=0
    _
  %s6 = ssub.s32 1, %s4
  %s7 = scalar_select 0, %s6, %s4
  $region1: #{dynamixer_forward.15} parent=0
    #allocation2 [shape = 'u8[16384]{0}', space=vmem, size = 0x4000, scoped, tag = 'input window, operand 0, single buffered']
    #allocation3 [shape = 's32[1]{0}', space=sflag, size = 0x4, scoped, tag = 'scoped memory for dynamixer_forward.15']
    #allocation4 [shape = 's32[1]{0}', space=sflag, size = 0x4, scoped, tag = 'scoped memory for dynamixer_forward.15']
    #allocation5 [shape = 'u8[512]{0}', space=vmem, size = 0x400, scoped, tag = 'input window, operand 1, single buffered']
    #allocation6 [shape = 's32[1]{0}', space=sflag, size = 0x4, scoped, tag = 'scoped memory for dynamixer_forward.15']
    #allocation7 [shape = 'u8[512]{0}', space=vmem, size = 0x400, scoped, tag = 'input window, operand 2, single buffered']
    #allocation8 [shape = 'u8[16384]{0}', space=vmem, size = 0x4000, scoped, tag = 'output window, operand 0, single buffered']
    %8 = vsyncpa [#allocation3], 0
    %9 = vsyncpa [#allocation6], 0
    %10 = vsyncpa [#allocation4], 0
    // Predicated region
    $region2: #{dynamixer_forward.15} parent=1 // pred_check
      _
    $region3: #{dynamixer_forward.15} parent=1 // pred_check_branch
      %12 = sbr.rel (0) target = $region5
    $region4: #{dynamixer_forward.15} parent=1 // pred_region
      %s14 = ssub.s32 512, 512
      %15 = vsyncadd [#allocation3], %s14
      %s16 = sshll.u32 [#allocation2], 4
      %s17 = int_to_ptr.vmem [resolvable:$true] %s16
      %22 = dma.hbm_to_vmem [thread:$0]  %s0, 512, %s17, [#allocation3], 128, 128, 8
    $region5: #{dynamixer_forward.15} parent=1 // pred_fallthru
      _
    // Predicated region
    $region6: #{dynamixer_forward.15} parent=1 // pred_check
      _
    $region7: #{dynamixer_forward.15} parent=1 // pred_check_branch
      %24 = sbr.rel (0) target = $region9
    $region8: #{dynamixer_forward.15} parent=1 // pred_region
      %s26 = ssub.s32 16, 16
      %27 = vsyncadd [#allocation6], %s26
      %s29 = sshll.u32 [#allocation5], 4
      %s30 = int_to_ptr.vmem [resolvable:$true] %s29
      %32 = dma.hbm_to_vmem [thread:$0]  %s1, 16, %s30, [#allocation6]
    $region9: #{dynamixer_forward.15} parent=1 // pred_fallthru
      _
    // Predicated region
    $region10: #{dynamixer_forward.15} parent=1 // pred_check
      _
    $region11: #{dynamixer_forward.15} parent=1 // pred_check_branch
      %34 = sbr.rel (0) target = $region13
    $region12: #{dynamixer_forward.15} parent=1 // pred_region
      %s36 = ssub.s32 16, 16
      %37 = vsyncadd [#allocation6], %s36
      %s39 = sshll.u32 [#allocation7], 4
      %s40 = int_to_ptr.vmem [resolvable:$true] %s39
      %42 = dma.hbm_to_vmem [thread:$0]  %s2, 16, %s40, [#allocation6]
    $region13: #{dynamixer_forward.15} parent=1 // pred_fallthru
      _
    // Predicated region
    $region14: #{dynamixer_forward.15} parent=1 // pred_check
      _
    $region15: #{dynamixer_forward.15} parent=1 // pred_check_branch
      %44 = sbr.rel (0) target = $region17
    $region16: #{dynamixer_forward.15} parent=1 // pred_region
      %45 = dma.done [#allocation3], 512
    $region17: #{dynamixer_forward.15} parent=1 // pred_fallthru
      _
    // Predicated region
    $region18: #{dynamixer_forward.15} parent=1 // pred_check
      _
    $region19: #{dynamixer_forward.15} parent=1 // pred_check_branch
      %47 = sbr.rel (0) target = $region21
    $region20: #{dynamixer_forward.15} parent=1 // pred_region
      %48 = dma.done [#allocation6], 16
    $region21: #{dynamixer_forward.15} parent=1 // pred_fallthru
      _
    // Predicated region
    $region22: #{dynamixer_forward.15} parent=1 // pred_check
      _
    $region23: #{dynamixer_forward.15} parent=1 // pred_check_branch
      %50 = sbr.rel (0) target = $region25
    $region24: #{dynamixer_forward.15} parent=1 // pred_region
      %51 = dma.done [#allocation6], 16
    $region25: #{dynamixer_forward.15} parent=1 // pred_fallthru
      _
    %v52 = vld [vmem:[#allocation2] sm:$0xff]
    %v53 = vld [vmem:[#allocation2 + $0x8] sm:$0xff]
    %v54 = vld [vmem:[#allocation2 + $0x10] sm:$0xff]
    %v55 = vld [vmem:[#allocation2 + $0x18] sm:$0xff]
    %vm56 = vcmask 261120
    %v57 = vsel %vm56, %v52, 0.0
    %58 = vadd.xlane.f32.xlu0 %v57
    %v59 = vpop.xlane.xlu0 %58
    %v60 = vsel %vm56, %v53, 0.0
    %61 = vadd.xlane.f32.xlu0 %v60
    %v62 = vpop.xlane.xlu0 %61
    %v63 = vsel %vm56, %v54, 0.0
    %64 = vadd.xlane.f32.xlu0 %v63
    %v65 = vpop.xlane.xlu0 %64
    %v66 = vsel %vm56, %v55, 0.0
    %67 = vadd.xlane.f32.xlu0 %v66
    %v68 = vpop.xlane.xlu0 %67
    %v69 = vrcp.pop 32.0
    %v70 = vmul.f32 %v59, %v69
    %v71 = vmul.f32 %v62, %v69
    %v72 = vmul.f32 %v65, %v69
    %v73 = vmul.f32 %v68, %v69
    %v74 = vsub.f32 %v52, %v70
    %v75 = vsub.f32 %v53, %v71
    %v76 = vsub.f32 %v54, %v72
    %v77 = vsub.f32 %v55, %v73
    %v78 = vmul.f32 %v74, %v74
    %v79 = vmul.f32 %v75, %v75
    %v80 = vmul.f32 %v76, %v76
    %v81 = vmul.f32 %v77, %v77
    %v82 = vsel %vm56, %v78, 0.0
    %83 = vadd.xlane.f32.xlu0 %v82
    %v84 = vpop.xlane.xlu0 %83
    %v85 = vsel %vm56, %v79, 0.0
    %86 = vadd.xlane.f32.xlu0 %v85
    %v87 = vpop.xlane.xlu0 %86
    %v88 = vsel %vm56, %v80, 0.0
    %89 = vadd.xlane.f32.xlu0 %v88
    %v90 = vpop.xlane.xlu0 %89
    %v91 = vsel %vm56, %v81, 0.0
    %92 = vadd.xlane.f32.xlu0 %v91
    %v93 = vpop.xlane.xlu0 %92
    %v94 = vmul.f32 %v84, %v69
    %v95 = vmul.f32 %v87, %v69
    %v96 = vmul.f32 %v90, %v69
    %v97 = vmul.f32 %v93, %v69
    %v98 = vadd.f32 %v94, 1e-05
    %v99 = vadd.f32 %v95, 1e-05
    %v100 = vadd.f32 %v96, 1e-05
    %v101 = vadd.f32 %v97, 1e-05
    %v102 = vrsqrt.pop %v98
    %v103 = vrsqrt.pop %v99
    %v104 = vrsqrt.pop %v100
    %v105 = vrsqrt.pop %v101
    %v106 = vmul.f32 %v74, %v102
    %v107 = vmul.f32 %v75, %v103
    %v108 = vmul.f32 %v76, %v104
    %v109 = vmul.f32 %v77, %v105
    %v110 = vld [vmem:[#allocation5] sm:$0x1]
    %v112 = vlaneseq
    %v113 = vshrl.u32 %v112, 7
    %v114 = vsub.s32 0, %v113
    %v115 = vrot.slane %v110, %v114
    %v117 = vmul.f32 %v106, %v115
    %v118 = vmul.f32 %v107, %v115
    %v119 = vmul.f32 %v108, %v115
    %v120 = vmul.f32 %v109, %v115
    %v121 = vld [vmem:[#allocation7] sm:$0x1]
    %v123 = vlaneseq
    %v124 = vshrl.u32 %v123, 7
    %v125 = vsub.s32 0, %v124
    %v126 = vrot.slane %v121, %v125
    %v128 = vadd.f32 %v117, %v126
    %v129 = vadd.f32 %v118, %v126
    %v130 = vadd.f32 %v119, %v126
    %v131 = vadd.f32 %v120, %v126
    %132 = vst.msk [vmem:[#allocation8] sm:$0xff] %vm56, %v128
    %133 = vst.msk [vmem:[#allocation8 + $0x8] sm:$0xff] %vm56, %v129
    %134 = vst.msk [vmem:[#allocation8 + $0x10] sm:$0xff] %vm56, %v130
    %135 = vst.msk [vmem:[#allocation8 + $0x18] sm:$0xff] %vm56, %v131
    // Predicated region
    $region26: #{dynamixer_forward.15} parent=1 // pred_check
      _
    $region27: #{dynamixer_forward.15} parent=1 // pred_check_branch
      %137 = sbr.rel (0) target = $region29
    $region28: #{dynamixer_forward.15} parent=1 // pred_region
      %s139 = ssub.s32 512, 512
      %140 = vsyncadd [#allocation4], %s139
      %s141 = sshll.u32 [#allocation8], 4
      %s142 = int_to_ptr.vmem [resolvable:$true] %s141
      %147 = dma.vmem_to_hbm [thread:$0]  %s142, 512, %s3, [#allocation4], 128, 128, 8
    $region29: #{dynamixer_forward.15} parent=1 // pred_fallthru
      _
    // Predicated region
    $region30: #{dynamixer_forward.15} parent=1 // pred_check
      _
    $region31: #{dynamixer_forward.15} parent=1 // pred_check_branch
      %149 = sbr.rel (0) target = $region33
    $region32: #{dynamixer_forward.15} parent=1 // pred_region
      %150 = dma.done [#allocation4], 512
    $region33: #{dynamixer_forward.15} parent=1 // pred_fallthru
      _
    %151 = vsyncpa [#allocation3], 1
    %152 = vsyncpa [#allocation6], 1
    %153 = vsyncpa [#allocation4], 1

// kernel: dynamixer_forward.8
$region0: #{dynamixer_forward.8}
  #allocation0 [shape = 'u32[]', space=smem, size = 0x4, offset = 0x4, fixed_abs, tag = 'smem constant byte address 0x4 - core index']
  #allocation1 [shape = 'u32[144,128]{1,0:T(1,128)}', space=vmem, size = 0x12000, scoped, tag = 'internal scratch']
  %s0 = inlined_call_operand.hbm [shape: f32[32,48], index: 0, kind: input, shape index: {}]
  %s1 = inlined_call_operand.hbm [shape: f32[48,32], index: 1, kind: input, shape index: {}]
  %s2 = inlined_call_operand.hbm [shape: f32[1,32], index: 2, kind: input, shape index: {}]
  %s3 = inlined_call_operand.hbm [shape: f32[32,32], index: 3, kind: output, shape index: {}]
  %s4 = sld [smem:[#allocation0]]
  $region34: #{dynamixer_forward.8} parent=0
    _
  %s6 = ssub.s32 1, %s4
  %s7 = scalar_select 0, %s6, %s4
  $region1: #{dynamixer_forward.8} parent=0
    #allocation2 [shape = 'u8[16384]{0}', space=vmem, size = 0x4000, scoped, tag = 'input window, operand 0, single buffered']
    #allocation3 [shape = 's32[1]{0}', space=sflag, size = 0x4, scoped, tag = 'scoped memory for dynamixer_forward.8']
    #allocation4 [shape = 's32[1]{0}', space=sflag, size = 0x4, scoped, tag = 'scoped memory for dynamixer_forward.8']
    #allocation5 [shape = 'u8[24576]{0}', space=vmem, size = 0x6000, scoped, tag = 'input window, operand 1, single buffered']
    #allocation6 [shape = 's32[1]{0}', space=sflag, size = 0x4, scoped, tag = 'scoped memory for dynamixer_forward.8']
    #allocation7 [shape = 'u8[512]{0}', space=vmem, size = 0x400, scoped, tag = 'input window, operand 2, single buffered']
    #allocation8 [shape = 'u8[16384]{0}', space=vmem, size = 0x4000, scoped, tag = 'output window, operand 0, single buffered']
    %8 = vsyncpa [#allocation3], 0
    %9 = vsyncpa [#allocation6], 0
    %10 = vsyncpa [#allocation4], 0
    // Predicated region
    $region2: #{dynamixer_forward.8} parent=1 // pred_check
      _
    $region3: #{dynamixer_forward.8} parent=1 // pred_check_branch
      %12 = sbr.rel (0) target = $region5
    $region4: #{dynamixer_forward.8} parent=1 // pred_region
      %s14 = ssub.s32 512, 512
      %15 = vsyncadd [#allocation3], %s14
      %s16 = sshll.u32 [#allocation2], 4
      %s17 = int_to_ptr.vmem [resolvable:$true] %s16
      %22 = dma.hbm_to_vmem [thread:$0]  %s0, 512, %s17, [#allocation3], 128, 128, 8
    $region5: #{dynamixer_forward.8} parent=1 // pred_fallthru
      _
    // Predicated region
    $region6: #{dynamixer_forward.8} parent=1 // pred_check
      _
    $region7: #{dynamixer_forward.8} parent=1 // pred_check_branch
      %24 = sbr.rel (0) target = $region9
    $region8: #{dynamixer_forward.8} parent=1 // pred_region
      %s26 = ssub.s32 768, 768
      %27 = vsyncadd [#allocation6], %s26
      %s28 = sshll.u32 [#allocation5], 4
      %s29 = int_to_ptr.vmem [resolvable:$true] %s28
      %34 = dma.hbm_to_vmem [thread:$0]  %s1, 768, %s29, [#allocation6], 128, 128, 8
    $region9: #{dynamixer_forward.8} parent=1 // pred_fallthru
      _
    // Predicated region
    $region10: #{dynamixer_forward.8} parent=1 // pred_check
      _
    $region11: #{dynamixer_forward.8} parent=1 // pred_check_branch
      %36 = sbr.rel (0) target = $region13
    $region12: #{dynamixer_forward.8} parent=1 // pred_region
      %s38 = ssub.s32 16, 16
      %39 = vsyncadd [#allocation6], %s38
      %s41 = sshll.u32 [#allocation7], 4
      %s42 = int_to_ptr.vmem [resolvable:$true] %s41
      %44 = dma.hbm_to_vmem [thread:$0]  %s2, 16, %s42, [#allocation6]
    $region13: #{dynamixer_forward.8} parent=1 // pred_fallthru
      _
    // Predicated region
    $region14: #{dynamixer_forward.8} parent=1 // pred_check
      _
    $region15: #{dynamixer_forward.8} parent=1 // pred_check_branch
      %46 = sbr.rel (0) target = $region17
    $region16: #{dynamixer_forward.8} parent=1 // pred_region
      %47 = dma.done [#allocation3], 512
    $region17: #{dynamixer_forward.8} parent=1 // pred_fallthru
      _
    // Predicated region
    $region18: #{dynamixer_forward.8} parent=1 // pred_check
      _
    $region19: #{dynamixer_forward.8} parent=1 // pred_check_branch
      %49 = sbr.rel (0) target = $region21
    $region20: #{dynamixer_forward.8} parent=1 // pred_region
      %50 = dma.done [#allocation6], 768
    $region21: #{dynamixer_forward.8} parent=1 // pred_fallthru
      _
    // Predicated region
    $region22: #{dynamixer_forward.8} parent=1 // pred_check
      _
    $region23: #{dynamixer_forward.8} parent=1 // pred_check_branch
      %52 = sbr.rel (0) target = $region25
    $region24: #{dynamixer_forward.8} parent=1 // pred_region
      %53 = dma.done [#allocation6], 16
    $region25: #{dynamixer_forward.8} parent=1 // pred_fallthru
      _
    %v54 = vld [vmem:[#allocation2] sm:$0xff]
    %v55 = vld [vmem:[#allocation2 + $0x8] sm:$0xff]
    %v56 = vld [vmem:[#allocation2 + $0x10] sm:$0xff]
    %v57 = vld [vmem:[#allocation2 + $0x18] sm:$0xff]
    %v58 = vld [vmem:[#allocation5] sm:$0xff]
    %v59 = vld [vmem:[#allocation5 + $0x8] sm:$0xff]
    %v60 = vld [vmem:[#allocation5 + $0x10] sm:$0xff]
    %v61 = vld [vmem:[#allocation5 + $0x18] sm:$0xff]
    %v62 = vld [vmem:[#allocation5 + $0x20] sm:$0xff]
    %v63 = vld [vmem:[#allocation5 + $0x28] sm:$0xff]
    %v64 = vld [vmem:[#allocation7] sm:$0x1]
    %v66 = vlaneseq
    %v67 = vshrl.u32 %v66, 7
    %v68 = vsub.s32 0, %v67
    %v69 = vrot.slane %v64, %v68
    %vm71 = vcmask 392192
    %v73 = vsel %vm71, %v54, 0
    %v76 = vsel %vm71, %v55, 0
    %v79 = vsel %vm71, %v56, 0
    %v82 = vsel %vm71, %v57, 0
    %84 = vmatprep.subr.mxu0 0.0
    %85 = vmatpush1.msra.mxu0 %v58
    %86 = vmatprep.subr.mxu0 0.0
    %87 = vmatpush1.msra.mxu0 %v59
    %88 = vmatprep.subr.mxu0 0.0
    %89 = vmatpush1.msra.mxu0 %v60
    %90 = vmatprep.subr.mxu0 0.0
    %91 = vmatpush1.msra.mxu0 %v61
    %92 = vmatprep.subr.mxu0 0.0
    %93 = vmatpush1.msra.mxu0 %v62
    %94 = vmatprep.subr.mxu0 0.0
    %95 = vmatpush1.msra.mxu0 %v63
    %96 = vmatprep.subr.mxu0 0.0
    %97 = vmatpush1.msra.mxu0 0.0
    %98 = vmatprep.subr.mxu0 0.0
    %99 = vmatpush1.msra.mxu0 0.0
    %100 = vmatprep.subr.mxu0 0.0
    %101 = vmatpush1.msra.mxu0 0.0
    %102 = vmatprep.subr.mxu0 0.0
    %103 = vmatpush1.msra.mxu0 0.0
    %104 = vmatprep.subr.mxu0 0.0
    %105 = vmatpush1.msra.mxu0 0.0
    %106 = vmatprep.subr.mxu0 0.0
    %107 = vmatpush1.msra.mxu0 0.0
    %108 = vmatprep.subr.mxu0 0.0
    %109 = vmatpush1.msra.mxu0 0.0
    %110 = vmatprep.subr.mxu0 0.0
    %111 = vmatpush1.msra.mxu0 0.0
    %112 = vmatprep.subr.mxu0 0.0
    %113 = vmatpush1.msra.mxu0 0.0
    %114 = vmatprep.subr.mxu0 0.0
    %115 = vmatpush1.msra.mxu0 0.0
    %116 = vmatprep.subr.mxu0 0.0
    %117 = vmatpush1.msra.mxu0 0.0
    %118 = vmatprep.subr.mxu0 0.0
    %119 = vmatpush1.msra.mxu0 0.0
    %120 = vmatprep.subr.mxu0 0.0
    %121 = vmatpush1.msra.mxu0 0.0
    %122 = vmatprep.subr.mxu0 0.0
    %123 = vmatpush1.msra.mxu0 0.0
    %124 = vmatprep.subr.mxu0 0.0
    %125 = vmatpush1.msra.mxu0 0.0
    %126 = vmatprep.subr.mxu0 0.0
    %127 = vmatpush1.msra.mxu0 0.0
    %128 = vmatprep.subr.mxu0 0.0
    %129 = vmatpush1.msra.mxu0 0.0
    %130 = vmatprep.subr.mxu0 0.0
    %131 = vmatpush1.msra.mxu0 0.0
    %132 = vmatprep.subr.mxu0 0.0
    %133 = vmatpush1.msra.mxu0 0.0
    %134 = vmatprep.subr.mxu0 0.0
    %135 = vmatpush1.msra.mxu0 0.0
    %136 = vmatprep.subr.mxu0 0.0
    %137 = vmatpush1.msra.mxu0 0.0
    %138 = vmatprep.subr.mxu0 0.0
    %139 = vmatpush1.msra.mxu0 0.0
    %140 = vmatprep.subr.mxu0 0.0
    %141 = vmatpush1.msra.mxu0 0.0
    %142 = vmatprep.subr.mxu0 0.0
    %143 = vmatpush1.msra.mxu0 0.0
    %144 = vmatprep.subr.mxu0 0.0
    %145 = vmatpush1.msra.mxu0 0.0
    %146 = vmatprep.subr.mxu0 0.0
    %147 = vmatpush1.msra.mxu0 0.0
    %148 = vmatprep.mubr.f32.mxu0 0.0
    %149 = vmatmul.mubr.f32.gmra.mrb[0].mxu0 %v73
    %v150 = vpop.f32.mrb[0].mxu0
    %v151 = vadd.f32 %v69, %v150
    %v152 = vpop.f32.mrb[0].mxu0
    %153 = vmatprep.mubr.f32.mxu0 0.0
    %154 = vmatmul.mubr.f32.gmra.mrb[0].mxu0 %v76
    %v155 = vpop.f32.mrb[0].mxu0
    %v156 = vadd.f32 %v69, %v155
    %v157 = vpop.f32.mrb[0].mxu0
    %158 = vmatprep.mubr.f32.mxu0 0.0
    %159 = vmatmul.mubr.f32.gmra.mrb[0].mxu0 %v79
    %v160 = vpop.f32.mrb[0].mxu0
    %v161 = vadd.f32 %v69, %v160
    %v162 = vpop.f32.mrb[0].mxu0
    %163 = vmatprep.mubr.f32.mxu0 0.0
    %164 = vmatmul.mubr.f32.gmra.mrb[0].mxu0 %v82
    %v165 = vpop.f32.mrb[0].mxu0
    %v166 = vadd.f32 %v69, %v165
    %v167 = vpop.f32.mrb[0].mxu0
    %168 = vdwg.mxu0
    %vm169 = vcmask 261120
    %170 = vst.msk [vmem:[#allocation8] sm:$0xff] %vm169, %v151
    %171 = vst.msk [vmem:[#allocation8 + $0x8] sm:$0xff] %vm169, %v156
    %172 = vst.msk [vmem:[#allocation8 + $0x10] sm:$0xff] %vm169, %v161
    %173 = vst.msk [vmem:[#allocation8 + $0x18] sm:$0xff] %vm169, %v166
    // Predicated region
    $region26: #{dynamixer_forward.8} parent=1 // pred_check
      _
    $region27: #{dynamixer_forward.8} parent=1 // pred_check_branch
      %175 = sbr.rel (0) target = $region29
    $region28: #{dynamixer_forward.8} parent=1 // pred_region
      %s177 = ssub.s32 512, 512
      %178 = vsyncadd [#allocation4], %s177
      %s179 = sshll.u32 [#allocation8], 4
      %s180 = int_to_ptr.vmem [resolvable:$true] %s179
      %185 = dma.vmem_to_hbm [thread:$0]  %s180, 512, %s3, [#allocation4], 128, 128, 8
    $region29: #{dynamixer_forward.8} parent=1 // pred_fallthru
      _
    // Predicated region
    $region30: #{dynamixer_forward.8} parent=1 // pred_check
      _
    $region31: #{dynamixer_forward.8} parent=1 // pred_check_branch
      %187 = sbr.rel (0) target = $region33
    $region32: #{dynamixer_forward.8} parent=1 // pred_region
      %188 = dma.done [#allocation4], 512
    $region33: #{dynamixer_forward.8} parent=1 // pred_fallthru
      _
    %189 = vsyncpa [#allocation3], 1
    %190 = vsyncpa [#allocation6], 1
    %191 = vsyncpa [#allocation4], 1

// kernel: dynamixer_forward.11
$region0: #{dynamixer_forward.11}
  #allocation0 [shape = 'u32[]', space=smem, size = 0x4, offset = 0x4, fixed_abs, tag = 'smem constant byte address 0x4 - core index']
  #allocation1 [shape = 'u32[144,128]{1,0:T(1,128)}', space=vmem, size = 0x12000, scoped, tag = 'internal scratch']
  %s0 = inlined_call_operand.hbm [shape: f32[2,16,32], index: 0, kind: input, shape index: {}]
  %s1 = inlined_call_operand.hbm [shape: f32[2,16,32], index: 1, kind: input, shape index: {}]
  %s2 = inlined_call_operand.hbm [shape: f32[2,16,32], index: 2, kind: input, shape index: {}]
  %s3 = inlined_call_operand.hbm [shape: f32[32,32], index: 3, kind: input, shape index: {}]
  %s4 = inlined_call_operand.hbm [shape: f32[32,8], index: 4, kind: input, shape index: {}]
  %s5 = inlined_call_operand.hbm [shape: f32[1,8], index: 5, kind: input, shape index: {}]
  %s6 = inlined_call_operand.hbm [shape: f32[8,96], index: 6, kind: input, shape index: {}]
  %s7 = inlined_call_operand.hbm [shape: f32[1,96], index: 7, kind: input, shape index: {}]
  %s8 = inlined_call_operand.hbm [shape: f32[32,32], index: 8, kind: input, shape index: {}]
  %s9 = inlined_call_operand.hbm [shape: f32[1,32], index: 9, kind: input, shape index: {}]
  %s10 = inlined_call_operand.hbm [shape: f32[2,16,32], index: 10, kind: output, shape index: {}]
  %s11 = sld [smem:[#allocation0]]
  $region113: #{dynamixer_forward.11} parent=0
    _
  %s13 = ssub.s32 1, %s11
  %s14 = scalar_select 0, %s13, %s11
  $region1: #{dynamixer_forward.11} parent=0
    #allocation2 [shape = 'u8[16384]{0}', space=vmem, size = 0x4000, scoped, tag = 'input window, operand 0']
    #allocation3 [shape = 's32[2]{0}', space=sflag, size = 0x8, scoped, tag = 'scoped memory for dynamixer_forward.11']
    #allocation4 [shape = 's32[2]{0}', space=sflag, size = 0x8, scoped, tag = 'scoped memory for dynamixer_forward.11']
    #allocation5 [shape = 'u8[16384]{0}', space=vmem, size = 0x4000, scoped, tag = 'input window, operand 1']
    #allocation6 [shape = 's32[2]{0}', space=sflag, size = 0x8, scoped, tag = 'scoped memory for dynamixer_forward.11']
    #allocation7 [shape = 'u8[16384]{0}', space=vmem, size = 0x4000, scoped, tag = 'input window, operand 2']
    #allocation8 [shape = 'u8[16384]{0}', space=vmem, size = 0x4000, scoped, tag = 'input window, operand 3, single buffered']
    #allocation9 [shape = 's32[1]{0}', space=sflag, size = 0x4, scoped, tag = 'scoped memory for dynamixer_forward.11']
    #allocation10 [shape = 'u8[16384]{0}', space=vmem, size = 0x4000, scoped, tag = 'input window, operand 4, single buffered']
    #allocation11 [shape = 'u8[512]{0}', space=vmem, size = 0x400, scoped, tag = 'input window, operand 5, single buffered']
    #allocation12 [shape = 's32[1]{0}', space=sflag, size = 0x4, scoped, tag = 'scoped memory for dynamixer_forward.11']
    #allocation13 [shape = 'u8[4096]{0}', space=vmem, size = 0x1000, scoped, tag = 'input window, operand 6, single buffered']
    #allocation14 [shape = 'u8[512]{0}', space=vmem, size = 0x400, scoped, tag = 'input window, operand 7, single buffered']
    #allocation15 [shape = 's32[1]{0}', space=sflag, size = 0x4, scoped, tag = 'scoped memory for dynamixer_forward.11']
    #allocation16 [shape = 'u8[16384]{0}', space=vmem, size = 0x4000, scoped, tag = 'input window, operand 8, single buffered']
    #allocation17 [shape = 'u8[512]{0}', space=vmem, size = 0x400, scoped, tag = 'input window, operand 9, single buffered']
    #allocation18 [shape = 's32[1]{0}', space=sflag, size = 0x4, scoped, tag = 'scoped memory for dynamixer_forward.11']
    #allocation19 [shape = 'u8[16384]{0}', space=vmem, size = 0x4000, scoped, tag = 'output window, operand 0']
    %15 = vsyncpa [#allocation3], 0
    %s16 = scalar_lea.sflag [#allocation3], 1
    %17 = vsyncpa %s16, 0
    %18 = vsyncpa [#allocation6], 0
    %s19 = scalar_lea.sflag [#allocation6], 1
    %20 = vsyncpa %s19, 0
    %21 = vsyncpa [#allocation9], 0
    %22 = vsyncpa [#allocation12], 0
    %23 = vsyncpa [#allocation15], 0
    %24 = vsyncpa [#allocation18], 0
    %25 = vsyncpa [#allocation4], 0
    %s26 = scalar_lea.sflag [#allocation4], 1
    %27 = vsyncpa %s26, 0
    loop: start=0, step=1, limit=4
    $region2: #{dynamixer_forward.11} parent=1 // loop_pre_header
      _
    $region3: #{dynamixer_forward.11} parent=1 // loop_header
      %s29 = sphi 0, %s33
      %p30 = scmp.ge.s32.totalorder %s29, 4
      %s39 = sphi 0, %s41
      %s42 = sphi 0, %s39
      %s43 = sphi 0, %s42
      %s59 = sphi 0, %s43
      %s65 = sphi 0, %s67
      %s68 = sphi 0, %s65
      %s69 = sphi 0, %s68
      %s85 = sphi 0, %s69
      %s91 = sphi 0, %s93
      %s94 = sphi 0, %s91
      %s95 = sphi 0, %s94
      %s111 = sphi 0, %s95
      %s115 = sphi 0, %s115
      %s117 = sphi 0, %s115
      %s118 = sphi 0, %s117
      %s132 = sphi 0, %s118
      %s136 = sphi 0, %s136
      %s138 = sphi 0, %s136
      %s139 = sphi 0, %s138
      %s153 = sphi 0, %s139
      %s157 = sphi 0, %s157
      %s159 = sphi 0, %s157
      %s160 = sphi 0, %s159
      %s174 = sphi 0, %s160
      %s178 = sphi 0, %s178
      %s180 = sphi 0, %s178
      %s181 = sphi 0, %s180
      %s195 = sphi 0, %s181
      %s199 = sphi 0, %s199
      %s201 = sphi 0, %s199
      %s202 = sphi 0, %s201
      %s216 = sphi 0, %s202
      %s220 = sphi 0, %s220
      %s222 = sphi 0, %s220
      %s223 = sphi 0, %s222
      %s237 = sphi 0, %s223
      %s241 = sphi 0, %s241
      %s243 = sphi 0, %s241
      %s244 = sphi 0, %s243
      %s258 = sphi 0, %s244
      %s264 = sphi 0, %s266
      %s267 = sphi 0, %s264
      %s268 = sphi 0, %s267
      %s284 = sphi 0, %s268
    $region4: #{dynamixer_forward.11} parent=1 // loop_header_branch
      %32 = sbr.rel (%p30) target = $region8
    $region5: #{dynamixer_forward.11} parent=1 // loop_body
      %s34 = ssub.s32 %s29, 1
      %s35 = ssub.s32 %s29, 2
      %s36 = sadd.s32 %s29, 1
      %s37 = ssub.s32 %s29, %s36
      %p38 = scmp.eq.s32.totalorder %s37, 0
      %s40 = sadd.s32 %s39, 1
      %s41 = scalar_select %p38, %s39, %s40
      %p44 = pneg %p38
      %p45 = scmp.eq.s32.totalorder %s29, 1
      %p46 = por %p44, %p45
      %p47 = scmp.ne.s32.totalorder %s39, %s42
      %p48 = scmp.eq.s32.totalorder %s29, 0
      %p49 = por %p47, %p48
      %p50 = scmp.ne.s32.totalorder %s39, %s42
      %p51 = scmp.eq.s32.totalorder %s34, 1
      %p52 = por %p50, %p51
      %p53 = scmp.ne.s32.totalorder %s42, %s43
      %p54 = scmp.eq.s32.totalorder %s34, 0
      %p55 = por %p53, %p54
      %p56 = scmp.ne.s32.totalorder %s42, %s43
      %p57 = scmp.eq.s32.totalorder %s35, 1
      %p58 = por %p56, %p57
      %p60 = scmp.ne.s32.totalorder %s43, %s59
      %p61 = scmp.eq.s32.totalorder %s35, 0
      %p62 = por %p60, %p61
      %s63 = ssub.s32 %s29, %s36
      %p64 = scmp.eq.s32.totalorder %s63, 0
      %s66 = sadd.s32 %s65, 1
      %s67 = scalar_select %p64, %s65, %s66
      %p70 = pneg %p64
      %p71 = scmp.eq.s32.totalorder %s29, 1
      %p72 = por %p70, %p71
      %p73 = scmp.ne.s32.totalorder %s65, %s68
      %p74 = scmp.eq.s32.totalorder %s29, 0
      %p75 = por %p73, %p74
      %p76 = scmp.ne.s32.totalorder %s65, %s68
      %p77 = scmp.eq.s32.totalorder %s34, 1
      %p78 = por %p76, %p77
      %p79 = scmp.ne.s32.totalorder %s68, %s69
      %p80 = scmp.eq.s32.totalorder %s34, 0
      %p81 = por %p79, %p80
      %p82 = scmp.ne.s32.totalorder %s68, %s69
      %p83 = scmp.eq.s32.totalorder %s35, 1
      %p84 = por %p82, %p83
      %p86 = scmp.ne.s32.totalorder %s69, %s85
      %p87 = scmp.eq.s32.totalorder %s35, 0
      %p88 = por %p86, %p87
      %s89 = ssub.s32 %s29, %s36
      %p90 = scmp.eq.s32.totalorder %s89, 0
      %s92 = sadd.s32 %s91, 1
      %s93 = scalar_select %p90, %s91, %s92
      %p96 = pneg %p90
      %p97 = scmp.eq.s32.totalorder %s29, 1
      %p98 = por %p96, %p97
      %p99 = scmp.ne.s32.totalorder %s91, %s94
      %p100 = scmp.eq.s32.totalorder %s29, 0
      %p101 = por %p99, %p100
      %p102 = scmp.ne.s32.totalorder %s91, %s94
      %p103 = scmp.eq.s32.totalorder %s34, 1
      %p104 = por %p102, %p103
      %p105 = scmp.ne.s32.totalorder %s94, %s95
      %p106 = scmp.eq.s32.totalorder %s34, 0
      %p107 = por %p105, %p106
      %p108 = scmp.ne.s32.totalorder %s94, %s95
      %p109 = scmp.eq.s32.totalorder %s35, 1
      %p110 = por %p108, %p109
      %p112 = scmp.ne.s32.totalorder %s95, %s111
      %p113 = scmp.eq.s32.totalorder %s35, 0
      %p114 = por %p112, %p113
      %s116 = sadd.s32 %s115, 1
      %p119 = scmp.eq.s32.totalorder %s29, 1
      %p120 = scmp.ne.s32.totalorder %s115, %s117
      %p121 = scmp.eq.s32.totalorder %s29, 0
      %p122 = por %p120, %p121
      %p123 = scmp.ne.s32.totalorder %s115, %s117
      %p124 = scmp.eq.s32.totalorder %s34, 1
      %p125 = por %p123, %p124
      %p126 = scmp.ne.s32.totalorder %s117, %s118
      %p127 = scmp.eq.s32.totalorder %s34, 0
      %p128 = por %p126, %p127
      %p129 = scmp.ne.s32.totalorder %s117, %s118
      %p130 = scmp.eq.s32.totalorder %s35, 1
      %p131 = por %p129, %p130
      %p133 = scmp.ne.s32.totalorder %s118, %s132
      %p134 = scmp.eq.s32.totalorder %s35, 0
      %p135 = por %p133, %p134
      %s137 = sadd.s32 %s136, 1
      %p140 = scmp.eq.s32.totalorder %s29, 1
      %p141 = scmp.ne.s32.totalorder %s136, %s138
      %p142 = scmp.eq.s32.totalorder %s29, 0
      %p143 = por %p141, %p142
      %p144 = scmp.ne.s32.totalorder %s136, %s138
      %p145 = scmp.eq.s32.totalorder %s34, 1
      %p146 = por %p144, %p145
      %p147 = scmp.ne.s32.totalorder %s138, %s139
      %p148 = scmp.eq.s32.totalorder %s34, 0
      %p149 = por %p147, %p148
      %p150 = scmp.ne.s32.totalorder %s138, %s139
      %p151 = scmp.eq.s32.totalorder %s35, 1
      %p152 = por %p150, %p151
      %p154 = scmp.ne.s32.totalorder %s139, %s153
      %p155 = scmp.eq.s32.totalorder %s35, 0
      %p156 = por %p154, %p155
      %s158 = sadd.s32 %s157, 1
      %p161 = scmp.eq.s32.totalorder %s29, 1
      %p162 = scmp.ne.s32.totalorder %s157, %s159
      %p163 = scmp.eq.s32.totalorder %s29, 0
      %p164 = por %p162, %p163
      %p165 = scmp.ne.s32.totalorder %s157, %s159
      %p166 = scmp.eq.s32.totalorder %s34, 1
      %p167 = por %p165, %p166
      %p168 = scmp.ne.s32.totalorder %s159, %s160
      %p169 = scmp.eq.s32.totalorder %s34, 0
      %p170 = por %p168, %p169
      %p171 = scmp.ne.s32.totalorder %s159, %s160
      %p172 = scmp.eq.s32.totalorder %s35, 1
      %p173 = por %p171, %p172
      %p175 = scmp.ne.s32.totalorder %s160, %s174
      %p176 = scmp.eq.s32.totalorder %s35, 0
      %p177 = por %p175, %p176
      %s179 = sadd.s32 %s178, 1
      %p182 = scmp.eq.s32.totalorder %s29, 1
      %p183 = scmp.ne.s32.totalorder %s178, %s180
      %p184 = scmp.eq.s32.totalorder %s29, 0
      %p185 = por %p183, %p184
      %p186 = scmp.ne.s32.totalorder %s178, %s180
      %p187 = scmp.eq.s32.totalorder %s34, 1
      %p188 = por %p186, %p187
      %p189 = scmp.ne.s32.totalorder %s180, %s181
      %p190 = scmp.eq.s32.totalorder %s34, 0
      %p191 = por %p189, %p190
      %p192 = scmp.ne.s32.totalorder %s180, %s181
      %p193 = scmp.eq.s32.totalorder %s35, 1
      %p194 = por %p192, %p193
      %p196 = scmp.ne.s32.totalorder %s181, %s195
      %p197 = scmp.eq.s32.totalorder %s35, 0
      %p198 = por %p196, %p197
      %s200 = sadd.s32 %s199, 1
      %p203 = scmp.eq.s32.totalorder %s29, 1
      %p204 = scmp.ne.s32.totalorder %s199, %s201
      %p205 = scmp.eq.s32.totalorder %s29, 0
      %p206 = por %p204, %p205
      %p207 = scmp.ne.s32.totalorder %s199, %s201
      %p208 = scmp.eq.s32.totalorder %s34, 1
      %p209 = por %p207, %p208
      %p210 = scmp.ne.s32.totalorder %s201, %s202
      %p211 = scmp.eq.s32.totalorder %s34, 0
      %p212 = por %p210, %p211
      %p213 = scmp.ne.s32.totalorder %s201, %s202
      %p214 = scmp.eq.s32.totalorder %s35, 1
      %p215 = por %p213, %p214
      %p217 = scmp.ne.s32.totalorder %s202, %s216
      %p218 = scmp.eq.s32.totalorder %s35, 0
      %p219 = por %p217, %p218
      %s221 = sadd.s32 %s220, 1
      %p224 = scmp.eq.s32.totalorder %s29, 1
      %p225 = scmp.ne.s32.totalorder %s220, %s222
      %p226 = scmp.eq.s32.totalorder %s29, 0
      %p227 = por %p225, %p226
      %p228 = scmp.ne.s32.totalorder %s220, %s222
      %p229 = scmp.eq.s32.totalorder %s34, 1
      %p230 = por %p228, %p229
      %p231 = scmp.ne.s32.totalorder %s222, %s223
      %p232 = scmp.eq.s32.totalorder %s34, 0
      %p233 = por %p231, %p232
      %p234 = scmp.ne.s32.totalorder %s222, %s223
      %p235 = scmp.eq.s32.totalorder %s35, 1
      %p236 = por %p234, %p235
      %p238 = scmp.ne.s32.totalorder %s223, %s237
      %p239 = scmp.eq.s32.totalorder %s35, 0
      %p240 = por %p238, %p239
      %s242 = sadd.s32 %s241, 1
      %p245 = scmp.eq.s32.totalorder %s29, 1
      %p246 = scmp.ne.s32.totalorder %s241, %s243
      %p247 = scmp.eq.s32.totalorder %s29, 0
      %p248 = por %p246, %p247
      %p249 = scmp.ne.s32.totalorder %s241, %s243
      %p250 = scmp.eq.s32.totalorder %s34, 1
      %p251 = por %p249, %p250
      %p252 = scmp.ne.s32.totalorder %s243, %s244
      %p253 = scmp.eq.s32.totalorder %s34, 0
      %p254 = por %p252, %p253
      %p255 = scmp.ne.s32.totalorder %s243, %s244
      %p256 = scmp.eq.s32.totalorder %s35, 1
      %p257 = por %p255, %p256
      %p259 = scmp.ne.s32.totalorder %s244, %s258
      %p260 = scmp.eq.s32.totalorder %s35, 0
      %p261 = por %p259, %p260
      %s262 = ssub.s32 %s29, %s36
      %p263 = scmp.eq.s32.totalorder %s262, 0
      %s265 = sadd.s32 %s264, 1
      %s266 = scalar_select %p263, %s264, %s265
      %p269 = pneg %p263
      %p270 = scmp.eq.s32.totalorder %s29, 1
      %p271 = por %p269, %p270
      %p272 = scmp.ne.s32.totalorder %s264, %s267
      %p273 = scmp.eq.s32.totalorder %s29, 0
      %p274 = por %p272, %p273
      %p275 = scmp.ne.s32.totalorder %s264, %s267
      %p276 = scmp.eq.s32.totalorder %s34, 1
      %p277 = por %p275, %p276
      %p278 = scmp.ne.s32.totalorder %s267, %s268
      %p279 = scmp.eq.s32.totalorder %s34, 0
      %p280 = por %p278, %p279
      %p281 = scmp.ne.s32.totalorder %s267, %s268
      %p282 = scmp.eq.s32.totalorder %s35, 1
      %p283 = por %p281, %p282
      %p285 = scmp.ne.s32.totalorder %s268, %s284
      %p286 = scmp.eq.s32.totalorder %s35, 0
      %p287 = por %p285, %p286
      %p288 = scmp.le.s32.totalorder 1, %s29
      %p289 = scmp.lt.s32.totalorder %s29, 3
      %p290 = pnand %p288, %p289
      %p291 = pneg %p290
      // Predicated region
      $region9: #{dynamixer_forward.11} parent=5 // pred_check
        _
      $region10: #{dynamixer_forward.11} parent=5 // pred_check_branch
        %293 = sbr.rel (%p290) target = $region12
      $region11: #{dynamixer_forward.11} parent=5 // pred_region
        %s294 = ssub.s32 %s29, 1
        // Predicated region
        $region13: #{dynamixer_forward.11} parent=11 // pred_check
          %p295 = pneg %p128
        $region14: #{dynamixer_forward.11} parent=11 // pred_check_branch
          %297 = sbr.rel (%p295) target = $region16
        $region15: #{dynamixer_forward.11} parent=11 // pred_region
          %s299 = ssub.s32 512, 512
          %300 = vsyncadd [#allocation9], %s299
          %s301 = sshll.u32 [#allocation8], 4
          %s302 = int_to_ptr.vmem [resolvable:$true] %s301
          %307 = dma.hbm_to_vmem [thread:$0]  %s3, 512, %s302, [#allocation9], 128, 128, 8
        $region16: #{dynamixer_forward.11} parent=11 // pred_fallthru
          _
        // Predicated region
        $region17: #{dynamixer_forward.11} parent=11 // pred_check
          %p308 = pneg %p149
        $region18: #{dynamixer_forward.11} parent=11 // pred_check_branch
          %310 = sbr.rel (%p308) target = $region20
        $region19: #{dynamixer_forward.11} parent=11 // pred_region
          %s312 = ssub.s32 512, 512
          %313 = vsyncadd [#allocation9], %s312
          %s314 = sshll.u32 [#allocation10], 4
          %s315 = int_to_ptr.vmem [resolvable:$true] %s314
          %320 = dma.hbm_to_vmem [thread:$0]  %s4, 512, %s315, [#allocation9], 128, 128, 8
        $region20: #{dynamixer_forward.11} parent=11 // pred_fallthru
          _
        // Predicated region
        $region21: #{dynamixer_forward.11} parent=11 // pred_check
          %p321 = pneg %p170
        $region22: #{dynamixer_forward.11} parent=11 // pred_check_branch
          %323 = sbr.rel (%p321) target = $region24
        $region23: #{dynamixer_forward.11} parent=11 // pred_region
          %s325 = ssub.s32 16, 16
          %326 = vsyncadd [#allocation12], %s325
          %s328 = sshll.u32 [#allocation11], 4
          %s329 = int_to_ptr.vmem [resolvable:$true] %s328
          %331 = dma.hbm_to_vmem [thread:$0]  %s5, 16, %s329, [#allocation12]
        $region24: #{dynamixer_forward.11} parent=11 // pred_fallthru
          _
        // Predicated region
        $region25: #{dynamixer_forward.11} parent=11 // pred_check
          %p332 = pneg %p191
        $region26: #{dynamixer_forward.11} parent=11 // pred_check_branch
          %334 = sbr.rel (%p332) target = $region28
        $region27: #{dynamixer_forward.11} parent=11 // pred_region
          %s336 = ssub.s32 128, 128
          %337 = vsyncadd [#allocation12], %s336
          %s339 = sshll.u32 [#allocation13], 4
          %s340 = int_to_ptr.vmem [resolvable:$true] %s339
          %342 = dma.hbm_to_vmem [thread:$0]  %s6, 128, %s340, [#allocation12]
        $region28: #{dynamixer_forward.11} parent=11 // pred_fallthru
          _
        // Predicated region
        $region29: #{dynamixer_forward.11} parent=11 // pred_check
          %p343 = pneg %p212
        $region30: #{dynamixer_forward.11} parent=11 // pred_check_branch
          %345 = sbr.rel (%p343) target = $region32
        $region31: #{dynamixer_forward.11} parent=11 // pred_region
          %s347 = ssub.s32 16, 16
          %348 = vsyncadd [#allocation15], %s347
          %s350 = sshll.u32 [#allocation14], 4
          %s351 = int_to_ptr.vmem [resolvable:$true] %s350
          %353 = dma.hbm_to_vmem [thread:$0]  %s7, 16, %s351, [#allocation15]
        $region32: #{dynamixer_forward.11} parent=11 // pred_fallthru
          _
        // Predicated region
        $region33: #{dynamixer_forward.11} parent=11 // pred_check
          %p354 = pneg %p233
        $region34: #{dynamixer_forward.11} parent=11 // pred_check_branch
          %356 = sbr.rel (%p354) target = $region36
        $region35: #{dynamixer_forward.11} parent=11 // pred_region
          %s358 = ssub.s32 512, 512
          %359 = vsyncadd [#allocation15], %s358
          %s360 = sshll.u32 [#allocation16], 4
          %s361 = int_to_ptr.vmem [resolvable:$true] %s360
          %366 = dma.hbm_to_vmem [thread:$0]  %s8, 512, %s361, [#allocation15], 128, 128, 8
        $region36: #{dynamixer_forward.11} parent=11 // pred_fallthru
          _
        // Predicated region
        $region37: #{dynamixer_forward.11} parent=11 // pred_check
          %p367 = pneg %p254
        $region38: #{dynamixer_forward.11} parent=11 // pred_check_branch
          %369 = sbr.rel (%p367) target = $region40
        $region39: #{dynamixer_forward.11} parent=11 // pred_region
          %s371 = ssub.s32 16, 16
          %372 = vsyncadd [#allocation18], %s371
          %s374 = sshll.u32 [#allocation17], 4
          %s375 = int_to_ptr.vmem [resolvable:$true] %s374
          %377 = dma.hbm_to_vmem [thread:$0]  %s9, 16, %s375, [#allocation18]
        $region40: #{dynamixer_forward.11} parent=11 // pred_fallthru
          _
      $region12: #{dynamixer_forward.11} parent=5 // pred_fallthru
        _
      %p378 = scmp.lt.s32.totalorder %s29, 2
      // Predicated region
      $region41: #{dynamixer_forward.11} parent=5 // pred_check
        %p379 = pneg %p378
      $region42: #{dynamixer_forward.11} parent=5 // pred_check_branch
        %381 = sbr.rel (%p379) target = $region44
      $region43: #{dynamixer_forward.11} parent=5 // pred_region
        // Predicated region
        $region45: #{dynamixer_forward.11} parent=43 // pred_check
          %p382 = pneg %p49
        $region46: #{dynamixer_forward.11} parent=43 // pred_check_branch
          %384 = sbr.rel (%p382) target = $region48
        $region47: #{dynamixer_forward.11} parent=43 // pred_region
          %s385 = sand.u32 %s39, 1
          %s386 = scalar_lea.sflag [#allocation3], %s385
          %s387 = sand.u32 %s39, 1
          %s388 = smul.addr %s387, 16
          %s389 = scalar_lea.vmem [#allocation2], %s388
          %s391 = ssub.s32 256, 256
          %392 = vsyncadd %s386, %s391
          %s393 = smul.addr %s29, 2
          %s394 = smul.addr %s393, 128
          %s395 = scalar_lea.hbm %s0, %s394
          %s396 = sshll.u32 %s389, 4
          %s397 = int_to_ptr.vmem [resolvable:$true] %s396
          %402 = dma.hbm_to_vmem [thread:$0]  %s395, 256, %s397, %s386, 128, 128, 8
        $region48: #{dynamixer_forward.11} parent=43 // pred_fallthru
          _
        // Predicated region
        $region49: #{dynamixer_forward.11} parent=43 // pred_check
          %p403 = pneg %p75
        $region50: #{dynamixer_forward.11} parent=43 // pred_check_branch
          %405 = sbr.rel (%p403) target = $region52
        $region51: #{dynamixer_forward.11} parent=43 // pred_region
          %s406 = sand.u32 %s29, 1
          %s407 = scalar_lea.sflag [#allocation6], %s406
          %s408 = sand.u32 %s65, 1
          %s409 = smul.addr %s408, 16
          %s410 = scalar_lea.vmem [#allocation5], %s409
          %s412 = ssub.s32 256, 256
          %413 = vsyncadd %s407, %s412
          %s414 = smul.addr %s29, 2
          %s415 = smul.addr %s414, 128
          %s416 = scalar_lea.hbm %s1, %s415
          %s417 = sshll.u32 %s410, 4
          %s418 = int_to_ptr.vmem [resolvable:$true] %s417
          %423 = dma.hbm_to_vmem [thread:$0]  %s416, 256, %s418, %s407, 128, 128, 8
        $region52: #{dynamixer_forward.11} parent=43 // pred_fallthru
          _
        // Predicated region
        $region53: #{dynamixer_forward.11} parent=43 // pred_check
          %p424 = pneg %p101
        $region54: #{dynamixer_forward.11} parent=43 // pred_check_branch
          %426 = sbr.rel (%p424) target = $region56
        $region55: #{dynamixer_forward.11} parent=43 // pred_region
          %s427 = sand.u32 %s29, 1
          %s428 = scalar_lea.sflag [#allocation6], %s427
          %s429 = sand.u32 %s91, 1
          %s430 = smul.addr %s429, 16
          %s431 = scalar_lea.vmem [#allocation7], %s430
          %s433 = ssub.s32 256, 256
          %434 = vsyncadd %s428, %s433
          %s435 = smul.addr %s29, 2
          %s436 = smul.addr %s435, 128
          %s437 = scalar_lea.hbm %s2, %s436
          %s438 = sshll.u32 %s431, 4
          %s439 = int_to_ptr.vmem [resolvable:$true] %s438
          %444 = dma.hbm_to_vmem [thread:$0]  %s437, 256, %s439, %s428, 128, 128, 8
        $region56: #{dynamixer_forward.11} parent=43 // pred_fallthru
          _
      $region44: #{dynamixer_forward.11} parent=5 // pred_fallthru
        _
      %p445 = scmp.le.s32.totalorder 1, %s29
      %p446 = scmp.lt.s32.totalorder %s29, 3
      %p447 = pnand %p445, %p446
      %p448 = pneg %p447
      // Predicated region
      $region57: #{dynamixer_forward.11} parent=5 // pred_check
        _
      $region58: #{dynamixer_forward.11} parent=5 // pred_check_branch
        %450 = sbr.rel (%p447) target = $region60
      $region59: #{dynamixer_forward.11} parent=5 // pred_region
        %s451 = ssub.s32 %s29, 1
        %s452 = sand.u32 %s42, 1
        %s453 = scalar_lea.sflag [#allocation3], %s452
        %s454 = sand.u32 %s42, 1
        %s455 = smul.addr %s454, 16
        %s456 = scalar_lea.vmem [#allocation2], %s455
        // Predicated region
        $region61: #{dynamixer_forward.11} parent=59 // pred_check
          %p457 = pneg %p55
        $region62: #{dynamixer_forward.11} parent=59 // pred_check_branch
          %459 = sbr.rel (%p457) target = $region64
        $region63: #{dynamixer_forward.11} parent=59 // pred_region
          %460 = dma.done %s453, 256
        $region64: #{dynamixer_forward.11} parent=59 // pred_fallthru
          _
        %s461 = sand.u32 %s34, 1
        %s462 = scalar_lea.sflag [#allocation6], %s461
        %s463 = sand.u32 %s68, 1
        %s464 = smul.addr %s463, 16
        %s465 = scalar_lea.vmem [#allocation5], %s464
        // Predicated region
        $region65: #{dynamixer_forward.11} parent=59 // pred_check
          %p466 = pneg %p81
        $region66: #{dynamixer_forward.11} parent=59 // pred_check_branch
          %468 = sbr.rel (%p466) target = $region68
        $region67: #{dynamixer_forward.11} parent=59 // pred_region
          %469 = dma.done %s462, 256
        $region68: #{dynamixer_forward.11} parent=59 // pred_fallthru
          _
        %s470 = sand.u32 %s34, 1
        %s471 = scalar_lea.sflag [#allocation6], %s470
        %s472 = sand.u32 %s94, 1
        %s473 = smul.addr %s472, 16
        %s474 = scalar_lea.vmem [#allocation7], %s473
        // Predicated region
        $region69: #{dynamixer_forward.11} parent=59 // pred_check
          %p475 = pneg %p107
        $region70: #{dynamixer_forward.11} parent=59 // pred_check_branch
          %477 = sbr.rel (%p475) target = $region72
        $region71: #{dynamixer_forward.11} parent=59 // pred_region
          %478 = dma.done %s471, 256
        $region72: #{dynamixer_forward.11} parent=59 // pred_fallthru
          _
        // Predicated region
        $region73: #{dynamixer_forward.11} parent=59 // pred_check
          %p479 = pneg %p128
        $region74: #{dynamixer_forward.11} parent=59 // pred_check_branch
          %481 = sbr.rel (%p479) target = $region76
        $region75: #{dynamixer_forward.11} parent=59 // pred_region
          %482 = dma.done [#allocation9], 512
        $region76: #{dynamixer_forward.11} parent=59 // pred_fallthru
          _
        // Predicated region
        $region77: #{dynamixer_forward.11} parent=59 // pred_check
          %p483 = pneg %p149
        $region78: #{dynamixer_forward.11} parent=59 // pred_check_branch
          %485 = sbr.rel (%p483) target = $region80
        $region79: #{dynamixer_forward.11} parent=59 // pred_region
          %486 = dma.done [#allocation9], 512
        $region80: #{dynamixer_forward.11} parent=59 // pred_fallthru
          _
        // Predicated region
        $region81: #{dynamixer_forward.11} parent=59 // pred_check
          %p487 = pneg %p170
        $region82: #{dynamixer_forward.11} parent=59 // pred_check_branch
          %489 = sbr.rel (%p487) target = $region84
        $region83: #{dynamixer_forward.11} parent=59 // pred_region
          %490 = dma.done [#allocation12], 16
        $region84: #{dynamixer_forward.11} parent=59 // pred_fallthru
          _
        // Predicated region
        $region85: #{dynamixer_forward.11} parent=59 // pred_check
          %p491 = pneg %p191
        $region86: #{dynamixer_forward.11} parent=59 // pred_check_branch
          %493 = sbr.rel (%p491) target = $region88
        $region87: #{dynamixer_forward.11} parent=59 // pred_region
          %494 = dma.done [#allocation12], 128
        $region88: #{dynamixer_forward.11} parent=59 // pred_fallthru
          _
        // Predicated region
        $region89: #{dynamixer_forward.11} parent=59 // pred_check
          %p495 = pneg %p212
        $region90: #{dynamixer_forward.11} parent=59 // pred_check_branch
          %497 = sbr.rel (%p495) target = $region92
        $region91: #{dynamixer_forward.11} parent=59 // pred_region
          %498 = dma.done [#allocation15], 16
        $region92: #{dynamixer_forward.11} parent=59 // pred_fallthru
          _
        // Predicated region
        $region93: #{dynamixer_forward.11} parent=59 // pred_check
          %p499 = pneg %p233
        $region94: #{dynamixer_forward.11} parent=59 // pred_check_branch
          %501 = sbr.rel (%p499) target = $region96
        $region95: #{dynamixer_forward.11} parent=59 // pred_region
          %502 = dma.done [#allocation15], 512
        $region96: #{dynamixer_forward.11} parent=59 // pred_fallthru
          _
        // Predicated region
        $region97: #{dynamixer_forward.11} parent=59 // pred_check
          %p503 = pneg %p254
        $region98: #{dynamixer_forward.11} parent=59 // pred_check_branch
          %505 = sbr.rel (%p503) target = $region100
        $region99: #{dynamixer_forward.11} parent=59 // pred_region
          %506 = dma.done [#allocation18], 16
        $region100: #{dynamixer_forward.11} parent=59 // pred_fallthru
          _
        %s507 = sand.u32 %s42, 1
        %s508 = scalar_lea.sflag [#allocation3], %s507
        %s509 = sand.u32 %s42, 1
        %s510 = smul.addr %s509, 16
        %s511 = scalar_lea.vmem [#allocation2], %s510
        %p512 = pneg %p55
        %p513 = pneg %p52
        %s514 = sand.u32 %s34, 1
        %s515 = scalar_lea.sflag [#allocation6], %s514
        %s516 = sand.u32 %s68, 1
        %s517 = smul.addr %s516, 16
        %s518 = scalar_lea.vmem [#allocation5], %s517
        %p519 = pneg %p81
        %p520 = pneg %p78
        %s521 = sand.u32 %s34, 1
        %s522 = scalar_lea.sflag [#allocation6], %s521
        %s523 = sand.u32 %s94, 1
        %s524 = smul.addr %s523, 16
        %s525 = scalar_lea.vmem [#allocation7], %s524
        %p526 = pneg %p107
        %p527 = pneg %p104
        %p528 = pneg %p128
        %p529 = pneg %p125
        %p530 = pneg %p149
        %p531 = pneg %p146
        %p532 = pneg %p170
        %p533 = pneg %p167
        %p534 = pneg %p191
        %p535 = pneg %p188
        %p536 = pneg %p212
        %p537 = pneg %p209
        %p538 = pneg %p233
        %p539 = pneg %p230
        %p540 = pneg %p254
        %p541 = pneg %p251
        %p542 = pneg %p280
        %p543 = pneg %p277
        %s544 = sand.u32 %s267, 1
        %s545 = scalar_lea.sflag [#allocation4], %s544
        %s546 = sand.u32 %s267, 1
        %s547 = smul.addr %s546, 16
        %s548 = scalar_lea.vmem [#allocation19], %s547
        %v549 = vld [vmem:[%s456] sm:$0xff]
        %v550 = vld [vmem:[%s456 + $0x8] sm:$0xff]
        %v551 = vld [vmem:[%s465] sm:$0xff]
        %v552 = vld [vmem:[%s465 + $0x8] sm:$0xff]
        %v553 = vld [vmem:[%s474] sm:$0xff]
        %v554 = vld [vmem:[%s474 + $0x8] sm:$0xff]
        %v555 = vld [vmem:[#allocation8] sm:$0xff]
        %v556 = vld [vmem:[#allocation8 + $0x8] sm:$0xff]
        %v557 = vld [vmem:[#allocation8 + $0x10] sm:$0xff]
        %v558 = vld [vmem:[#allocation8 + $0x18] sm:$0xff]
        %vm559 = vcmask 261120
        %v561 = vsel %vm559, %v549, 0
        %v564 = vsel %vm559, %v550, 0
        %566 = vmatprep.subr.mxu0 0.0
        %567 = vmatpush1.msra.mxu0 %v555
        %568 = vmatprep.subr.mxu0 0.0
        %569 = vmatpush1.msra.mxu0 %v556
        %570 = vmatprep.subr.mxu0 0.0
        %571 = vmatpush1.msra.mxu0 %v557
        %572 = vmatprep.subr.mxu0 0.0
        %573 = vmatpush1.msra.mxu0 %v558
        %574 = vmatprep.subr.mxu0 0.0
        %575 = vmatpush1.msra.mxu0 0.0
        %576 = vmatprep.subr.mxu0 0.0
        %577 = vmatpush1.msra.mxu0 0.0
        %578 = vmatprep.subr.mxu0 0.0
        %579 = vmatpush1.msra.mxu0 0.0
        %580 = vmatprep.subr.mxu0 0.0
        %581 = vmatpush1.msra.mxu0 0.0
        %582 = vmatprep.subr.mxu0 0.0
        %583 = vmatpush1.msra.mxu0 0.0
        %584 = vmatprep.subr.mxu0 0.0
        %585 = vmatpush1.msra.mxu0 0.0
        %586 = vmatprep.subr.mxu0 0.0
        %587 = vmatpush1.msra.mxu0 0.0
        %588 = vmatprep.subr.mxu0 0.0
        %589 = vmatpush1.msra.mxu0 0.0
        %590 = vmatprep.subr.mxu0 0.0
        %591 = vmatpush1.msra.mxu0 0.0
        %592 = vmatprep.subr.mxu0 0.0
        %593 = vmatpush1.msra.mxu0 0.0
        %594 = vmatprep.subr.mxu0 0.0
        %595 = vmatpush1.msra.mxu0 0.0
        %596 = vmatprep.subr.mxu0 0.0
        %597 = vmatpush1.msra.mxu0 0.0
        %598 = vmatprep.subr.mxu0 0.0
        %599 = vmatpush1.msra.mxu0 0.0
        %600 = vmatprep.subr.mxu0 0.0
        %601 = vmatpush1.msra.mxu0 0.0
        %602 = vmatprep.subr.mxu0 0.0
        %603 = vmatpush1.msra.mxu0 0.0
        %604 = vmatprep.subr.mxu0 0.0
        %605 = vmatpush1.msra.mxu0 0.0
        %606 = vmatprep.subr.mxu0 0.0
        %607 = vmatpush1.msra.mxu0 0.0
        %608 = vmatprep.subr.mxu0 0.0
        %609 = vmatpush1.msra.mxu0 0.0
        %610 = vmatprep.subr.mxu0 0.0
        %611 = vmatpush1.msra.mxu0 0.0
        %612 = vmatprep.subr.mxu0 0.0
        %613 = vmatpush1.msra.mxu0 0.0
        %614 = vmatprep.subr.mxu0 0.0
        %615 = vmatpush1.msra.mxu0 0.0
        %616 = vmatprep.subr.mxu0 0.0
        %617 = vmatpush1.msra.mxu0 0.0
        %618 = vmatprep.subr.mxu0 0.0
        %619 = vmatpush1.msra.mxu0 0.0
        %620 = vmatprep.subr.mxu0 0.0
        %621 = vmatpush1.msra.mxu0 0.0
        %622 = vmatprep.subr.mxu0 0.0
        %623 = vmatpush1.msra.mxu0 0.0
        %624 = vmatprep.subr.mxu0 0.0
        %625 = vmatpush1.msra.mxu0 0.0
        %626 = vmatprep.subr.mxu0 0.0
        %627 = vmatpush1.msra.mxu0 0.0
        %628 = vmatprep.subr.mxu0 0.0
        %629 = vmatpush1.msra.mxu0 0.0
        %630 = vmatprep.mubr.f32.mxu0 0.0
        %631 = vmatmul.mubr.f32.gmra.mrb[0].mxu0 %v561
        %v632 = vpop.f32.mrb[0].mxu0
        %v633 = vadd.f32 0.0, %v632
        %v634 = vpop.f32.mrb[0].mxu0
        %635 = vmatprep.mubr.f32.mxu0 0.0
        %636 = vmatmul.mubr.f32.gmra.mrb[0].mxu0 %v564
        %v637 = vpop.f32.mrb[0].mxu0
        %v638 = vadd.f32 0.0, %v637
        %v639 = vpop.f32.mrb[0].mxu0
        %640 = vdwg.mxu0
        %v641 = vadd.f32 %v551, %v553
        %v642 = vadd.f32 %v552, %v554
        %v643 = vadd.f32 %v641, %v633
        %v644 = vadd.f32 %v642, %v638
        %v645 = vsel %vm559, %v643, 0.0
        %v646 = vsel %vm559, %v644, 0.0
        %v647 = vadd.f32 %v645, %v646
        %v648 = vrot.slane %v647, 4
        %v649 = vadd.f32 %v647, %v648
        %v650 = vrot.slane %v649, 2
        %v651 = vadd.f32 %v649, %v650
        %v652 = vrot.slane %v651, 1
        %v653 = vadd.f32 %v651, %v652
        %v654 = vrcp.pop 16.0
        %v655 = vmul.f32 %v653, %v654
        %v656 = vld [vmem:[#allocation10] sm:$0xff]
        %v657 = vld [vmem:[#allocation10 + $0x8] sm:$0xff]
        %v658 = vld [vmem:[#allocation10 + $0x10] sm:$0xff]
        %v659 = vld [vmem:[#allocation10 + $0x18] sm:$0xff]
        %v660 = vld [vmem:[#allocation11] sm:$0x1]
        %v662 = vsel %vm559, %v655, 0
        %664 = vmatprep.subr.mxu0 0.0
        %665 = vmatpush1.msra.mxu0 %v656
        %666 = vmatprep.subr.mxu0 0.0
        %667 = vmatpush1.msra.mxu0 %v657
        %668 = vmatprep.subr.mxu0 0.0
        %669 = vmatpush1.msra.mxu0 %v658
        %670 = vmatprep.subr.mxu0 0.0
        %671 = vmatpush1.msra.mxu0 %v659
        %672 = vmatprep.subr.mxu0 0.0
        %673 = vmatpush1.msra.mxu0 0.0
        %674 = vmatprep.subr.mxu0 0.0
        %675 = vmatpush1.msra.mxu0 0.0
        %676 = vmatprep.subr.mxu0 0.0
        %677 = vmatpush1.msra.mxu0 0.0
        %678 = vmatprep.subr.mxu0 0.0
        %679 = vmatpush1.msra.mxu0 0.0
        %680 = vmatprep.subr.mxu0 0.0
        %681 = vmatpush1.msra.mxu0 0.0
        %682 = vmatprep.subr.mxu0 0.0
        %683 = vmatpush1.msra.mxu0 0.0
        %684 = vmatprep.subr.mxu0 0.0
        %685 = vmatpush1.msra.mxu0 0.0
        %686 = vmatprep.subr.mxu0 0.0
        %687 = vmatpush1.msra.mxu0 0.0
        %688 = vmatprep.subr.mxu0 0.0
        %689 = vmatpush1.msra.mxu0 0.0
        %690 = vmatprep.subr.mxu0 0.0
        %691 = vmatpush1.msra.mxu0 0.0
        %692 = vmatprep.subr.mxu0 0.0
        %693 = vmatpush1.msra.mxu0 0.0
        %694 = vmatprep.subr.mxu0 0.0
        %695 = vmatpush1.msra.mxu0 0.0
        %696 = vmatprep.subr.mxu0 0.0
        %697 = vmatpush1.msra.mxu0 0.0
        %698 = vmatprep.subr.mxu0 0.0
        %699 = vmatpush1.msra.mxu0 0.0
        %700 = vmatprep.subr.mxu0 0.0
        %701 = vmatpush1.msra.mxu0 0.0
        %702 = vmatprep.subr.mxu0 0.0
        %703 = vmatpush1.msra.mxu0 0.0
        %704 = vmatprep.subr.mxu0 0.0
        %705 = vmatpush1.msra.mxu0 0.0
        %706 = vmatprep.subr.mxu0 0.0
        %707 = vmatpush1.msra.mxu0 0.0
        %708 = vmatprep.subr.mxu0 0.0
        %709 = vmatpush1.msra.mxu0 0.0
        %710 = vmatprep.subr.mxu0 0.0
        %711 = vmatpush1.msra.mxu0 0.0
        %712 = vmatprep.subr.mxu0 0.0
        %713 = vmatpush1.msra.mxu0 0.0
        %714 = vmatprep.subr.mxu0 0.0
        %715 = vmatpush1.msra.mxu0 0.0
        %716 = vmatprep.subr.mxu0 0.0
        %717 = vmatpush1.msra.mxu0 0.0
        %718 = vmatprep.subr.mxu0 0.0
        %719 = vmatpush1.msra.mxu0 0.0
        %720 = vmatprep.subr.mxu0 0.0
        %721 = vmatpush1.msra.mxu0 0.0
        %722 = vmatprep.subr.mxu0 0.0
        %723 = vmatpush1.msra.mxu0 0.0
        %724 = vmatprep.subr.mxu0 0.0
        %725 = vmatpush1.msra.mxu0 0.0
        %726 = vmatprep.subr.mxu0 0.0
        %727 = vmatpush1.msra.mxu0 0.0
        %728 = vmatprep.mubr.f32.mxu0 0.0
        %729 = vmatmul.mubr.f32.gmra.mrb[0].mxu0 %v662
        %v730 = vpop.f32.mrb[0].mxu0
        %v731 = vadd.f32 %v660, %v730
        %v732 = vpop.f32.mrb[0].mxu0
        %733 = vdwg.mxu0
        %v734 = vmul.f32 %v731, %v731
        %v735 = vmul.f32 %v731, %v734
        %v736 = vmul.f32 %v735, 0.044715
        %v737 = vadd.f32 %v731, %v736
        %v738 = vmul.f32 %v737, 0.7978846
        %v739 = vtanh.pop %v738
        %v740 = vadd.f32 %v739, 1.0
        %v741 = vmul.f32 %v740, 0.5
        %v742 = vmul.f32 %v731, %v741
        %v743 = vld [vmem:[#allocation13] sm:$0xff]
        %v744 = vld [vmem:[#allocation14] sm:$0x1]
        %vm745 = vcmask 64512
        %v747 = vsel %vm745, %v742, 0
        %749 = vmatprep.subr.mxu0 0.0
        %750 = vmatpush1.msra.mxu0 %v743
        %751 = vmatprep.subr.mxu0 0.0
        %752 = vmatpush1.msra.mxu0 0.0
        %753 = vmatprep.subr.mxu0 0.0
        %754 = vmatpush1.msra.mxu0 0.0
        %755 = vmatprep.subr.mxu0 0.0
        %756 = vmatpush1.msra.mxu0 0.0
        %757 = vmatprep.subr.mxu0 0.0
        %758 = vmatpush1.msra.mxu0 0.0
        %759 = vmatprep.subr.mxu0 0.0
        %760 = vmatpush1.msra.mxu0 0.0
        %761 = vmatprep.subr.mxu0 0.0
        %762 = vmatpush1.msra.mxu0 0.0
        %763 = vmatprep.subr.mxu0 0.0
        %764 = vmatpush1.msra.mxu0 0.0
        %765 = vmatprep.subr.mxu0 0.0
        %766 = vmatpush1.msra.mxu0 0.0
        %767 = vmatprep.subr.mxu0 0.0
        %768 = vmatpush1.msra.mxu0 0.0
        %769 = vmatprep.subr.mxu0 0.0
        %770 = vmatpush1.msra.mxu0 0.0
        %771 = vmatprep.subr.mxu0 0.0
        %772 = vmatpush1.msra.mxu0 0.0
        %773 = vmatprep.subr.mxu0 0.0
        %774 = vmatpush1.msra.mxu0 0.0
        %775 = vmatprep.subr.mxu0 0.0
        %776 = vmatpush1.msra.mxu0 0.0
        %777 = vmatprep.subr.mxu0 0.0
        %778 = vmatpush1.msra.mxu0 0.0
        %779 = vmatprep.subr.mxu0 0.0
        %780 = vmatpush1.msra.mxu0 0.0
        %781 = vmatprep.subr.mxu0 0.0
        %782 = vmatpush1.msra.mxu0 0.0
        %783 = vmatprep.subr.mxu0 0.0
        %784 = vmatpush1.msra.mxu0 0.0
        %785 = vmatprep.subr.mxu0 0.0
        %786 = vmatpush1.msra.mxu0 0.0
        %787 = vmatprep.subr.mxu0 0.0
        %788 = vmatpush1.msra.mxu0 0.0
        %789 = vmatprep.subr.mxu0 0.0
        %790 = vmatpush1.msra.mxu0 0.0
        %791 = vmatprep.subr.mxu0 0.0
        %792 = vmatpush1.msra.mxu0 0.0
        %793 = vmatprep.subr.mxu0 0.0
        %794 = vmatpush1.msra.mxu0 0.0
        %795 = vmatprep.subr.mxu0 0.0
        %796 = vmatpush1.msra.mxu0 0.0
        %797 = vmatprep.subr.mxu0 0.0
        %798 = vmatpush1.msra.mxu0 0.0
        %799 = vmatprep.subr.mxu0 0.0
        %800 = vmatpush1.msra.mxu0 0.0
        %801 = vmatprep.subr.mxu0 0.0
        %802 = vmatpush1.msra.mxu0 0.0
        %803 = vmatprep.subr.mxu0 0.0
        %804 = vmatpush1.msra.mxu0 0.0
        %805 = vmatprep.subr.mxu0 0.0
        %806 = vmatpush1.msra.mxu0 0.0
        %807 = vmatprep.subr.mxu0 0.0
        %808 = vmatpush1.msra.mxu0 0.0
        %809 = vmatprep.subr.mxu0 0.0
        %810 = vmatpush1.msra.mxu0 0.0
        %811 = vmatprep.subr.mxu0 0.0
        %812 = vmatpush1.msra.mxu0 0.0
        %813 = vmatprep.mubr.f32.mxu0 0.0
        %814 = vmatmul.mubr.f32.gmra.mrb[0].mxu0 %v747
        %v815 = vpop.f32.mrb[0].mxu0
        %v816 = vadd.f32 %v744, %v815
        %v817 = vpop.f32.mrb[0].mxu0
        %818 = vdwg.mxu0
        %820 = vrot.lane.b32.xlu0 %v816, 96
        %v821 = vpop.permute.xlu0 %820
        %v823 = vmax.f32 %v816, %v821
        %824 = vrot.lane.b32.xlu0 %v816, 64
        %v825 = vpop.permute.xlu0 %824
        %v827 = vmax.f32 %v823, %v825
        %v828 = vsub.f32 %v816, %v827
        %v829 = vmul.f32 %v828, 1.442695
        %v830 = vpow.pop %v829
        %832 = vrot.lane.b32.xlu0 %v827, 32
        %v833 = vpop.permute.xlu0 %832
        %v835 = vsub.f32 %v816, %v833
        %v836 = vmul.f32 %v835, 1.442695
        %v837 = vpow.pop %v836
        %838 = vrot.lane.b32.xlu0 %v827, 64
        %v839 = vpop.permute.xlu0 %838
        %v841 = vsub.f32 %v816, %v839
        %v842 = vmul.f32 %v841, 1.442695
        %v843 = vpow.pop %v842
        %845 = vrot.lane.b32.xlu0 %v837, 96
        %v846 = vpop.permute.xlu0 %845
        %v848 = vadd.f32 %v830, %v846
        %850 = vrot.lane.b32.xlu0 %v843, 64
        %v851 = vpop.permute.xlu0 %850
        %v853 = vadd.f32 %v848, %v851
        %v854 = vrcp.pop %v853
        %v855 = vmul.f32 %v830, %v854
        %v856 = vlaneseq
        %v857 = vshrl.u32 %v856, 7
        %v858 = vsub.s32 0, %v857
        %v859 = vrot.slane %v855, %v858
        %v860 = vmul.f32 %v551, %v859
        %v861 = vmul.f32 %v552, %v859
        %863 = vrot.lane.b32.xlu0 %v854, 32
        %v864 = vpop.permute.xlu0 %863
        %v866 = vmul.f32 %v837, %v864
        %v867 = vlaneseq
        %v868 = vshrl.u32 %v867, 7
        %v869 = vsub.s32 0, %v868
        %v870 = vrot.slane %v866, %v869
        %872 = vrot.lane.b32.xlu0 %v870, 96
        %v873 = vpop.permute.xlu0 %872
        %v875 = vmul.f32 %v553, %v873
        %v876 = vmul.f32 %v554, %v873
        %v877 = vadd.f32 %v860, %v875
        %v878 = vadd.f32 %v861, %v876
        %879 = vrot.lane.b32.xlu0 %v854, 64
        %v880 = vpop.permute.xlu0 %879
        %v882 = vmul.f32 %v843, %v880
        %v883 = vlaneseq
        %v884 = vshrl.u32 %v883, 7
        %v885 = vsub.s32 0, %v884
        %v886 = vrot.slane %v882, %v885
        %888 = vrot.lane.b32.xlu0 %v886, 64
        %v889 = vpop.permute.xlu0 %888
        %v891 = vmul.f32 %v633, %v889
        %v892 = vmul.f32 %v638, %v889
        %v893 = vadd.f32 %v877, %v891
        %v894 = vadd.f32 %v878, %v892
        %v895 = vld [vmem:[#allocation16] sm:$0xff]
        %v896 = vld [vmem:[#allocation16 + $0x8] sm:$0xff]
        %v897 = vld [vmem:[#allocation16 + $0x10] sm:$0xff]
        %v898 = vld [vmem:[#allocation16 + $0x18] sm:$0xff]
        %v899 = vld [vmem:[#allocation17] sm:$0x1]
        %v901 = vlaneseq
        %v902 = vshrl.u32 %v901, 7
        %v903 = vsub.s32 0, %v902
        %v904 = vrot.slane %v899, %v903
        %v907 = vsel %vm559, %v893, 0
        %v910 = vsel %vm559, %v894, 0
        %912 = vmatprep.subr.mxu0 0.0
        %913 = vmatpush1.msra.mxu0 %v895
        %914 = vmatprep.subr.mxu0 0.0
        %915 = vmatpush1.msra.mxu0 %v896
        %916 = vmatprep.subr.mxu0 0.0
        %917 = vmatpush1.msra.mxu0 %v897
        %918 = vmatprep.subr.mxu0 0.0
        %919 = vmatpush1.msra.mxu0 %v898
        %920 = vmatprep.subr.mxu0 0.0
        %921 = vmatpush1.msra.mxu0 0.0
        %922 = vmatprep.subr.mxu0 0.0
        %923 = vmatpush1.msra.mxu0 0.0
        %924 = vmatprep.subr.mxu0 0.0
        %925 = vmatpush1.msra.mxu0 0.0
        %926 = vmatprep.subr.mxu0 0.0
        %927 = vmatpush1.msra.mxu0 0.0
        %928 = vmatprep.subr.mxu0 0.0
        %929 = vmatpush1.msra.mxu0 0.0
        %930 = vmatprep.subr.mxu0 0.0
        %931 = vmatpush1.msra.mxu0 0.0
        %932 = vmatprep.subr.mxu0 0.0
        %933 = vmatpush1.msra.mxu0 0.0
        %934 = vmatprep.subr.mxu0 0.0
        %935 = vmatpush1.msra.mxu0 0.0
        %936 = vmatprep.subr.mxu0 0.0
        %937 = vmatpush1.msra.mxu0 0.0
        %938 = vmatprep.subr.mxu0 0.0
        %939 = vmatpush1.msra.mxu0 0.0
        %940 = vmatprep.subr.mxu0 0.0
        %941 = vmatpush1.msra.mxu0 0.0
        %942 = vmatprep.subr.mxu0 0.0
        %943 = vmatpush1.msra.mxu0 0.0
        %944 = vmatprep.subr.mxu0 0.0
        %945 = vmatpush1.msra.mxu0 0.0
        %946 = vmatprep.subr.mxu0 0.0
        %947 = vmatpush1.msra.mxu0 0.0
        %948 = vmatprep.subr.mxu0 0.0
        %949 = vmatpush1.msra.mxu0 0.0
        %950 = vmatprep.subr.mxu0 0.0
        %951 = vmatpush1.msra.mxu0 0.0
        %952 = vmatprep.subr.mxu0 0.0
        %953 = vmatpush1.msra.mxu0 0.0
        %954 = vmatprep.subr.mxu0 0.0
        %955 = vmatpush1.msra.mxu0 0.0
        %956 = vmatprep.subr.mxu0 0.0
        %957 = vmatpush1.msra.mxu0 0.0
        %958 = vmatprep.subr.mxu0 0.0
        %959 = vmatpush1.msra.mxu0 0.0
        %960 = vmatprep.subr.mxu0 0.0
        %961 = vmatpush1.msra.mxu0 0.0
        %962 = vmatprep.subr.mxu0 0.0
        %963 = vmatpush1.msra.mxu0 0.0
        %964 = vmatprep.subr.mxu0 0.0
        %965 = vmatpush1.msra.mxu0 0.0
        %966 = vmatprep.subr.mxu0 0.0
        %967 = vmatpush1.msra.mxu0 0.0
        %968 = vmatprep.subr.mxu0 0.0
        %969 = vmatpush1.msra.mxu0 0.0
        %970 = vmatprep.subr.mxu0 0.0
        %971 = vmatpush1.msra.mxu0 0.0
        %972 = vmatprep.subr.mxu0 0.0
        %973 = vmatpush1.msra.mxu0 0.0
        %974 = vmatprep.subr.mxu0 0.0
        %975 = vmatpush1.msra.mxu0 0.0
        %976 = vmatprep.mubr.f32.mxu0 0.0
        %977 = vmatmul.mubr.f32.gmra.mrb[0].mxu0 %v907
        %v978 = vpop.f32.mrb[0].mxu0
        %v979 = vadd.f32 %v904, %v978
        %v980 = vpop.f32.mrb[0].mxu0
        %981 = vmatprep.mubr.f32.mxu0 0.0
        %982 = vmatmul.mubr.f32.gmra.mrb[0].mxu0 %v910
        %v983 = vpop.f32.mrb[0].mxu0
        %v984 = vadd.f32 %v904, %v983
        %v985 = vpop.f32.mrb[0].mxu0
        %986 = vdwg.mxu0
        %987 = vst.msk [vmem:[%s548] sm:$0xff] %vm559, %v979
        %988 = vst.msk [vmem:[%s548 + $0x8] sm:$0xff] %vm559, %v984
        %s989 = sand.u32 %s267, 1
        %s990 = scalar_lea.sflag [#allocation4], %s989
        %s991 = sand.u32 %s267, 1
        %s992 = smul.addr %s991, 16
        %s993 = scalar_lea.vmem [#allocation19], %s992
        // Predicated region
        $region101: #{dynamixer_forward.11} parent=59 // pred_check
          %p994 = pneg %p277
        $region102: #{dynamixer_forward.11} parent=59 // pred_check_branch
          %996 = sbr.rel (%p994) target = $region104
        $region103: #{dynamixer_forward.11} parent=59 // pred_region
          %s998 = ssub.s32 256, 256
          %999 = vsyncadd %s990, %s998
          %s1000 = smul.addr %s34, 2
          %s1001 = smul.addr %s1000, 128
          %s1002 = scalar_lea.hbm %s10, %s1001
          %s1003 = sshll.u32 %s993, 4
          %s1004 = int_to_ptr.vmem [resolvable:$true] %s1003
          %1009 = dma.vmem_to_hbm [thread:$0]  %s1004, 256, %s1002, %s990, 128, 128, 8
        $region104: #{dynamixer_forward.11} parent=59 // pred_fallthru
          _
      $region60: #{dynamixer_forward.11} parent=5 // pred_fallthru
        _
      %p1010 = scmp.le.s32.totalorder 2, %s29
      // Predicated region
      $region105: #{dynamixer_forward.11} parent=5 // pred_check
        %p1011 = pneg %p1010
      $region106: #{dynamixer_forward.11} parent=5 // pred_check_branch
        %1013 = sbr.rel (%p1011) target = $region108
      $region107: #{dynamixer_forward.11} parent=5 // pred_region
        %s1014 = ssub.s32 %s29, 2
        // Predicated region
        $region109: #{dynamixer_forward.11} parent=107 // pred_check
          %p1015 = pneg %p283
        $region110: #{dynamixer_forward.11} parent=107 // pred_check_branch
          %1017 = sbr.rel (%p1015) target = $region112
        $region111: #{dynamixer_forward.11} parent=107 // pred_region
          %s1018 = sand.u32 %s268, 1
          %s1019 = scalar_lea.sflag [#allocation4], %s1018
          %s1020 = sand.u32 %s268, 1
          %s1021 = smul.addr %s1020, 16
          %s1022 = scalar_lea.vmem [#allocation19], %s1021
          %1023 = dma.done %s1019, 256
        $region112: #{dynamixer_forward.11} parent=107 // pred_fallthru
          _
      $region108: #{dynamixer_forward.11} parent=5 // pred_fallthru
        _
    $region6: #{dynamixer_forward.11} parent=1 // loop_footer
      %s33 = sadd.s32 1, %s29
    $region7: #{dynamixer_forward.11} parent=1 // loop_footer_branch
      %28 = sbr.rel target = $region3
    $region8: #{dynamixer_forward.11} parent=1 // loop_exit
      _
    %1024 = vsyncpa [#allocation3], 1
    %s1025 = scalar_lea.sflag [#allocation3], 1
    %1026 = vsyncpa %s1025, 1
    %1027 = vsyncpa [#allocation6], 1
    %s1028 = scalar_lea.sflag [#allocation6], 1
    %1029 = vsyncpa %s1028, 1
    %1030 = vsyncpa [#allocation9], 1
    %1031 = vsyncpa [#allocation12], 1
    %1032 = vsyncpa [#allocation15], 1
    %1033 = vsyncpa [#allocation18], 1
    %1034 = vsyncpa [#allocation4], 1
    %s1035 = scalar_lea.sflag [#allocation4], 1
    %1036 = vsyncpa %s1035, 1

// kernel: dynamixer_forward.9
$region0: #{dynamixer_forward.9}
  #allocation0 [shape = 'u32[]', space=smem, size = 0x4, offset = 0x4, fixed_abs, tag = 'smem constant byte address 0x4 - core index']
  #allocation1 [shape = 'u32[144,128]{1,0:T(1,128)}', space=vmem, size = 0x12000, scoped, tag = 'internal scratch']
  %s0 = inlined_call_operand.hbm [shape: f32[8,4,32], index: 0, kind: input, shape index: {}]
  %s1 = inlined_call_operand.hbm [shape: f32[16,32], index: 1, kind: input, shape index: {}]
  %s2 = inlined_call_operand.hbm [shape: f32[1,16], index: 2, kind: input, shape index: {}]
  %s3 = inlined_call_operand.hbm [shape: f32[2,16,4], index: 3, kind: input, shape index: {}]
  %s4 = inlined_call_operand.hbm [shape: f32[16,1], index: 4, kind: input, shape index: {}]
  %s5 = inlined_call_operand.hbm [shape: f32[8,32], index: 5, kind: input, shape index: {}]
  %s6 = inlined_call_operand.hbm [shape: f32[32,32], index: 6, kind: input, shape index: {}]
  %s7 = inlined_call_operand.hbm [shape: f32[1,32], index: 7, kind: input, shape index: {}]
  %s8 = inlined_call_operand.hbm [shape: f32[8,4,32], index: 8, kind: output, shape index: {}]
  %s9 = sld [smem:[#allocation0]]
  $region97: #{dynamixer_forward.9} parent=0
    _
  %s11 = ssub.s32 1, %s9
  %s12 = scalar_select 0, %s11, %s9
  $region1: #{dynamixer_forward.9} parent=0
    #allocation2 [shape = 'u8[16384]{0}', space=vmem, size = 0x4000, scoped, tag = 'input window, operand 0']
    #allocation3 [shape = 's32[2]{0}', space=sflag, size = 0x8, scoped, tag = 'scoped memory for dynamixer_forward.9']
    #allocation4 [shape = 's32[2]{0}', space=sflag, size = 0x8, scoped, tag = 'scoped memory for dynamixer_forward.9']
    #allocation5 [shape = 'u8[8192]{0}', space=vmem, size = 0x2000, scoped, tag = 'input window, operand 1, single buffered']
    #allocation6 [shape = 's32[1]{0}', space=sflag, size = 0x4, scoped, tag = 'scoped memory for dynamixer_forward.9']
    #allocation7 [shape = 'u8[512]{0}', space=vmem, size = 0x400, scoped, tag = 'input window, operand 2, single buffered']
    #allocation8 [shape = 'u8[16384]{0}', space=vmem, size = 0x4000, scoped, tag = 'input window, operand 3, single buffered']
    #allocation9 [shape = 's32[1]{0}', space=sflag, size = 0x4, scoped, tag = 'scoped memory for dynamixer_forward.9']
    #allocation10 [shape = 'u8[8192]{0}', space=vmem, size = 0x2000, scoped, tag = 'input window, operand 4, single buffered']
    #allocation11 [shape = 'u8[4096]{0}', space=vmem, size = 0x1000, scoped, tag = 'input window, operand 5, single buffered']
    #allocation12 [shape = 's32[1]{0}', space=sflag, size = 0x4, scoped, tag = 'scoped memory for dynamixer_forward.9']
    #allocation13 [shape = 'u8[16384]{0}', space=vmem, size = 0x4000, scoped, tag = 'input window, operand 6, single buffered']
    #allocation14 [shape = 'u8[512]{0}', space=vmem, size = 0x400, scoped, tag = 'input window, operand 7, single buffered']
    #allocation15 [shape = 's32[1]{0}', space=sflag, size = 0x4, scoped, tag = 'scoped memory for dynamixer_forward.9']
    #allocation16 [shape = 'u8[16384]{0}', space=vmem, size = 0x4000, scoped, tag = 'output window, operand 0']
    %13 = vsyncpa [#allocation3], 0
    %s14 = scalar_lea.sflag [#allocation3], 1
    %15 = vsyncpa %s14, 0
    %16 = vsyncpa [#allocation6], 0
    %17 = vsyncpa [#allocation9], 0
    %18 = vsyncpa [#allocation12], 0
    %19 = vsyncpa [#allocation15], 0
    %20 = vsyncpa [#allocation4], 0
    %s21 = scalar_lea.sflag [#allocation4], 1
    %22 = vsyncpa %s21, 0
    loop: start=0, step=1, limit=4
    $region2: #{dynamixer_forward.9} parent=1 // loop_pre_header
      _
    $region3: #{dynamixer_forward.9} parent=1 // loop_header
      %s24 = sphi 0, %s28
      %p25 = scmp.ge.s32.totalorder %s24, 4
      %s34 = sphi 0, %s36
      %s37 = sphi 0, %s34
      %s38 = sphi 0, %s37
      %s54 = sphi 0, %s38
      %s58 = sphi 0, %s58
      %s60 = sphi 0, %s58
      %s61 = sphi 0, %s60
      %s75 = sphi 0, %s61
      %s79 = sphi 0, %s79
      %s81 = sphi 0, %s79
      %s82 = sphi 0, %s81
      %s96 = sphi 0, %s82
      %s100 = sphi 0, %s100
      %s102 = sphi 0, %s100
      %s103 = sphi 0, %s102
      %s117 = sphi 0, %s103
      %s121 = sphi 0, %s121
      %s123 = sphi 0, %s121
      %s124 = sphi 0, %s123
      %s138 = sphi 0, %s124
      %s142 = sphi 0, %s142
      %s144 = sphi 0, %s142
      %s145 = sphi 0, %s144
      %s159 = sphi 0, %s145
      %s163 = sphi 0, %s163
      %s165 = sphi 0, %s163
      %s166 = sphi 0, %s165
      %s180 = sphi 0, %s166
      %s184 = sphi 0, %s184
      %s186 = sphi 0, %s184
      %s187 = sphi 0, %s186
      %s201 = sphi 0, %s187
      %s207 = sphi 0, %s209
      %s210 = sphi 0, %s207
      %s211 = sphi 0, %s210
      %s227 = sphi 0, %s211
    $region4: #{dynamixer_forward.9} parent=1 // loop_header_branch
      %27 = sbr.rel (%p25) target = $region8
    $region5: #{dynamixer_forward.9} parent=1 // loop_body
      %s29 = ssub.s32 %s24, 1
      %s30 = ssub.s32 %s24, 2
      %s31 = sadd.s32 %s24, 1
      %s32 = ssub.s32 %s24, %s31
      %p33 = scmp.eq.s32.totalorder %s32, 0
      %s35 = sadd.s32 %s34, 1
      %s36 = scalar_select %p33, %s34, %s35
      %p39 = pneg %p33
      %p40 = scmp.eq.s32.totalorder %s24, 1
      %p41 = por %p39, %p40
      %p42 = scmp.ne.s32.totalorder %s34, %s37
      %p43 = scmp.eq.s32.totalorder %s24, 0
      %p44 = por %p42, %p43
      %p45 = scmp.ne.s32.totalorder %s34, %s37
      %p46 = scmp.eq.s32.totalorder %s29, 1
      %p47 = por %p45, %p46
      %p48 = scmp.ne.s32.totalorder %s37, %s38
      %p49 = scmp.eq.s32.totalorder %s29, 0
      %p50 = por %p48, %p49
      %p51 = scmp.ne.s32.totalorder %s37, %s38
      %p52 = scmp.eq.s32.totalorder %s30, 1
      %p53 = por %p51, %p52
      %p55 = scmp.ne.s32.totalorder %s38, %s54
      %p56 = scmp.eq.s32.totalorder %s30, 0
      %p57 = por %p55, %p56
      %s59 = sadd.s32 %s58, 1
      %p62 = scmp.eq.s32.totalorder %s24, 1
      %p63 = scmp.ne.s32.totalorder %s58, %s60
      %p64 = scmp.eq.s32.totalorder %s24, 0
      %p65 = por %p63, %p64
      %p66 = scmp.ne.s32.totalorder %s58, %s60
      %p67 = scmp.eq.s32.totalorder %s29, 1
      %p68 = por %p66, %p67
      %p69 = scmp.ne.s32.totalorder %s60, %s61
      %p70 = scmp.eq.s32.totalorder %s29, 0
      %p71 = por %p69, %p70
      %p72 = scmp.ne.s32.totalorder %s60, %s61
      %p73 = scmp.eq.s32.totalorder %s30, 1
      %p74 = por %p72, %p73
      %p76 = scmp.ne.s32.totalorder %s61, %s75
      %p77 = scmp.eq.s32.totalorder %s30, 0
      %p78 = por %p76, %p77
      %s80 = sadd.s32 %s79, 1
      %p83 = scmp.eq.s32.totalorder %s24, 1
      %p84 = scmp.ne.s32.totalorder %s79, %s81
      %p85 = scmp.eq.s32.totalorder %s24, 0
      %p86 = por %p84, %p85
      %p87 = scmp.ne.s32.totalorder %s79, %s81
      %p88 = scmp.eq.s32.totalorder %s29, 1
      %p89 = por %p87, %p88
      %p90 = scmp.ne.s32.totalorder %s81, %s82
      %p91 = scmp.eq.s32.totalorder %s29, 0
      %p92 = por %p90, %p91
      %p93 = scmp.ne.s32.totalorder %s81, %s82
      %p94 = scmp.eq.s32.totalorder %s30, 1
      %p95 = por %p93, %p94
      %p97 = scmp.ne.s32.totalorder %s82, %s96
      %p98 = scmp.eq.s32.totalorder %s30, 0
      %p99 = por %p97, %p98
      %s101 = sadd.s32 %s100, 1
      %p104 = scmp.eq.s32.totalorder %s24, 1
      %p105 = scmp.ne.s32.totalorder %s100, %s102
      %p106 = scmp.eq.s32.totalorder %s24, 0
      %p107 = por %p105, %p106
      %p108 = scmp.ne.s32.totalorder %s100, %s102
      %p109 = scmp.eq.s32.totalorder %s29, 1
      %p110 = por %p108, %p109
      %p111 = scmp.ne.s32.totalorder %s102, %s103
      %p112 = scmp.eq.s32.totalorder %s29, 0
      %p113 = por %p111, %p112
      %p114 = scmp.ne.s32.totalorder %s102, %s103
      %p115 = scmp.eq.s32.totalorder %s30, 1
      %p116 = por %p114, %p115
      %p118 = scmp.ne.s32.totalorder %s103, %s117
      %p119 = scmp.eq.s32.totalorder %s30, 0
      %p120 = por %p118, %p119
      %s122 = sadd.s32 %s121, 1
      %p125 = scmp.eq.s32.totalorder %s24, 1
      %p126 = scmp.ne.s32.totalorder %s121, %s123
      %p127 = scmp.eq.s32.totalorder %s24, 0
      %p128 = por %p126, %p127
      %p129 = scmp.ne.s32.totalorder %s121, %s123
      %p130 = scmp.eq.s32.totalorder %s29, 1
      %p131 = por %p129, %p130
      %p132 = scmp.ne.s32.totalorder %s123, %s124
      %p133 = scmp.eq.s32.totalorder %s29, 0
      %p134 = por %p132, %p133
      %p135 = scmp.ne.s32.totalorder %s123, %s124
      %p136 = scmp.eq.s32.totalorder %s30, 1
      %p137 = por %p135, %p136
      %p139 = scmp.ne.s32.totalorder %s124, %s138
      %p140 = scmp.eq.s32.totalorder %s30, 0
      %p141 = por %p139, %p140
      %s143 = sadd.s32 %s142, 1
      %p146 = scmp.eq.s32.totalorder %s24, 1
      %p147 = scmp.ne.s32.totalorder %s142, %s144
      %p148 = scmp.eq.s32.totalorder %s24, 0
      %p149 = por %p147, %p148
      %p150 = scmp.ne.s32.totalorder %s142, %s144
      %p151 = scmp.eq.s32.totalorder %s29, 1
      %p152 = por %p150, %p151
      %p153 = scmp.ne.s32.totalorder %s144, %s145
      %p154 = scmp.eq.s32.totalorder %s29, 0
      %p155 = por %p153, %p154
      %p156 = scmp.ne.s32.totalorder %s144, %s145
      %p157 = scmp.eq.s32.totalorder %s30, 1
      %p158 = por %p156, %p157
      %p160 = scmp.ne.s32.totalorder %s145, %s159
      %p161 = scmp.eq.s32.totalorder %s30, 0
      %p162 = por %p160, %p161
      %s164 = sadd.s32 %s163, 1
      %p167 = scmp.eq.s32.totalorder %s24, 1
      %p168 = scmp.ne.s32.totalorder %s163, %s165
      %p169 = scmp.eq.s32.totalorder %s24, 0
      %p170 = por %p168, %p169
      %p171 = scmp.ne.s32.totalorder %s163, %s165
      %p172 = scmp.eq.s32.totalorder %s29, 1
      %p173 = por %p171, %p172
      %p174 = scmp.ne.s32.totalorder %s165, %s166
      %p175 = scmp.eq.s32.totalorder %s29, 0
      %p176 = por %p174, %p175
      %p177 = scmp.ne.s32.totalorder %s165, %s166
      %p178 = scmp.eq.s32.totalorder %s30, 1
      %p179 = por %p177, %p178
      %p181 = scmp.ne.s32.totalorder %s166, %s180
      %p182 = scmp.eq.s32.totalorder %s30, 0
      %p183 = por %p181, %p182
      %s185 = sadd.s32 %s184, 1
      %p188 = scmp.eq.s32.totalorder %s24, 1
      %p189 = scmp.ne.s32.totalorder %s184, %s186
      %p190 = scmp.eq.s32.totalorder %s24, 0
      %p191 = por %p189, %p190
      %p192 = scmp.ne.s32.totalorder %s184, %s186
      %p193 = scmp.eq.s32.totalorder %s29, 1
      %p194 = por %p192, %p193
      %p195 = scmp.ne.s32.totalorder %s186, %s187
      %p196 = scmp.eq.s32.totalorder %s29, 0
      %p197 = por %p195, %p196
      %p198 = scmp.ne.s32.totalorder %s186, %s187
      %p199 = scmp.eq.s32.totalorder %s30, 1
      %p200 = por %p198, %p199
      %p202 = scmp.ne.s32.totalorder %s187, %s201
      %p203 = scmp.eq.s32.totalorder %s30, 0
      %p204 = por %p202, %p203
      %s205 = ssub.s32 %s24, %s31
      %p206 = scmp.eq.s32.totalorder %s205, 0
      %s208 = sadd.s32 %s207, 1
      %s209 = scalar_select %p206, %s207, %s208
      %p212 = pneg %p206
      %p213 = scmp.eq.s32.totalorder %s24, 1
      %p214 = por %p212, %p213
      %p215 = scmp.ne.s32.totalorder %s207, %s210
      %p216 = scmp.eq.s32.totalorder %s24, 0
      %p217 = por %p215, %p216
      %p218 = scmp.ne.s32.totalorder %s207, %s210
      %p219 = scmp.eq.s32.totalorder %s29, 1
      %p220 = por %p218, %p219
      %p221 = scmp.ne.s32.totalorder %s210, %s211
      %p222 = scmp.eq.s32.totalorder %s29, 0
      %p223 = por %p221, %p222
      %p224 = scmp.ne.s32.totalorder %s210, %s211
      %p225 = scmp.eq.s32.totalorder %s30, 1
      %p226 = por %p224, %p225
      %p228 = scmp.ne.s32.totalorder %s211, %s227
      %p229 = scmp.eq.s32.totalorder %s30, 0
      %p230 = por %p228, %p229
      %p231 = scmp.le.s32.totalorder 1, %s24
      %p232 = scmp.lt.s32.totalorder %s24, 3
      %p233 = pnand %p231, %p232
      %p234 = pneg %p233
      // Predicated region
      $region9: #{dynamixer_forward.9} parent=5 // pred_check
        _
      $region10: #{dynamixer_forward.9} parent=5 // pred_check_branch
        %236 = sbr.rel (%p233) target = $region12
      $region11: #{dynamixer_forward.9} parent=5 // pred_region
        %s237 = ssub.s32 %s24, 1
        // Predicated region
        $region13: #{dynamixer_forward.9} parent=11 // pred_check
          %p238 = pneg %p71
        $region14: #{dynamixer_forward.9} parent=11 // pred_check_branch
          %240 = sbr.rel (%p238) target = $region16
        $region15: #{dynamixer_forward.9} parent=11 // pred_region
          %s242 = ssub.s32 256, 256
          %243 = vsyncadd [#allocation6], %s242
          %s244 = sshll.u32 [#allocation5], 4
          %s245 = int_to_ptr.vmem [resolvable:$true] %s244
          %250 = dma.hbm_to_vmem [thread:$0]  %s1, 256, %s245, [#allocation6], 128, 128, 8
        $region16: #{dynamixer_forward.9} parent=11 // pred_fallthru
          _
        // Predicated region
        $region17: #{dynamixer_forward.9} parent=11 // pred_check
          %p251 = pneg %p92
        $region18: #{dynamixer_forward.9} parent=11 // pred_check_branch
          %253 = sbr.rel (%p251) target = $region20
        $region19: #{dynamixer_forward.9} parent=11 // pred_region
          %s255 = ssub.s32 16, 16
          %256 = vsyncadd [#allocation6], %s255
          %s258 = sshll.u32 [#allocation7], 4
          %s259 = int_to_ptr.vmem [resolvable:$true] %s258
          %261 = dma.hbm_to_vmem [thread:$0]  %s2, 16, %s259, [#allocation6]
        $region20: #{dynamixer_forward.9} parent=11 // pred_fallthru
          _
        // Predicated region
        $region21: #{dynamixer_forward.9} parent=11 // pred_check
          %p262 = pneg %p113
        $region22: #{dynamixer_forward.9} parent=11 // pred_check_branch
          %264 = sbr.rel (%p262) target = $region24
        $region23: #{dynamixer_forward.9} parent=11 // pred_region
          %s266 = ssub.s32 512, 512
          %267 = vsyncadd [#allocation9], %s266
          %s268 = sshll.u32 [#allocation8], 4
          %s269 = int_to_ptr.vmem [resolvable:$true] %s268
          %274 = dma.hbm_to_vmem [thread:$0]  %s3, 512, %s269, [#allocation9], 128, 128, 8
        $region24: #{dynamixer_forward.9} parent=11 // pred_fallthru
          _
        // Predicated region
        $region25: #{dynamixer_forward.9} parent=11 // pred_check
          %p275 = pneg %p134
        $region26: #{dynamixer_forward.9} parent=11 // pred_check_branch
          %277 = sbr.rel (%p275) target = $region28
        $region27: #{dynamixer_forward.9} parent=11 // pred_region
          %s279 = ssub.s32 256, 256
          %280 = vsyncadd [#allocation9], %s279
          %s281 = sshll.u32 [#allocation10], 4
          %s282 = int_to_ptr.vmem [resolvable:$true] %s281
          %287 = dma.hbm_to_vmem [thread:$0]  %s4, 256, %s282, [#allocation9], 128, 128, 8
        $region28: #{dynamixer_forward.9} parent=11 // pred_fallthru
          _
        // Predicated region
        $region29: #{dynamixer_forward.9} parent=11 // pred_check
          %p288 = pneg %p155
        $region30: #{dynamixer_forward.9} parent=11 // pred_check_branch
          %290 = sbr.rel (%p288) target = $region32
        $region31: #{dynamixer_forward.9} parent=11 // pred_region
          %s292 = ssub.s32 128, 128
          %293 = vsyncadd [#allocation12], %s292
          %s295 = sshll.u32 [#allocation11], 4
          %s296 = int_to_ptr.vmem [resolvable:$true] %s295
          %298 = dma.hbm_to_vmem [thread:$0]  %s5, 128, %s296, [#allocation12]
        $region32: #{dynamixer_forward.9} parent=11 // pred_fallthru
          _
        // Predicated region
        $region33: #{dynamixer_forward.9} parent=11 // pred_check
          %p299 = pneg %p176
        $region34: #{dynamixer_forward.9} parent=11 // pred_check_branch
          %301 = sbr.rel (%p299) target = $region36
        $region35: #{dynamixer_forward.9} parent=11 // pred_region
          %s303 = ssub.s32 512, 512
          %304 = vsyncadd [#allocation12], %s303
          %s305 = sshll.u32 [#allocation13], 4
          %s306 = int_to_ptr.vmem [resolvable:$true] %s305
          %311 = dma.hbm_to_vmem [thread:$0]  %s6, 512, %s306, [#allocation12], 128, 128, 8
        $region36: #{dynamixer_forward.9} parent=11 // pred_fallthru
          _
        // Predicated region
        $region37: #{dynamixer_forward.9} parent=11 // pred_check
          %p312 = pneg %p197
        $region38: #{dynamixer_forward.9} parent=11 // pred_check_branch
          %314 = sbr.rel (%p312) target = $region40
        $region39: #{dynamixer_forward.9} parent=11 // pred_region
          %s316 = ssub.s32 16, 16
          %317 = vsyncadd [#allocation15], %s316
          %s319 = sshll.u32 [#allocation14], 4
          %s320 = int_to_ptr.vmem [resolvable:$true] %s319
          %322 = dma.hbm_to_vmem [thread:$0]  %s7, 16, %s320, [#allocation15]
        $region40: #{dynamixer_forward.9} parent=11 // pred_fallthru
          _
      $region12: #{dynamixer_forward.9} parent=5 // pred_fallthru
        _
      %p323 = scmp.lt.s32.totalorder %s24, 2
      // Predicated region
      $region41: #{dynamixer_forward.9} parent=5 // pred_check
        %p324 = pneg %p323
      $region42: #{dynamixer_forward.9} parent=5 // pred_check_branch
        %326 = sbr.rel (%p324) target = $region44
      $region43: #{dynamixer_forward.9} parent=5 // pred_region
        // Predicated region
        $region45: #{dynamixer_forward.9} parent=43 // pred_check
          %p327 = pneg %p44
        $region46: #{dynamixer_forward.9} parent=43 // pred_check_branch
          %329 = sbr.rel (%p327) target = $region48
        $region47: #{dynamixer_forward.9} parent=43 // pred_region
          %s330 = sand.u32 %s34, 1
          %s331 = scalar_lea.sflag [#allocation3], %s330
          %s332 = sand.u32 %s34, 1
          %s333 = smul.addr %s332, 16
          %s334 = scalar_lea.vmem [#allocation2], %s333
          %s335 = smul.u32 4, %s24
          %s337 = ssub.s32 256, 256
          %338 = vsyncadd %s331, %s337
          %s339 = smul.addr %s335, 64
          %s340 = scalar_lea.hbm %s0, %s339
          %s341 = sshll.u32 %s334, 4
          %s342 = int_to_ptr.vmem [resolvable:$true] %s341
          %347 = dma.hbm_to_vmem [thread:$0]  %s340, 256, %s342, %s331, 64, 64, 4
        $region48: #{dynamixer_forward.9} parent=43 // pred_fallthru
          _
      $region44: #{dynamixer_forward.9} parent=5 // pred_fallthru
        _
      %p348 = scmp.le.s32.totalorder 1, %s24
      %p349 = scmp.lt.s32.totalorder %s24, 3
      %p350 = pnand %p348, %p349
      %p351 = pneg %p350
      // Predicated region
      $region49: #{dynamixer_forward.9} parent=5 // pred_check
        _
      $region50: #{dynamixer_forward.9} parent=5 // pred_check_branch
        %353 = sbr.rel (%p350) target = $region52
      $region51: #{dynamixer_forward.9} parent=5 // pred_region
        %s354 = ssub.s32 %s24, 1
        %s355 = sand.u32 %s37, 1
        %s356 = scalar_lea.sflag [#allocation3], %s355
        %s357 = sand.u32 %s37, 1
        %s358 = smul.addr %s357, 16
        %s359 = scalar_lea.vmem [#allocation2], %s358
        // Predicated region
        $region53: #{dynamixer_forward.9} parent=51 // pred_check
          %p360 = pneg %p50
        $region54: #{dynamixer_forward.9} parent=51 // pred_check_branch
          %362 = sbr.rel (%p360) target = $region56
        $region55: #{dynamixer_forward.9} parent=51 // pred_region
          %363 = dma.done %s356, 256
        $region56: #{dynamixer_forward.9} parent=51 // pred_fallthru
          _
        // Predicated region
        $region57: #{dynamixer_forward.9} parent=51 // pred_check
          %p364 = pneg %p71
        $region58: #{dynamixer_forward.9} parent=51 // pred_check_branch
          %366 = sbr.rel (%p364) target = $region60
        $region59: #{dynamixer_forward.9} parent=51 // pred_region
          %367 = dma.done [#allocation6], 256
        $region60: #{dynamixer_forward.9} parent=51 // pred_fallthru
          _
        // Predicated region
        $region61: #{dynamixer_forward.9} parent=51 // pred_check
          %p368 = pneg %p92
        $region62: #{dynamixer_forward.9} parent=51 // pred_check_branch
          %370 = sbr.rel (%p368) target = $region64
        $region63: #{dynamixer_forward.9} parent=51 // pred_region
          %371 = dma.done [#allocation6], 16
        $region64: #{dynamixer_forward.9} parent=51 // pred_fallthru
          _
        // Predicated region
        $region65: #{dynamixer_forward.9} parent=51 // pred_check
          %p372 = pneg %p113
        $region66: #{dynamixer_forward.9} parent=51 // pred_check_branch
          %374 = sbr.rel (%p372) target = $region68
        $region67: #{dynamixer_forward.9} parent=51 // pred_region
          %375 = dma.done [#allocation9], 512
        $region68: #{dynamixer_forward.9} parent=51 // pred_fallthru
          _
        // Predicated region
        $region69: #{dynamixer_forward.9} parent=51 // pred_check
          %p376 = pneg %p134
        $region70: #{dynamixer_forward.9} parent=51 // pred_check_branch
          %378 = sbr.rel (%p376) target = $region72
        $region71: #{dynamixer_forward.9} parent=51 // pred_region
          %379 = dma.done [#allocation9], 256
        $region72: #{dynamixer_forward.9} parent=51 // pred_fallthru
          _
        // Predicated region
        $region73: #{dynamixer_forward.9} parent=51 // pred_check
          %p380 = pneg %p155
        $region74: #{dynamixer_forward.9} parent=51 // pred_check_branch
          %382 = sbr.rel (%p380) target = $region76
        $region75: #{dynamixer_forward.9} parent=51 // pred_region
          %383 = dma.done [#allocation12], 128
        $region76: #{dynamixer_forward.9} parent=51 // pred_fallthru
          _
        // Predicated region
        $region77: #{dynamixer_forward.9} parent=51 // pred_check
          %p384 = pneg %p176
        $region78: #{dynamixer_forward.9} parent=51 // pred_check_branch
          %386 = sbr.rel (%p384) target = $region80
        $region79: #{dynamixer_forward.9} parent=51 // pred_region
          %387 = dma.done [#allocation12], 512
        $region80: #{dynamixer_forward.9} parent=51 // pred_fallthru
          _
        // Predicated region
        $region81: #{dynamixer_forward.9} parent=51 // pred_check
          %p388 = pneg %p197
        $region82: #{dynamixer_forward.9} parent=51 // pred_check_branch
          %390 = sbr.rel (%p388) target = $region84
        $region83: #{dynamixer_forward.9} parent=51 // pred_region
          %391 = dma.done [#allocation15], 16
        $region84: #{dynamixer_forward.9} parent=51 // pred_fallthru
          _
        %s392 = sand.u32 %s37, 1
        %s393 = scalar_lea.sflag [#allocation3], %s392
        %s394 = sand.u32 %s37, 1
        %s395 = smul.addr %s394, 16
        %s396 = scalar_lea.vmem [#allocation2], %s395
        %p397 = pneg %p50
        %p398 = pneg %p47
        %p399 = pneg %p71
        %p400 = pneg %p68
        %p401 = pneg %p92
        %p402 = pneg %p89
        %p403 = pneg %p113
        %p404 = pneg %p110
        %p405 = pneg %p134
        %p406 = pneg %p131
        %p407 = pneg %p155
        %p408 = pneg %p152
        %p409 = pneg %p176
        %p410 = pneg %p173
        %p411 = pneg %p197
        %p412 = pneg %p194
        %p413 = pneg %p223
        %p414 = pneg %p220
        %s415 = sand.u32 %s210, 1
        %s416 = scalar_lea.sflag [#allocation4], %s415
        %s417 = sand.u32 %s210, 1
        %s418 = smul.addr %s417, 16
        %s419 = scalar_lea.vmem [#allocation16], %s418
        %s420 = smul.u32 4, %s29
        %s421 = smul.u32 4, %s29
        %v422 = vld [vmem:[%s359] sm:$0xf]
        %v423 = vld [vmem:[%s359 + $0x4] sm:$0xf]
        %v424 = vld [vmem:[%s359 + $0x8] sm:$0xf]
        %v425 = vld [vmem:[%s359 + $0xc] sm:$0xf]
        %v426 = vld [vmem:[#allocation5] sm:$0xff]
        %v427 = vld [vmem:[#allocation5 + $0x8] sm:$0xff]
        %v428 = vld [vmem:[#allocation7] sm:$0x1]
        %v430 = vlaneseq
        %v431 = vshrl.u32 %v430, 7
        %v432 = vsub.s32 0, %v431
        %v433 = vrot.slane %v428, %v432
        %vm435 = vcmask 261120
        %v437 = vsel %vm435, %v422, 0
        %v440 = vsel %vm435, %v426, 0
        %v443 = vsel %vm435, %v427, 0
        %445 = vmatprep.subr.mxu0 0.0
        %446 = vmatpush1.xpose.msra.mxu0 %v440
        %447 = vmatprep.subr.mxu0 0.0
        %448 = vmatpush1.xpose.msra.mxu0 %v443
        %449 = vmatprep.subr.mxu0 0.0
        %450 = vmatpush1.xpose.msra.mxu0 0.0
        %451 = vmatprep.subr.mxu0 0.0
        %452 = vmatpush1.xpose.msra.mxu0 0.0
        %453 = vmatprep.subr.mxu0 0.0
        %454 = vmatpush1.xpose.msra.mxu0 0.0
        %455 = vmatprep.subr.mxu0 0.0
        %456 = vmatpush1.xpose.msra.mxu0 0.0
        %457 = vmatprep.subr.mxu0 0.0
        %458 = vmatpush1.xpose.msra.mxu0 0.0
        %459 = vmatprep.subr.mxu0 0.0
        %460 = vmatpush1.xpose.msra.mxu0 0.0
        %461 = vmatprep.subr.mxu0 0.0
        %462 = vmatpush1.xpose.msra.mxu0 0.0
        %463 = vmatprep.subr.mxu0 0.0
        %464 = vmatpush1.xpose.msra.mxu0 0.0
        %465 = vmatprep.subr.mxu0 0.0
        %466 = vmatpush1.xpose.msra.mxu0 0.0
        %467 = vmatprep.subr.mxu0 0.0
        %468 = vmatpush1.xpose.msra.mxu0 0.0
        %469 = vmatprep.subr.mxu0 0.0
        %470 = vmatpush1.xpose.msra.mxu0 0.0
        %471 = vmatprep.subr.mxu0 0.0
        %472 = vmatpush1.xpose.msra.mxu0 0.0
        %473 = vmatprep.subr.mxu0 0.0
        %474 = vmatpush1.xpose.msra.mxu0 0.0
        %475 = vmatprep.subr.mxu0 0.0
        %476 = vmatpush1.xpose.msra.mxu0 0.0
        %477 = vmatprep.subr.mxu0 0.0
        %478 = vmatpush1.xpose.msra.mxu0 0.0
        %479 = vmatprep.subr.mxu0 0.0
        %480 = vmatpush1.xpose.msra.mxu0 0.0
        %481 = vmatprep.subr.mxu0 0.0
        %482 = vmatpush1.xpose.msra.mxu0 0.0
        %483 = vmatprep.subr.mxu0 0.0
        %484 = vmatpush1.xpose.msra.mxu0 0.0
        %485 = vmatprep.subr.mxu0 0.0
        %486 = vmatpush1.xpose.msra.mxu0 0.0
        %487 = vmatprep.subr.mxu0 0.0
        %488 = vmatpush1.xpose.msra.mxu0 0.0
        %489 = vmatprep.subr.mxu0 0.0
        %490 = vmatpush1.xpose.msra.mxu0 0.0
        %491 = vmatprep.subr.mxu0 0.0
        %492 = vmatpush1.xpose.msra.mxu0 0.0
        %493 = vmatprep.subr.mxu0 0.0
        %494 = vmatpush1.xpose.msra.mxu0 0.0
        %495 = vmatprep.subr.mxu0 0.0
        %496 = vmatpush1.xpose.msra.mxu0 0.0
        %497 = vmatprep.subr.mxu0 0.0
        %498 = vmatpush1.xpose.msra.mxu0 0.0
        %499 = vmatprep.subr.mxu0 0.0
        %500 = vmatpush1.xpose.msra.mxu0 0.0
        %501 = vmatprep.subr.mxu0 0.0
        %502 = vmatpush1.xpose.msra.mxu0 0.0
        %503 = vmatprep.subr.mxu0 0.0
        %504 = vmatpush1.xpose.msra.mxu0 0.0
        %505 = vmatprep.subr.mxu0 0.0
        %506 = vmatpush1.xpose.msra.mxu0 0.0
        %507 = vmatprep.subr.mxu0 0.0
        %508 = vmatpush1.xpose.msra.mxu0 0.0
        %509 = vmatprep.mubr.f32.mxu0 0.0
        %510 = vmatmul.mubr.f32.gmra.mrb[0].mxu0 %v437
        %v511 = vpop.f32.mrb[0].mxu0
        %v512 = vadd.f32 %v433, %v511
        %v513 = vpop.f32.mrb[0].mxu0
        %514 = vdwg.mxu0
        %v516 = vsel %vm435, %v423, 0
        %518 = vmatprep.subr.mxu0 0.0
        %519 = vmatpush1.xpose.msra.mxu0 %v440
        %520 = vmatprep.subr.mxu0 0.0
        %521 = vmatpush1.xpose.msra.mxu0 %v443
        %522 = vmatprep.subr.mxu0 0.0
        %523 = vmatpush1.xpose.msra.mxu0 0.0
        %524 = vmatprep.subr.mxu0 0.0
        %525 = vmatpush1.xpose.msra.mxu0 0.0
        %526 = vmatprep.subr.mxu0 0.0
        %527 = vmatpush1.xpose.msra.mxu0 0.0
        %528 = vmatprep.subr.mxu0 0.0
        %529 = vmatpush1.xpose.msra.mxu0 0.0
        %530 = vmatprep.subr.mxu0 0.0
        %531 = vmatpush1.xpose.msra.mxu0 0.0
        %532 = vmatprep.subr.mxu0 0.0
        %533 = vmatpush1.xpose.msra.mxu0 0.0
        %534 = vmatprep.subr.mxu0 0.0
        %535 = vmatpush1.xpose.msra.mxu0 0.0
        %536 = vmatprep.subr.mxu0 0.0
        %537 = vmatpush1.xpose.msra.mxu0 0.0
        %538 = vmatprep.subr.mxu0 0.0
        %539 = vmatpush1.xpose.msra.mxu0 0.0
        %540 = vmatprep.subr.mxu0 0.0
        %541 = vmatpush1.xpose.msra.mxu0 0.0
        %542 = vmatprep.subr.mxu0 0.0
        %543 = vmatpush1.xpose.msra.mxu0 0.0
        %544 = vmatprep.subr.mxu0 0.0
        %545 = vmatpush1.xpose.msra.mxu0 0.0
        %546 = vmatprep.subr.mxu0 0.0
        %547 = vmatpush1.xpose.msra.mxu0 0.0
        %548 = vmatprep.subr.mxu0 0.0
        %549 = vmatpush1.xpose.msra.mxu0 0.0
        %550 = vmatprep.subr.mxu0 0.0
        %551 = vmatpush1.xpose.msra.mxu0 0.0
        %552 = vmatprep.subr.mxu0 0.0
        %553 = vmatpush1.xpose.msra.mxu0 0.0
        %554 = vmatprep.subr.mxu0 0.0
        %555 = vmatpush1.xpose.msra.mxu0 0.0
        %556 = vmatprep.subr.mxu0 0.0
        %557 = vmatpush1.xpose.msra.mxu0 0.0
        %558 = vmatprep.subr.mxu0 0.0
        %559 = vmatpush1.xpose.msra.mxu0 0.0
        %560 = vmatprep.subr.mxu0 0.0
        %561 = vmatpush1.xpose.msra.mxu0 0.0
        %562 = vmatprep.subr.mxu0 0.0
        %563 = vmatpush1.xpose.msra.mxu0 0.0
        %564 = vmatprep.subr.mxu0 0.0
        %565 = vmatpush1.xpose.msra.mxu0 0.0
        %566 = vmatprep.subr.mxu0 0.0
        %567 = vmatpush1.xpose.msra.mxu0 0.0
        %568 = vmatprep.subr.mxu0 0.0
        %569 = vmatpush1.xpose.msra.mxu0 0.0
        %570 = vmatprep.subr.mxu0 0.0
        %571 = vmatpush1.xpose.msra.mxu0 0.0
        %572 = vmatprep.subr.mxu0 0.0
        %573 = vmatpush1.xpose.msra.mxu0 0.0
        %574 = vmatprep.subr.mxu0 0.0
        %575 = vmatpush1.xpose.msra.mxu0 0.0
        %576 = vmatprep.subr.mxu0 0.0
        %577 = vmatpush1.xpose.msra.mxu0 0.0
        %578 = vmatprep.subr.mxu0 0.0
        %579 = vmatpush1.xpose.msra.mxu0 0.0
        %580 = vmatprep.subr.mxu0 0.0
        %581 = vmatpush1.xpose.msra.mxu0 0.0
        %582 = vmatprep.mubr.f32.mxu0 0.0
        %583 = vmatmul.mubr.f32.gmra.mrb[0].mxu0 %v516
        %v584 = vpop.f32.mrb[0].mxu0
        %v585 = vadd.f32 %v433, %v584
        %v586 = vpop.f32.mrb[0].mxu0
        %587 = vdwg.mxu0
        %v589 = vsel %vm435, %v424, 0
        %591 = vmatprep.subr.mxu0 0.0
        %592 = vmatpush1.xpose.msra.mxu0 %v440
        %593 = vmatprep.subr.mxu0 0.0
        %594 = vmatpush1.xpose.msra.mxu0 %v443
        %595 = vmatprep.subr.mxu0 0.0
        %596 = vmatpush1.xpose.msra.mxu0 0.0
        %597 = vmatprep.subr.mxu0 0.0
        %598 = vmatpush1.xpose.msra.mxu0 0.0
        %599 = vmatprep.subr.mxu0 0.0
        %600 = vmatpush1.xpose.msra.mxu0 0.0
        %601 = vmatprep.subr.mxu0 0.0
        %602 = vmatpush1.xpose.msra.mxu0 0.0
        %603 = vmatprep.subr.mxu0 0.0
        %604 = vmatpush1.xpose.msra.mxu0 0.0
        %605 = vmatprep.subr.mxu0 0.0
        %606 = vmatpush1.xpose.msra.mxu0 0.0
        %607 = vmatprep.subr.mxu0 0.0
        %608 = vmatpush1.xpose.msra.mxu0 0.0
        %609 = vmatprep.subr.mxu0 0.0
        %610 = vmatpush1.xpose.msra.mxu0 0.0
        %611 = vmatprep.subr.mxu0 0.0
        %612 = vmatpush1.xpose.msra.mxu0 0.0
        %613 = vmatprep.subr.mxu0 0.0
        %614 = vmatpush1.xpose.msra.mxu0 0.0
        %615 = vmatprep.subr.mxu0 0.0
        %616 = vmatpush1.xpose.msra.mxu0 0.0
        %617 = vmatprep.subr.mxu0 0.0
        %618 = vmatpush1.xpose.msra.mxu0 0.0
        %619 = vmatprep.subr.mxu0 0.0
        %620 = vmatpush1.xpose.msra.mxu0 0.0
        %621 = vmatprep.subr.mxu0 0.0
        %622 = vmatpush1.xpose.msra.mxu0 0.0
        %623 = vmatprep.subr.mxu0 0.0
        %624 = vmatpush1.xpose.msra.mxu0 0.0
        %625 = vmatprep.subr.mxu0 0.0
        %626 = vmatpush1.xpose.msra.mxu0 0.0
        %627 = vmatprep.subr.mxu0 0.0
        %628 = vmatpush1.xpose.msra.mxu0 0.0
        %629 = vmatprep.subr.mxu0 0.0
        %630 = vmatpush1.xpose.msra.mxu0 0.0
        %631 = vmatprep.subr.mxu0 0.0
        %632 = vmatpush1.xpose.msra.mxu0 0.0
        %633 = vmatprep.subr.mxu0 0.0
        %634 = vmatpush1.xpose.msra.mxu0 0.0
        %635 = vmatprep.subr.mxu0 0.0
        %636 = vmatpush1.xpose.msra.mxu0 0.0
        %637 = vmatprep.subr.mxu0 0.0
        %638 = vmatpush1.xpose.msra.mxu0 0.0
        %639 = vmatprep.subr.mxu0 0.0
        %640 = vmatpush1.xpose.msra.mxu0 0.0
        %641 = vmatprep.subr.mxu0 0.0
        %642 = vmatpush1.xpose.msra.mxu0 0.0
        %643 = vmatprep.subr.mxu0 0.0
        %644 = vmatpush1.xpose.msra.mxu0 0.0
        %645 = vmatprep.subr.mxu0 0.0
        %646 = vmatpush1.xpose.msra.mxu0 0.0
        %647 = vmatprep.subr.mxu0 0.0
        %648 = vmatpush1.xpose.msra.mxu0 0.0
        %649 = vmatprep.subr.mxu0 0.0
        %650 = vmatpush1.xpose.msra.mxu0 0.0
        %651 = vmatprep.subr.mxu0 0.0
        %652 = vmatpush1.xpose.msra.mxu0 0.0
        %653 = vmatprep.subr.mxu0 0.0
        %654 = vmatpush1.xpose.msra.mxu0 0.0
        %655 = vmatprep.mubr.f32.mxu0 0.0
        %656 = vmatmul.mubr.f32.gmra.mrb[0].mxu0 %v589
        %v657 = vpop.f32.mrb[0].mxu0
        %v658 = vadd.f32 %v433, %v657
        %v659 = vpop.f32.mrb[0].mxu0
        %660 = vdwg.mxu0
        %v662 = vsel %vm435, %v425, 0
        %664 = vmatprep.subr.mxu0 0.0
        %665 = vmatpush1.xpose.msra.mxu0 %v440
        %666 = vmatprep.subr.mxu0 0.0
        %667 = vmatpush1.xpose.msra.mxu0 %v443
        %668 = vmatprep.subr.mxu0 0.0
        %669 = vmatpush1.xpose.msra.mxu0 0.0
        %670 = vmatprep.subr.mxu0 0.0
        %671 = vmatpush1.xpose.msra.mxu0 0.0
        %672 = vmatprep.subr.mxu0 0.0
        %673 = vmatpush1.xpose.msra.mxu0 0.0
        %674 = vmatprep.subr.mxu0 0.0
        %675 = vmatpush1.xpose.msra.mxu0 0.0
        %676 = vmatprep.subr.mxu0 0.0
        %677 = vmatpush1.xpose.msra.mxu0 0.0
        %678 = vmatprep.subr.mxu0 0.0
        %679 = vmatpush1.xpose.msra.mxu0 0.0
        %680 = vmatprep.subr.mxu0 0.0
        %681 = vmatpush1.xpose.msra.mxu0 0.0
        %682 = vmatprep.subr.mxu0 0.0
        %683 = vmatpush1.xpose.msra.mxu0 0.0
        %684 = vmatprep.subr.mxu0 0.0
        %685 = vmatpush1.xpose.msra.mxu0 0.0
        %686 = vmatprep.subr.mxu0 0.0
        %687 = vmatpush1.xpose.msra.mxu0 0.0
        %688 = vmatprep.subr.mxu0 0.0
        %689 = vmatpush1.xpose.msra.mxu0 0.0
        %690 = vmatprep.subr.mxu0 0.0
        %691 = vmatpush1.xpose.msra.mxu0 0.0
        %692 = vmatprep.subr.mxu0 0.0
        %693 = vmatpush1.xpose.msra.mxu0 0.0
        %694 = vmatprep.subr.mxu0 0.0
        %695 = vmatpush1.xpose.msra.mxu0 0.0
        %696 = vmatprep.subr.mxu0 0.0
        %697 = vmatpush1.xpose.msra.mxu0 0.0
        %698 = vmatprep.subr.mxu0 0.0
        %699 = vmatpush1.xpose.msra.mxu0 0.0
        %700 = vmatprep.subr.mxu0 0.0
        %701 = vmatpush1.xpose.msra.mxu0 0.0
        %702 = vmatprep.subr.mxu0 0.0
        %703 = vmatpush1.xpose.msra.mxu0 0.0
        %704 = vmatprep.subr.mxu0 0.0
        %705 = vmatpush1.xpose.msra.mxu0 0.0
        %706 = vmatprep.subr.mxu0 0.0
        %707 = vmatpush1.xpose.msra.mxu0 0.0
        %708 = vmatprep.subr.mxu0 0.0
        %709 = vmatpush1.xpose.msra.mxu0 0.0
        %710 = vmatprep.subr.mxu0 0.0
        %711 = vmatpush1.xpose.msra.mxu0 0.0
        %712 = vmatprep.subr.mxu0 0.0
        %713 = vmatpush1.xpose.msra.mxu0 0.0
        %714 = vmatprep.subr.mxu0 0.0
        %715 = vmatpush1.xpose.msra.mxu0 0.0
        %716 = vmatprep.subr.mxu0 0.0
        %717 = vmatpush1.xpose.msra.mxu0 0.0
        %718 = vmatprep.subr.mxu0 0.0
        %719 = vmatpush1.xpose.msra.mxu0 0.0
        %720 = vmatprep.subr.mxu0 0.0
        %721 = vmatpush1.xpose.msra.mxu0 0.0
        %722 = vmatprep.subr.mxu0 0.0
        %723 = vmatpush1.xpose.msra.mxu0 0.0
        %724 = vmatprep.subr.mxu0 0.0
        %725 = vmatpush1.xpose.msra.mxu0 0.0
        %726 = vmatprep.subr.mxu0 0.0
        %727 = vmatpush1.xpose.msra.mxu0 0.0
        %728 = vmatprep.mubr.f32.mxu0 0.0
        %729 = vmatmul.mubr.f32.gmra.mrb[0].mxu0 %v662
        %v730 = vpop.f32.mrb[0].mxu0
        %v731 = vadd.f32 %v433, %v730
        %v732 = vpop.f32.mrb[0].mxu0
        %733 = vdwg.mxu0
        %v734 = vld [vmem:[#allocation8] sm:$0xff]
        %v735 = vld [vmem:[#allocation8 + $0x8] sm:$0xff]
        %s736 = scalar_lea.vmem [#allocation8], 16
        %v737 = vld [vmem:[%s736] sm:$0xff]
        %v738 = vld [vmem:[%s736 + $0x8] sm:$0xff]
        %740 = vrot.lane.b32.xlu0 %v512, 120
        %v741 = vpop.permute.xlu0 %740
        %vm742 = vcmask 31744
        %v744 = vsel %vm742, %v737, 0
        %v747 = vsel %vm742, %v738, 0
        %vm749 = vcmask 1043456
        %v750 = vsel %vm749, %v741, 0
        %752 = vmatprep.subr.mxu0 0.0
        %753 = vmatpush1.msra.mxu0 %v750
        %754 = vmatprep.subr.mxu0 0.0
        %755 = vmatpush1.msra.mxu0 0.0
        %756 = vmatprep.subr.mxu0 0.0
        %757 = vmatpush1.msra.mxu0 0.0
        %758 = vmatprep.subr.mxu0 0.0
        %759 = vmatpush1.msra.mxu0 0.0
        %760 = vmatprep.subr.mxu0 0.0
        %761 = vmatpush1.msra.mxu0 0.0
        %762 = vmatprep.subr.mxu0 0.0
        %763 = vmatpush1.msra.mxu0 0.0
        %764 = vmatprep.subr.mxu0 0.0
        %765 = vmatpush1.msra.mxu0 0.0
        %766 = vmatprep.subr.mxu0 0.0
        %767 = vmatpush1.msra.mxu0 0.0
        %768 = vmatprep.subr.mxu0 0.0
        %769 = vmatpush1.msra.mxu0 0.0
        %770 = vmatprep.subr.mxu0 0.0
        %771 = vmatpush1.msra.mxu0 0.0
        %772 = vmatprep.subr.mxu0 0.0
        %773 = vmatpush1.msra.mxu0 0.0
        %774 = vmatprep.subr.mxu0 0.0
        %775 = vmatpush1.msra.mxu0 0.0
        %776 = vmatprep.subr.mxu0 0.0
        %777 = vmatpush1.msra.mxu0 0.0
        %778 = vmatprep.subr.mxu0 0.0
        %779 = vmatpush1.msra.mxu0 0.0
        %780 = vmatprep.subr.mxu0 0.0
        %781 = vmatpush1.msra.mxu0 0.0
        %782 = vmatprep.subr.mxu0 0.0
        %783 = vmatpush1.msra.mxu0 0.0
        %784 = vmatprep.subr.mxu0 0.0
        %785 = vmatpush1.msra.mxu0 0.0
        %786 = vmatprep.subr.mxu0 0.0
        %787 = vmatpush1.msra.mxu0 0.0
        %788 = vmatprep.subr.mxu0 0.0
        %789 = vmatpush1.msra.mxu0 0.0
        %790 = vmatprep.subr.mxu0 0.0
        %791 = vmatpush1.msra.mxu0 0.0
        %792 = vmatprep.subr.mxu0 0.0
        %793 = vmatpush1.msra.mxu0 0.0
        %794 = vmatprep.subr.mxu0 0.0
        %795 = vmatpush1.msra.mxu0 0.0
        %796 = vmatprep.subr.mxu0 0.0
        %797 = vmatpush1.msra.mxu0 0.0
        %798 = vmatprep.subr.mxu0 0.0
        %799 = vmatpush1.msra.mxu0 0.0
        %800 = vmatprep.subr.mxu0 0.0
        %801 = vmatpush1.msra.mxu0 0.0
        %802 = vmatprep.subr.mxu0 0.0
        %803 = vmatpush1.msra.mxu0 0.0
        %804 = vmatprep.subr.mxu0 0.0
        %805 = vmatpush1.msra.mxu0 0.0
        %806 = vmatprep.subr.mxu0 0.0
        %807 = vmatpush1.msra.mxu0 0.0
        %808 = vmatprep.subr.mxu0 0.0
        %809 = vmatpush1.msra.mxu0 0.0
        %810 = vmatprep.subr.mxu0 0.0
        %811 = vmatpush1.msra.mxu0 0.0
        %812 = vmatprep.subr.mxu0 0.0
        %813 = vmatpush1.msra.mxu0 0.0
        %814 = vmatprep.subr.mxu0 0.0
        %815 = vmatpush1.msra.mxu0 0.0
        %816 = vmatprep.mubr.f32.mxu0 0.0
        %817 = vmatmul.mubr.f32.gmra.mrb[0].mxu0 %v744
        %v818 = vpop.f32.mrb[0].mxu0
        %v819 = vadd.f32 0.0, %v818
        %v820 = vpop.f32.mrb[0].mxu0
        %821 = vmatprep.mubr.f32.mxu0 0.0
        %822 = vmatmul.mubr.f32.gmra.mrb[0].mxu0 %v747
        %v823 = vpop.f32.mrb[0].mxu0
        %v824 = vadd.f32 0.0, %v823
        %v825 = vpop.f32.mrb[0].mxu0
        %826 = vdwg.mxu0
        %828 = vrot.lane.b32.xlu0 %v585, 120
        %v829 = vpop.permute.xlu0 %828
        %v830 = vsel %vm749, %v829, 0
        %832 = vmatprep.subr.mxu0 0.0
        %833 = vmatpush1.msra.mxu0 %v830
        %834 = vmatprep.subr.mxu0 0.0
        %835 = vmatpush1.msra.mxu0 0.0
        %836 = vmatprep.subr.mxu0 0.0
        %837 = vmatpush1.msra.mxu0 0.0
        %838 = vmatprep.subr.mxu0 0.0
        %839 = vmatpush1.msra.mxu0 0.0
        %840 = vmatprep.subr.mxu0 0.0
        %841 = vmatpush1.msra.mxu0 0.0
        %842 = vmatprep.subr.mxu0 0.0
        %843 = vmatpush1.msra.mxu0 0.0
        %844 = vmatprep.subr.mxu0 0.0
        %845 = vmatpush1.msra.mxu0 0.0
        %846 = vmatprep.subr.mxu0 0.0
        %847 = vmatpush1.msra.mxu0 0.0
        %848 = vmatprep.subr.mxu0 0.0
        %849 = vmatpush1.msra.mxu0 0.0
        %850 = vmatprep.subr.mxu0 0.0
        %851 = vmatpush1.msra.mxu0 0.0
        %852 = vmatprep.subr.mxu0 0.0
        %853 = vmatpush1.msra.mxu0 0.0
        %854 = vmatprep.subr.mxu0 0.0
        %855 = vmatpush1.msra.mxu0 0.0
        %856 = vmatprep.subr.mxu0 0.0
        %857 = vmatpush1.msra.mxu0 0.0
        %858 = vmatprep.subr.mxu0 0.0
        %859 = vmatpush1.msra.mxu0 0.0
        %860 = vmatprep.subr.mxu0 0.0
        %861 = vmatpush1.msra.mxu0 0.0
        %862 = vmatprep.subr.mxu0 0.0
        %863 = vmatpush1.msra.mxu0 0.0
        %864 = vmatprep.subr.mxu0 0.0
        %865 = vmatpush1.msra.mxu0 0.0
        %866 = vmatprep.subr.mxu0 0.0
        %867 = vmatpush1.msra.mxu0 0.0
        %868 = vmatprep.subr.mxu0 0.0
        %869 = vmatpush1.msra.mxu0 0.0
        %870 = vmatprep.subr.mxu0 0.0
        %871 = vmatpush1.msra.mxu0 0.0
        %872 = vmatprep.subr.mxu0 0.0
        %873 = vmatpush1.msra.mxu0 0.0
        %874 = vmatprep.subr.mxu0 0.0
        %875 = vmatpush1.msra.mxu0 0.0
        %876 = vmatprep.subr.mxu0 0.0
        %877 = vmatpush1.msra.mxu0 0.0
        %878 = vmatprep.subr.mxu0 0.0
        %879 = vmatpush1.msra.mxu0 0.0
        %880 = vmatprep.subr.mxu0 0.0
        %881 = vmatpush1.msra.mxu0 0.0
        %882 = vmatprep.subr.mxu0 0.0
        %883 = vmatpush1.msra.mxu0 0.0
        %884 = vmatprep.subr.mxu0 0.0
        %885 = vmatpush1.msra.mxu0 0.0
        %886 = vmatprep.subr.mxu0 0.0
        %887 = vmatpush1.msra.mxu0 0.0
        %888 = vmatprep.subr.mxu0 0.0
        %889 = vmatpush1.msra.mxu0 0.0
        %890 = vmatprep.subr.mxu0 0.0
        %891 = vmatpush1.msra.mxu0 0.0
        %892 = vmatprep.subr.mxu0 0.0
        %893 = vmatpush1.msra.mxu0 0.0
        %894 = vmatprep.subr.mxu0 0.0
        %895 = vmatpush1.msra.mxu0 0.0
        %896 = vmatprep.mubr.f32.mxu0 0.0
        %897 = vmatmul.mubr.f32.gmra.mrb[0].mxu0 %v744
        %v898 = vpop.f32.mrb[0].mxu0
        %v899 = vadd.f32 0.0, %v898
        %v900 = vpop.f32.mrb[0].mxu0
        %901 = vmatprep.mubr.f32.mxu0 0.0
        %902 = vmatmul.mubr.f32.gmra.mrb[0].mxu0 %v747
        %v903 = vpop.f32.mrb[0].mxu0
        %v904 = vadd.f32 0.0, %v903
        %v905 = vpop.f32.mrb[0].mxu0
        %906 = vdwg.mxu0
        %908 = vrot.lane.b32.xlu0 %v658, 120
        %v909 = vpop.permute.xlu0 %908
        %v910 = vsel %vm749, %v909, 0
        %912 = vmatprep.subr.mxu0 0.0
        %913 = vmatpush1.msra.mxu0 %v910
        %914 = vmatprep.subr.mxu0 0.0
        %915 = vmatpush1.msra.mxu0 0.0
        %916 = vmatprep.subr.mxu0 0.0
        %917 = vmatpush1.msra.mxu0 0.0
        %918 = vmatprep.subr.mxu0 0.0
        %919 = vmatpush1.msra.mxu0 0.0
        %920 = vmatprep.subr.mxu0 0.0
        %921 = vmatpush1.msra.mxu0 0.0
        %922 = vmatprep.subr.mxu0 0.0
        %923 = vmatpush1.msra.mxu0 0.0
        %924 = vmatprep.subr.mxu0 0.0
        %925 = vmatpush1.msra.mxu0 0.0
        %926 = vmatprep.subr.mxu0 0.0
        %927 = vmatpush1.msra.mxu0 0.0
        %928 = vmatprep.subr.mxu0 0.0
        %929 = vmatpush1.msra.mxu0 0.0
        %930 = vmatprep.subr.mxu0 0.0
        %931 = vmatpush1.msra.mxu0 0.0
        %932 = vmatprep.subr.mxu0 0.0
        %933 = vmatpush1.msra.mxu0 0.0
        %934 = vmatprep.subr.mxu0 0.0
        %935 = vmatpush1.msra.mxu0 0.0
        %936 = vmatprep.subr.mxu0 0.0
        %937 = vmatpush1.msra.mxu0 0.0
        %938 = vmatprep.subr.mxu0 0.0
        %939 = vmatpush1.msra.mxu0 0.0
        %940 = vmatprep.subr.mxu0 0.0
        %941 = vmatpush1.msra.mxu0 0.0
        %942 = vmatprep.subr.mxu0 0.0
        %943 = vmatpush1.msra.mxu0 0.0
        %944 = vmatprep.subr.mxu0 0.0
        %945 = vmatpush1.msra.mxu0 0.0
        %946 = vmatprep.subr.mxu0 0.0
        %947 = vmatpush1.msra.mxu0 0.0
        %948 = vmatprep.subr.mxu0 0.0
        %949 = vmatpush1.msra.mxu0 0.0
        %950 = vmatprep.subr.mxu0 0.0
        %951 = vmatpush1.msra.mxu0 0.0
        %952 = vmatprep.subr.mxu0 0.0
        %953 = vmatpush1.msra.mxu0 0.0
        %954 = vmatprep.subr.mxu0 0.0
        %955 = vmatpush1.msra.mxu0 0.0
        %956 = vmatprep.subr.mxu0 0.0
        %957 = vmatpush1.msra.mxu0 0.0
        %958 = vmatprep.subr.mxu0 0.0
        %959 = vmatpush1.msra.mxu0 0.0
        %960 = vmatprep.subr.mxu0 0.0
        %961 = vmatpush1.msra.mxu0 0.0
        %962 = vmatprep.subr.mxu0 0.0
        %963 = vmatpush1.msra.mxu0 0.0
        %964 = vmatprep.subr.mxu0 0.0
        %965 = vmatpush1.msra.mxu0 0.0
        %966 = vmatprep.subr.mxu0 0.0
        %967 = vmatpush1.msra.mxu0 0.0
        %968 = vmatprep.subr.mxu0 0.0
        %969 = vmatpush1.msra.mxu0 0.0
        %970 = vmatprep.subr.mxu0 0.0
        %971 = vmatpush1.msra.mxu0 0.0
        %972 = vmatprep.subr.mxu0 0.0
        %973 = vmatpush1.msra.mxu0 0.0
        %974 = vmatprep.subr.mxu0 0.0
        %975 = vmatpush1.msra.mxu0 0.0
        %976 = vmatprep.mubr.f32.mxu0 0.0
        %977 = vmatmul.mubr.f32.gmra.mrb[0].mxu0 %v744
        %v978 = vpop.f32.mrb[0].mxu0
        %v979 = vadd.f32 0.0, %v978
        %v980 = vpop.f32.mrb[0].mxu0
        %981 = vmatprep.mubr.f32.mxu0 0.0
        %982 = vmatmul.mubr.f32.gmra.mrb[0].mxu0 %v747
        %v983 = vpop.f32.mrb[0].mxu0
        %v984 = vadd.f32 0.0, %v983
        %v985 = vpop.f32.mrb[0].mxu0
        %986 = vdwg.mxu0
        %988 = vrot.lane.b32.xlu0 %v731, 120
        %v989 = vpop.permute.xlu0 %988
        %v990 = vsel %vm749, %v989, 0
        %992 = vmatprep.subr.mxu0 0.0
        %993 = vmatpush1.msra.mxu0 %v990
        %994 = vmatprep.subr.mxu0 0.0
        %995 = vmatpush1.msra.mxu0 0.0
        %996 = vmatprep.subr.mxu0 0.0
        %997 = vmatpush1.msra.mxu0 0.0
        %998 = vmatprep.subr.mxu0 0.0
        %999 = vmatpush1.msra.mxu0 0.0
        %1000 = vmatprep.subr.mxu0 0.0
        %1001 = vmatpush1.msra.mxu0 0.0
        %1002 = vmatprep.subr.mxu0 0.0
        %1003 = vmatpush1.msra.mxu0 0.0
        %1004 = vmatprep.subr.mxu0 0.0
        %1005 = vmatpush1.msra.mxu0 0.0
        %1006 = vmatprep.subr.mxu0 0.0
        %1007 = vmatpush1.msra.mxu0 0.0
        %1008 = vmatprep.subr.mxu0 0.0
        %1009 = vmatpush1.msra.mxu0 0.0
        %1010 = vmatprep.subr.mxu0 0.0
        %1011 = vmatpush1.msra.mxu0 0.0
        %1012 = vmatprep.subr.mxu0 0.0
        %1013 = vmatpush1.msra.mxu0 0.0
        %1014 = vmatprep.subr.mxu0 0.0
        %1015 = vmatpush1.msra.mxu0 0.0
        %1016 = vmatprep.subr.mxu0 0.0
        %1017 = vmatpush1.msra.mxu0 0.0
        %1018 = vmatprep.subr.mxu0 0.0
        %1019 = vmatpush1.msra.mxu0 0.0
        %1020 = vmatprep.subr.mxu0 0.0
        %1021 = vmatpush1.msra.mxu0 0.0
        %1022 = vmatprep.subr.mxu0 0.0
        %1023 = vmatpush1.msra.mxu0 0.0
        %1024 = vmatprep.subr.mxu0 0.0
        %1025 = vmatpush1.msra.mxu0 0.0
        %1026 = vmatprep.subr.mxu0 0.0
        %1027 = vmatpush1.msra.mxu0 0.0
        %1028 = vmatprep.subr.mxu0 0.0
        %1029 = vmatpush1.msra.mxu0 0.0
        %1030 = vmatprep.subr.mxu0 0.0
        %1031 = vmatpush1.msra.mxu0 0.0
        %1032 = vmatprep.subr.mxu0 0.0
        %1033 = vmatpush1.msra.mxu0 0.0
        %1034 = vmatprep.subr.mxu0 0.0
        %1035 = vmatpush1.msra.mxu0 0.0
        %1036 = vmatprep.subr.mxu0 0.0
        %1037 = vmatpush1.msra.mxu0 0.0
        %1038 = vmatprep.subr.mxu0 0.0
        %1039 = vmatpush1.msra.mxu0 0.0
        %1040 = vmatprep.subr.mxu0 0.0
        %1041 = vmatpush1.msra.mxu0 0.0
        %1042 = vmatprep.subr.mxu0 0.0
        %1043 = vmatpush1.msra.mxu0 0.0
        %1044 = vmatprep.subr.mxu0 0.0
        %1045 = vmatpush1.msra.mxu0 0.0
        %1046 = vmatprep.subr.mxu0 0.0
        %1047 = vmatpush1.msra.mxu0 0.0
        %1048 = vmatprep.subr.mxu0 0.0
        %1049 = vmatpush1.msra.mxu0 0.0
        %1050 = vmatprep.subr.mxu0 0.0
        %1051 = vmatpush1.msra.mxu0 0.0
        %1052 = vmatprep.subr.mxu0 0.0
        %1053 = vmatpush1.msra.mxu0 0.0
        %1054 = vmatprep.subr.mxu0 0.0
        %1055 = vmatpush1.msra.mxu0 0.0
        %1056 = vmatprep.mubr.f32.mxu0 0.0
        %1057 = vmatmul.mubr.f32.gmra.mrb[0].mxu0 %v744
        %v1058 = vpop.f32.mrb[0].mxu0
        %v1059 = vadd.f32 0.0, %v1058
        %v1060 = vpop.f32.mrb[0].mxu0
        %1061 = vmatprep.mubr.f32.mxu0 0.0
        %1062 = vmatmul.mubr.f32.gmra.mrb[0].mxu0 %v747
        %v1063 = vpop.f32.mrb[0].mxu0
        %v1064 = vadd.f32 0.0, %v1063
        %v1065 = vpop.f32.mrb[0].mxu0
        %1066 = vdwg.mxu0
        %v1068 = vsel %vm742, %v734, 0
        %v1071 = vsel %vm742, %v735, 0
        %v1073 = vsel %vm749, %v512, 0
        %1075 = vmatprep.subr.mxu0 0.0
        %1076 = vmatpush1.msra.mxu0 %v1073
        %1077 = vmatprep.subr.mxu0 0.0
        %1078 = vmatpush1.msra.mxu0 0.0
        %1079 = vmatprep.subr.mxu0 0.0
        %1080 = vmatpush1.msra.mxu0 0.0
        %1081 = vmatprep.subr.mxu0 0.0
        %1082 = vmatpush1.msra.mxu0 0.0
        %1083 = vmatprep.subr.mxu0 0.0
        %1084 = vmatpush1.msra.mxu0 0.0
        %1085 = vmatprep.subr.mxu0 0.0
        %1086 = vmatpush1.msra.mxu0 0.0
        %1087 = vmatprep.subr.mxu0 0.0
        %1088 = vmatpush1.msra.mxu0 0.0
        %1089 = vmatprep.subr.mxu0 0.0
        %1090 = vmatpush1.msra.mxu0 0.0
        %1091 = vmatprep.subr.mxu0 0.0
        %1092 = vmatpush1.msra.mxu0 0.0
        %1093 = vmatprep.subr.mxu0 0.0
        %1094 = vmatpush1.msra.mxu0 0.0
        %1095 = vmatprep.subr.mxu0 0.0
        %1096 = vmatpush1.msra.mxu0 0.0
        %1097 = vmatprep.subr.mxu0 0.0
        %1098 = vmatpush1.msra.mxu0 0.0
        %1099 = vmatprep.subr.mxu0 0.0
        %1100 = vmatpush1.msra.mxu0 0.0
        %1101 = vmatprep.subr.mxu0 0.0
        %1102 = vmatpush1.msra.mxu0 0.0
        %1103 = vmatprep.subr.mxu0 0.0
        %1104 = vmatpush1.msra.mxu0 0.0
        %1105 = vmatprep.subr.mxu0 0.0
        %1106 = vmatpush1.msra.mxu0 0.0
        %1107 = vmatprep.subr.mxu0 0.0
        %1108 = vmatpush1.msra.mxu0 0.0
        %1109 = vmatprep.subr.mxu0 0.0
        %1110 = vmatpush1.msra.mxu0 0.0
        %1111 = vmatprep.subr.mxu0 0.0
        %1112 = vmatpush1.msra.mxu0 0.0
        %1113 = vmatprep.subr.mxu0 0.0
        %1114 = vmatpush1.msra.mxu0 0.0
        %1115 = vmatprep.subr.mxu0 0.0
        %1116 = vmatpush1.msra.mxu0 0.0
        %1117 = vmatprep.subr.mxu0 0.0
        %1118 = vmatpush1.msra.mxu0 0.0
        %1119 = vmatprep.subr.mxu0 0.0
        %1120 = vmatpush1.msra.mxu0 0.0
        %1121 = vmatprep.subr.mxu0 0.0
        %1122 = vmatpush1.msra.mxu0 0.0
        %1123 = vmatprep.subr.mxu0 0.0
        %1124 = vmatpush1.msra.mxu0 0.0
        %1125 = vmatprep.subr.mxu0 0.0
        %1126 = vmatpush1.msra.mxu0 0.0
        %1127 = vmatprep.subr.mxu0 0.0
        %1128 = vmatpush1.msra.mxu0 0.0
        %1129 = vmatprep.subr.mxu0 0.0
        %1130 = vmatpush1.msra.mxu0 0.0
        %1131 = vmatprep.subr.mxu0 0.0
        %1132 = vmatpush1.msra.mxu0 0.0
        %1133 = vmatprep.subr.mxu0 0.0
        %1134 = vmatpush1.msra.mxu0 0.0
        %1135 = vmatprep.subr.mxu0 0.0
        %1136 = vmatpush1.msra.mxu0 0.0
        %1137 = vmatprep.subr.mxu0 0.0
        %1138 = vmatpush1.msra.mxu0 0.0
        %1139 = vmatprep.mubr.f32.mxu0 0.0
        %1140 = vmatmul.mubr.f32.gmra.mrb[0].mxu0 %v1068
        %v1141 = vpop.f32.mrb[0].mxu0
        %v1142 = vadd.f32 %v819, %v1141
        %v1143 = vpop.f32.mrb[0].mxu0
        %1144 = vmatprep.mubr.f32.mxu0 0.0
        %1145 = vmatmul.mubr.f32.gmra.mrb[0].mxu0 %v1071
        %v1146 = vpop.f32.mrb[0].mxu0
        %v1147 = vadd.f32 %v824, %v1146
        %v1148 = vpop.f32.mrb[0].mxu0
        %1149 = vdwg.mxu0
        %v1150 = vsel %vm749, %v585, 0
        %1152 = vmatprep.subr.mxu0 0.0
        %1153 = vmatpush1.msra.mxu0 %v1150
        %1154 = vmatprep.subr.mxu0 0.0
        %1155 = vmatpush1.msra.mxu0 0.0
        %1156 = vmatprep.subr.mxu0 0.0
        %1157 = vmatpush1.msra.mxu0 0.0
        %1158 = vmatprep.subr.mxu0 0.0
        %1159 = vmatpush1.msra.mxu0 0.0
        %1160 = vmatprep.subr.mxu0 0.0
        %1161 = vmatpush1.msra.mxu0 0.0
        %1162 = vmatprep.subr.mxu0 0.0
        %1163 = vmatpush1.msra.mxu0 0.0
        %1164 = vmatprep.subr.mxu0 0.0
        %1165 = vmatpush1.msra.mxu0 0.0
        %1166 = vmatprep.subr.mxu0 0.0
        %1167 = vmatpush1.msra.mxu0 0.0
        %1168 = vmatprep.subr.mxu0 0.0
        %1169 = vmatpush1.msra.mxu0 0.0
        %1170 = vmatprep.subr.mxu0 0.0
        %1171 = vmatpush1.msra.mxu0 0.0
        %1172 = vmatprep.subr.mxu0 0.0
        %1173 = vmatpush1.msra.mxu0 0.0
        %1174 = vmatprep.subr.mxu0 0.0
        %1175 = vmatpush1.msra.mxu0 0.0
        %1176 = vmatprep.subr.mxu0 0.0
        %1177 = vmatpush1.msra.mxu0 0.0
        %1178 = vmatprep.subr.mxu0 0.0
        %1179 = vmatpush1.msra.mxu0 0.0
        %1180 = vmatprep.subr.mxu0 0.0
        %1181 = vmatpush1.msra.mxu0 0.0
        %1182 = vmatprep.subr.mxu0 0.0
        %1183 = vmatpush1.msra.mxu0 0.0
        %1184 = vmatprep.subr.mxu0 0.0
        %1185 = vmatpush1.msra.mxu0 0.0
        %1186 = vmatprep.subr.mxu0 0.0
        %1187 = vmatpush1.msra.mxu0 0.0
        %1188 = vmatprep.subr.mxu0 0.0
        %1189 = vmatpush1.msra.mxu0 0.0
        %1190 = vmatprep.subr.mxu0 0.0
        %1191 = vmatpush1.msra.mxu0 0.0
        %1192 = vmatprep.subr.mxu0 0.0
        %1193 = vmatpush1.msra.mxu0 0.0
        %1194 = vmatprep.subr.mxu0 0.0
        %1195 = vmatpush1.msra.mxu0 0.0
        %1196 = vmatprep.subr.mxu0 0.0
        %1197 = vmatpush1.msra.mxu0 0.0
        %1198 = vmatprep.subr.mxu0 0.0
        %1199 = vmatpush1.msra.mxu0 0.0
        %1200 = vmatprep.subr.mxu0 0.0
        %1201 = vmatpush1.msra.mxu0 0.0
        %1202 = vmatprep.subr.mxu0 0.0
        %1203 = vmatpush1.msra.mxu0 0.0
        %1204 = vmatprep.subr.mxu0 0.0
        %1205 = vmatpush1.msra.mxu0 0.0
        %1206 = vmatprep.subr.mxu0 0.0
        %1207 = vmatpush1.msra.mxu0 0.0
        %1208 = vmatprep.subr.mxu0 0.0
        %1209 = vmatpush1.msra.mxu0 0.0
        %1210 = vmatprep.subr.mxu0 0.0
        %1211 = vmatpush1.msra.mxu0 0.0
        %1212 = vmatprep.subr.mxu0 0.0
        %1213 = vmatpush1.msra.mxu0 0.0
        %1214 = vmatprep.subr.mxu0 0.0
        %1215 = vmatpush1.msra.mxu0 0.0
        %1216 = vmatprep.mubr.f32.mxu0 0.0
        %1217 = vmatmul.mubr.f32.gmra.mrb[0].mxu0 %v1068
        %v1218 = vpop.f32.mrb[0].mxu0
        %v1219 = vadd.f32 %v899, %v1218
        %v1220 = vpop.f32.mrb[0].mxu0
        %1221 = vmatprep.mubr.f32.mxu0 0.0
        %1222 = vmatmul.mubr.f32.gmra.mrb[0].mxu0 %v1071
        %v1223 = vpop.f32.mrb[0].mxu0
        %v1224 = vadd.f32 %v904, %v1223
        %v1225 = vpop.f32.mrb[0].mxu0
        %1226 = vdwg.mxu0
        %v1227 = vsel %vm749, %v658, 0
        %1229 = vmatprep.subr.mxu0 0.0
        %1230 = vmatpush1.msra.mxu0 %v1227
        %1231 = vmatprep.subr.mxu0 0.0
        %1232 = vmatpush1.msra.mxu0 0.0
        %1233 = vmatprep.subr.mxu0 0.0
        %1234 = vmatpush1.msra.mxu0 0.0
        %1235 = vmatprep.subr.mxu0 0.0
        %1236 = vmatpush1.msra.mxu0 0.0
        %1237 = vmatprep.subr.mxu0 0.0
        %1238 = vmatpush1.msra.mxu0 0.0
        %1239 = vmatprep.subr.mxu0 0.0
        %1240 = vmatpush1.msra.mxu0 0.0
        %1241 = vmatprep.subr.mxu0 0.0
        %1242 = vmatpush1.msra.mxu0 0.0
        %1243 = vmatprep.subr.mxu0 0.0
        %1244 = vmatpush1.msra.mxu0 0.0
        %1245 = vmatprep.subr.mxu0 0.0
        %1246 = vmatpush1.msra.mxu0 0.0
        %1247 = vmatprep.subr.mxu0 0.0
        %1248 = vmatpush1.msra.mxu0 0.0
        %1249 = vmatprep.subr.mxu0 0.0
        %1250 = vmatpush1.msra.mxu0 0.0
        %1251 = vmatprep.subr.mxu0 0.0
        %1252 = vmatpush1.msra.mxu0 0.0
        %1253 = vmatprep.subr.mxu0 0.0
        %1254 = vmatpush1.msra.mxu0 0.0
        %1255 = vmatprep.subr.mxu0 0.0
        %1256 = vmatpush1.msra.mxu0 0.0
        %1257 = vmatprep.subr.mxu0 0.0
        %1258 = vmatpush1.msra.mxu0 0.0
        %1259 = vmatprep.subr.mxu0 0.0
        %1260 = vmatpush1.msra.mxu0 0.0
        %1261 = vmatprep.subr.mxu0 0.0
        %1262 = vmatpush1.msra.mxu0 0.0
        %1263 = vmatprep.subr.mxu0 0.0
        %1264 = vmatpush1.msra.mxu0 0.0
        %1265 = vmatprep.subr.mxu0 0.0
        %1266 = vmatpush1.msra.mxu0 0.0
        %1267 = vmatprep.subr.mxu0 0.0
        %1268 = vmatpush1.msra.mxu0 0.0
        %1269 = vmatprep.subr.mxu0 0.0
        %1270 = vmatpush1.msra.mxu0 0.0
        %1271 = vmatprep.subr.mxu0 0.0
        %1272 = vmatpush1.msra.mxu0 0.0
        %1273 = vmatprep.subr.mxu0 0.0
        %1274 = vmatpush1.msra.mxu0 0.0
        %1275 = vmatprep.subr.mxu0 0.0
        %1276 = vmatpush1.msra.mxu0 0.0
        %1277 = vmatprep.subr.mxu0 0.0
        %1278 = vmatpush1.msra.mxu0 0.0
        %1279 = vmatprep.subr.mxu0 0.0
        %1280 = vmatpush1.msra.mxu0 0.0
        %1281 = vmatprep.subr.mxu0 0.0
        %1282 = vmatpush1.msra.mxu0 0.0
        %1283 = vmatprep.subr.mxu0 0.0
        %1284 = vmatpush1.msra.mxu0 0.0
        %1285 = vmatprep.subr.mxu0 0.0
        %1286 = vmatpush1.msra.mxu0 0.0
        %1287 = vmatprep.subr.mxu0 0.0
        %1288 = vmatpush1.msra.mxu0 0.0
        %1289 = vmatprep.subr.mxu0 0.0
        %1290 = vmatpush1.msra.mxu0 0.0
        %1291 = vmatprep.subr.mxu0 0.0
        %1292 = vmatpush1.msra.mxu0 0.0
        %1293 = vmatprep.mubr.f32.mxu0 0.0
        %1294 = vmatmul.mubr.f32.gmra.mrb[0].mxu0 %v1068
        %v1295 = vpop.f32.mrb[0].mxu0
        %v1296 = vadd.f32 %v979, %v1295
        %v1297 = vpop.f32.mrb[0].mxu0
        %1298 = vmatprep.mubr.f32.mxu0 0.0
        %1299 = vmatmul.mubr.f32.gmra.mrb[0].mxu0 %v1071
        %v1300 = vpop.f32.mrb[0].mxu0
        %v1301 = vadd.f32 %v984, %v1300
        %v1302 = vpop.f32.mrb[0].mxu0
        %1303 = vdwg.mxu0
        %v1304 = vsel %vm749, %v731, 0
        %1306 = vmatprep.subr.mxu0 0.0
        %1307 = vmatpush1.msra.mxu0 %v1304
        %1308 = vmatprep.subr.mxu0 0.0
        %1309 = vmatpush1.msra.mxu0 0.0
        %1310 = vmatprep.subr.mxu0 0.0
        %1311 = vmatpush1.msra.mxu0 0.0
        %1312 = vmatprep.subr.mxu0 0.0
        %1313 = vmatpush1.msra.mxu0 0.0
        %1314 = vmatprep.subr.mxu0 0.0
        %1315 = vmatpush1.msra.mxu0 0.0
        %1316 = vmatprep.subr.mxu0 0.0
        %1317 = vmatpush1.msra.mxu0 0.0
        %1318 = vmatprep.subr.mxu0 0.0
        %1319 = vmatpush1.msra.mxu0 0.0
        %1320 = vmatprep.subr.mxu0 0.0
        %1321 = vmatpush1.msra.mxu0 0.0
        %1322 = vmatprep.subr.mxu0 0.0
        %1323 = vmatpush1.msra.mxu0 0.0
        %1324 = vmatprep.subr.mxu0 0.0
        %1325 = vmatpush1.msra.mxu0 0.0
        %1326 = vmatprep.subr.mxu0 0.0
        %1327 = vmatpush1.msra.mxu0 0.0
        %1328 = vmatprep.subr.mxu0 0.0
        %1329 = vmatpush1.msra.mxu0 0.0
        %1330 = vmatprep.subr.mxu0 0.0
        %1331 = vmatpush1.msra.mxu0 0.0
        %1332 = vmatprep.subr.mxu0 0.0
        %1333 = vmatpush1.msra.mxu0 0.0
        %1334 = vmatprep.subr.mxu0 0.0
        %1335 = vmatpush1.msra.mxu0 0.0
        %1336 = vmatprep.subr.mxu0 0.0
        %1337 = vmatpush1.msra.mxu0 0.0
        %1338 = vmatprep.subr.mxu0 0.0
        %1339 = vmatpush1.msra.mxu0 0.0
        %1340 = vmatprep.subr.mxu0 0.0
        %1341 = vmatpush1.msra.mxu0 0.0
        %1342 = vmatprep.subr.mxu0 0.0
        %1343 = vmatpush1.msra.mxu0 0.0
        %1344 = vmatprep.subr.mxu0 0.0
        %1345 = vmatpush1.msra.mxu0 0.0
        %1346 = vmatprep.subr.mxu0 0.0
        %1347 = vmatpush1.msra.mxu0 0.0
        %1348 = vmatprep.subr.mxu0 0.0
        %1349 = vmatpush1.msra.mxu0 0.0
        %1350 = vmatprep.subr.mxu0 0.0
        %1351 = vmatpush1.msra.mxu0 0.0
        %1352 = vmatprep.subr.mxu0 0.0
        %1353 = vmatpush1.msra.mxu0 0.0
        %1354 = vmatprep.subr.mxu0 0.0
        %1355 = vmatpush1.msra.mxu0 0.0
        %1356 = vmatprep.subr.mxu0 0.0
        %1357 = vmatpush1.msra.mxu0 0.0
        %1358 = vmatprep.subr.mxu0 0.0
        %1359 = vmatpush1.msra.mxu0 0.0
        %1360 = vmatprep.subr.mxu0 0.0
        %1361 = vmatpush1.msra.mxu0 0.0
        %1362 = vmatprep.subr.mxu0 0.0
        %1363 = vmatpush1.msra.mxu0 0.0
        %1364 = vmatprep.subr.mxu0 0.0
        %1365 = vmatpush1.msra.mxu0 0.0
        %1366 = vmatprep.subr.mxu0 0.0
        %1367 = vmatpush1.msra.mxu0 0.0
        %1368 = vmatprep.subr.mxu0 0.0
        %1369 = vmatpush1.msra.mxu0 0.0
        %1370 = vmatprep.mubr.f32.mxu0 0.0
        %1371 = vmatmul.mubr.f32.gmra.mrb[0].mxu0 %v1068
        %v1372 = vpop.f32.mrb[0].mxu0
        %v1373 = vadd.f32 %v1059, %v1372
        %v1374 = vpop.f32.mrb[0].mxu0
        %1375 = vmatprep.mubr.f32.mxu0 0.0
        %1376 = vmatmul.mubr.f32.gmra.mrb[0].mxu0 %v1071
        %v1377 = vpop.f32.mrb[0].mxu0
        %v1378 = vadd.f32 %v1064, %v1377
        %v1379 = vpop.f32.mrb[0].mxu0
        %1380 = vdwg.mxu0
        %v1381 = vld [vmem:[#allocation10] sm:$0xff]
        %v1382 = vld [vmem:[#allocation10 + $0x8] sm:$0xff]
        %1384 = vset.pattern.permute.xlu0 0
        %1385 = vperm.xlu0 %1384, %v1381
        %v1386 = vpop.permute.xlu0 %1385
        %1389 = vset.pattern.permute.xlu0 0
        %1390 = vperm.xlu0 %1389, %v1382
        %v1391 = vpop.permute.xlu0 %1390
        %v1393 = vadd.f32 %v1142, %v1386
        %v1394 = vadd.f32 %v1147, %v1391
        %v1395 = vadd.f32 %v1219, %v1386
        %v1396 = vadd.f32 %v1224, %v1391
        %v1397 = vadd.f32 %v1296, %v1386
        %v1398 = vadd.f32 %v1301, %v1391
        %v1399 = vadd.f32 %v1373, %v1386
        %v1400 = vadd.f32 %v1378, %v1391
        %v1405 = vrot.slane %v1393, 4
        %v1406 = vrot.slane %v1395, 4
        %v1407 = vrot.slane %v1397, 4
        %v1408 = vrot.slane %v1399, 4
        %v1413 = vmax.f32 %v1393, %v1405
        %v1414 = vmax.f32 %v1395, %v1406
        %v1415 = vmax.f32 %v1397, %v1407
        %v1416 = vmax.f32 %v1399, %v1408
        %v1417 = vmax.f32 %v1413, %v1394
        %v1418 = vmax.f32 %v1414, %v1396
        %v1419 = vmax.f32 %v1415, %v1398
        %v1420 = vmax.f32 %v1416, %v1400
        %v1425 = vrot.slane %v1394, 4
        %v1426 = vrot.slane %v1396, 4
        %v1427 = vrot.slane %v1398, 4
        %v1428 = vrot.slane %v1400, 4
        %v1433 = vmax.f32 %v1417, %v1425
        %v1434 = vmax.f32 %v1418, %v1426
        %v1435 = vmax.f32 %v1419, %v1427
        %v1436 = vmax.f32 %v1420, %v1428
        %v1437 = vld [vmem:[#allocation11] sm:$0xff]
        %v1438 = vsub.f32 %v1393, %v1433
        %v1439 = vsub.f32 %v1395, %v1434
        %v1440 = vsub.f32 %v1397, %v1435
        %v1441 = vsub.f32 %v1399, %v1436
        %v1442 = vmul.f32 %v1438, 1.442695
        %v1443 = vpow.pop %v1442
        %v1444 = vmul.f32 %v1439, 1.442695
        %v1445 = vpow.pop %v1444
        %v1446 = vmul.f32 %v1440, 1.442695
        %v1447 = vpow.pop %v1446
        %v1448 = vmul.f32 %v1441, 1.442695
        %v1449 = vpow.pop %v1448
        %vm1450 = vcmask 64512
        %v1452 = vsel %vm1450, %v1443, 0
        %1454 = vmatprep.subr.mxu0 0.0
        %1455 = vmatpush1.msra.mxu0 %v1437
        %1456 = vmatprep.subr.mxu0 0.0
        %1457 = vmatpush1.msra.mxu0 0.0
        %1458 = vmatprep.subr.mxu0 0.0
        %1459 = vmatpush1.msra.mxu0 0.0
        %1460 = vmatprep.subr.mxu0 0.0
        %1461 = vmatpush1.msra.mxu0 0.0
        %1462 = vmatprep.subr.mxu0 0.0
        %1463 = vmatpush1.msra.mxu0 0.0
        %1464 = vmatprep.subr.mxu0 0.0
        %1465 = vmatpush1.msra.mxu0 0.0
        %1466 = vmatprep.subr.mxu0 0.0
        %1467 = vmatpush1.msra.mxu0 0.0
        %1468 = vmatprep.subr.mxu0 0.0
        %1469 = vmatpush1.msra.mxu0 0.0
        %1470 = vmatprep.subr.mxu0 0.0
        %1471 = vmatpush1.msra.mxu0 0.0
        %1472 = vmatprep.subr.mxu0 0.0
        %1473 = vmatpush1.msra.mxu0 0.0
        %1474 = vmatprep.subr.mxu0 0.0
        %1475 = vmatpush1.msra.mxu0 0.0
        %1476 = vmatprep.subr.mxu0 0.0
        %1477 = vmatpush1.msra.mxu0 0.0
        %1478 = vmatprep.subr.mxu0 0.0
        %1479 = vmatpush1.msra.mxu0 0.0
        %1480 = vmatprep.subr.mxu0 0.0
        %1481 = vmatpush1.msra.mxu0 0.0
        %1482 = vmatprep.subr.mxu0 0.0
        %1483 = vmatpush1.msra.mxu0 0.0
        %1484 = vmatprep.subr.mxu0 0.0
        %1485 = vmatpush1.msra.mxu0 0.0
        %1486 = vmatprep.subr.mxu0 0.0
        %1487 = vmatpush1.msra.mxu0 0.0
        %1488 = vmatprep.subr.mxu0 0.0
        %1489 = vmatpush1.msra.mxu0 0.0
        %1490 = vmatprep.subr.mxu0 0.0
        %1491 = vmatpush1.msra.mxu0 0.0
        %1492 = vmatprep.subr.mxu0 0.0
        %1493 = vmatpush1.msra.mxu0 0.0
        %1494 = vmatprep.subr.mxu0 0.0
        %1495 = vmatpush1.msra.mxu0 0.0
        %1496 = vmatprep.subr.mxu0 0.0
        %1497 = vmatpush1.msra.mxu0 0.0
        %1498 = vmatprep.subr.mxu0 0.0
        %1499 = vmatpush1.msra.mxu0 0.0
        %1500 = vmatprep.subr.mxu0 0.0
        %1501 = vmatpush1.msra.mxu0 0.0
        %1502 = vmatprep.subr.mxu0 0.0
        %1503 = vmatpush1.msra.mxu0 0.0
        %1504 = vmatprep.subr.mxu0 0.0
        %1505 = vmatpush1.msra.mxu0 0.0
        %1506 = vmatprep.subr.mxu0 0.0
        %1507 = vmatpush1.msra.mxu0 0.0
        %1508 = vmatprep.subr.mxu0 0.0
        %1509 = vmatpush1.msra.mxu0 0.0
        %1510 = vmatprep.subr.mxu0 0.0
        %1511 = vmatpush1.msra.mxu0 0.0
        %1512 = vmatprep.subr.mxu0 0.0
        %1513 = vmatpush1.msra.mxu0 0.0
        %1514 = vmatprep.subr.mxu0 0.0
        %1515 = vmatpush1.msra.mxu0 0.0
        %1516 = vmatprep.subr.mxu0 0.0
        %1517 = vmatpush1.msra.mxu0 0.0
        %1518 = vmatprep.mubr.f32.mxu0 0.0
        %1519 = vmatmul.mubr.f32.gmra.mrb[0].mxu0 %v1452
        %v1520 = vpop.f32.mrb[0].mxu0
        %v1521 = vadd.f32 0.0, %v1520
        %v1522 = vpop.f32.mrb[0].mxu0
        %1523 = vdwg.mxu0
        %v1525 = vsel %vm1450, %v1445, 0
        %1527 = vmatprep.subr.mxu0 0.0
        %1528 = vmatpush1.msra.mxu0 %v1437
        %1529 = vmatprep.subr.mxu0 0.0
        %1530 = vmatpush1.msra.mxu0 0.0
        %1531 = vmatprep.subr.mxu0 0.0
        %1532 = vmatpush1.msra.mxu0 0.0
        %1533 = vmatprep.subr.mxu0 0.0
        %1534 = vmatpush1.msra.mxu0 0.0
        %1535 = vmatprep.subr.mxu0 0.0
        %1536 = vmatpush1.msra.mxu0 0.0
        %1537 = vmatprep.subr.mxu0 0.0
        %1538 = vmatpush1.msra.mxu0 0.0
        %1539 = vmatprep.subr.mxu0 0.0
        %1540 = vmatpush1.msra.mxu0 0.0
        %1541 = vmatprep.subr.mxu0 0.0
        %1542 = vmatpush1.msra.mxu0 0.0
        %1543 = vmatprep.subr.mxu0 0.0
        %1544 = vmatpush1.msra.mxu0 0.0
        %1545 = vmatprep.subr.mxu0 0.0
        %1546 = vmatpush1.msra.mxu0 0.0
        %1547 = vmatprep.subr.mxu0 0.0
        %1548 = vmatpush1.msra.mxu0 0.0
        %1549 = vmatprep.subr.mxu0 0.0
        %1550 = vmatpush1.msra.mxu0 0.0
        %1551 = vmatprep.subr.mxu0 0.0
        %1552 = vmatpush1.msra.mxu0 0.0
        %1553 = vmatprep.subr.mxu0 0.0
        %1554 = vmatpush1.msra.mxu0 0.0
        %1555 = vmatprep.subr.mxu0 0.0
        %1556 = vmatpush1.msra.mxu0 0.0
        %1557 = vmatprep.subr.mxu0 0.0
        %1558 = vmatpush1.msra.mxu0 0.0
        %1559 = vmatprep.subr.mxu0 0.0
        %1560 = vmatpush1.msra.mxu0 0.0
        %1561 = vmatprep.subr.mxu0 0.0
        %1562 = vmatpush1.msra.mxu0 0.0
        %1563 = vmatprep.subr.mxu0 0.0
        %1564 = vmatpush1.msra.mxu0 0.0
        %1565 = vmatprep.subr.mxu0 0.0
        %1566 = vmatpush1.msra.mxu0 0.0
        %1567 = vmatprep.subr.mxu0 0.0
        %1568 = vmatpush1.msra.mxu0 0.0
        %1569 = vmatprep.subr.mxu0 0.0
        %1570 = vmatpush1.msra.mxu0 0.0
        %1571 = vmatprep.subr.mxu0 0.0
        %1572 = vmatpush1.msra.mxu0 0.0
        %1573 = vmatprep.subr.mxu0 0.0
        %1574 = vmatpush1.msra.mxu0 0.0
        %1575 = vmatprep.subr.mxu0 0.0
        %1576 = vmatpush1.msra.mxu0 0.0
        %1577 = vmatprep.subr.mxu0 0.0
        %1578 = vmatpush1.msra.mxu0 0.0
        %1579 = vmatprep.subr.mxu0 0.0
        %1580 = vmatpush1.msra.mxu0 0.0
        %1581 = vmatprep.subr.mxu0 0.0
        %1582 = vmatpush1.msra.mxu0 0.0
        %1583 = vmatprep.subr.mxu0 0.0
        %1584 = vmatpush1.msra.mxu0 0.0
        %1585 = vmatprep.subr.mxu0 0.0
        %1586 = vmatpush1.msra.mxu0 0.0
        %1587 = vmatprep.subr.mxu0 0.0
        %1588 = vmatpush1.msra.mxu0 0.0
        %1589 = vmatprep.subr.mxu0 0.0
        %1590 = vmatpush1.msra.mxu0 0.0
        %1591 = vmatprep.mubr.f32.mxu0 0.0
        %1592 = vmatmul.mubr.f32.gmra.mrb[0].mxu0 %v1525
        %v1593 = vpop.f32.mrb[0].mxu0
        %v1594 = vadd.f32 0.0, %v1593
        %v1595 = vpop.f32.mrb[0].mxu0
        %1596 = vdwg.mxu0
        %v1598 = vsel %vm1450, %v1447, 0
        %1600 = vmatprep.subr.mxu0 0.0
        %1601 = vmatpush1.msra.mxu0 %v1437
        %1602 = vmatprep.subr.mxu0 0.0
        %1603 = vmatpush1.msra.mxu0 0.0
        %1604 = vmatprep.subr.mxu0 0.0
        %1605 = vmatpush1.msra.mxu0 0.0
        %1606 = vmatprep.subr.mxu0 0.0
        %1607 = vmatpush1.msra.mxu0 0.0
        %1608 = vmatprep.subr.mxu0 0.0
        %1609 = vmatpush1.msra.mxu0 0.0
        %1610 = vmatprep.subr.mxu0 0.0
        %1611 = vmatpush1.msra.mxu0 0.0
        %1612 = vmatprep.subr.mxu0 0.0
        %1613 = vmatpush1.msra.mxu0 0.0
        %1614 = vmatprep.subr.mxu0 0.0
        %1615 = vmatpush1.msra.mxu0 0.0
        %1616 = vmatprep.subr.mxu0 0.0
        %1617 = vmatpush1.msra.mxu0 0.0
        %1618 = vmatprep.subr.mxu0 0.0
        %1619 = vmatpush1.msra.mxu0 0.0
        %1620 = vmatprep.subr.mxu0 0.0
        %1621 = vmatpush1.msra.mxu0 0.0
        %1622 = vmatprep.subr.mxu0 0.0
        %1623 = vmatpush1.msra.mxu0 0.0
        %1624 = vmatprep.subr.mxu0 0.0
        %1625 = vmatpush1.msra.mxu0 0.0
        %1626 = vmatprep.subr.mxu0 0.0
        %1627 = vmatpush1.msra.mxu0 0.0
        %1628 = vmatprep.subr.mxu0 0.0
        %1629 = vmatpush1.msra.mxu0 0.0
        %1630 = vmatprep.subr.mxu0 0.0
        %1631 = vmatpush1.msra.mxu0 0.0
        %1632 = vmatprep.subr.mxu0 0.0
        %1633 = vmatpush1.msra.mxu0 0.0
        %1634 = vmatprep.subr.mxu0 0.0
        %1635 = vmatpush1.msra.mxu0 0.0
        %1636 = vmatprep.subr.mxu0 0.0
        %1637 = vmatpush1.msra.mxu0 0.0
        %1638 = vmatprep.subr.mxu0 0.0
        %1639 = vmatpush1.msra.mxu0 0.0
        %1640 = vmatprep.subr.mxu0 0.0
        %1641 = vmatpush1.msra.mxu0 0.0
        %1642 = vmatprep.subr.mxu0 0.0
        %1643 = vmatpush1.msra.mxu0 0.0
        %1644 = vmatprep.subr.mxu0 0.0
        %1645 = vmatpush1.msra.mxu0 0.0
        %1646 = vmatprep.subr.mxu0 0.0
        %1647 = vmatpush1.msra.mxu0 0.0
        %1648 = vmatprep.subr.mxu0 0.0
        %1649 = vmatpush1.msra.mxu0 0.0
        %1650 = vmatprep.subr.mxu0 0.0
        %1651 = vmatpush1.msra.mxu0 0.0
        %1652 = vmatprep.subr.mxu0 0.0
        %1653 = vmatpush1.msra.mxu0 0.0
        %1654 = vmatprep.subr.mxu0 0.0
        %1655 = vmatpush1.msra.mxu0 0.0
        %1656 = vmatprep.subr.mxu0 0.0
        %1657 = vmatpush1.msra.mxu0 0.0
        %1658 = vmatprep.subr.mxu0 0.0
        %1659 = vmatpush1.msra.mxu0 0.0
        %1660 = vmatprep.subr.mxu0 0.0
        %1661 = vmatpush1.msra.mxu0 0.0
        %1662 = vmatprep.subr.mxu0 0.0
        %1663 = vmatpush1.msra.mxu0 0.0
        %1664 = vmatprep.mubr.f32.mxu0 0.0
        %1665 = vmatmul.mubr.f32.gmra.mrb[0].mxu0 %v1598
        %v1666 = vpop.f32.mrb[0].mxu0
        %v1667 = vadd.f32 0.0, %v1666
        %v1668 = vpop.f32.mrb[0].mxu0
        %1669 = vdwg.mxu0
        %v1671 = vsel %vm1450, %v1449, 0
        %1673 = vmatprep.subr.mxu0 0.0
        %1674 = vmatpush1.msra.mxu0 %v1437
        %1675 = vmatprep.subr.mxu0 0.0
        %1676 = vmatpush1.msra.mxu0 0.0
        %1677 = vmatprep.subr.mxu0 0.0
        %1678 = vmatpush1.msra.mxu0 0.0
        %1679 = vmatprep.subr.mxu0 0.0
        %1680 = vmatpush1.msra.mxu0 0.0
        %1681 = vmatprep.subr.mxu0 0.0
        %1682 = vmatpush1.msra.mxu0 0.0
        %1683 = vmatprep.subr.mxu0 0.0
        %1684 = vmatpush1.msra.mxu0 0.0
        %1685 = vmatprep.subr.mxu0 0.0
        %1686 = vmatpush1.msra.mxu0 0.0
        %1687 = vmatprep.subr.mxu0 0.0
        %1688 = vmatpush1.msra.mxu0 0.0
        %1689 = vmatprep.subr.mxu0 0.0
        %1690 = vmatpush1.msra.mxu0 0.0
        %1691 = vmatprep.subr.mxu0 0.0
        %1692 = vmatpush1.msra.mxu0 0.0
        %1693 = vmatprep.subr.mxu0 0.0
        %1694 = vmatpush1.msra.mxu0 0.0
        %1695 = vmatprep.subr.mxu0 0.0
        %1696 = vmatpush1.msra.mxu0 0.0
        %1697 = vmatprep.subr.mxu0 0.0
        %1698 = vmatpush1.msra.mxu0 0.0
        %1699 = vmatprep.subr.mxu0 0.0
        %1700 = vmatpush1.msra.mxu0 0.0
        %1701 = vmatprep.subr.mxu0 0.0
        %1702 = vmatpush1.msra.mxu0 0.0
        %1703 = vmatprep.subr.mxu0 0.0
        %1704 = vmatpush1.msra.mxu0 0.0
        %1705 = vmatprep.subr.mxu0 0.0
        %1706 = vmatpush1.msra.mxu0 0.0
        %1707 = vmatprep.subr.mxu0 0.0
        %1708 = vmatpush1.msra.mxu0 0.0
        %1709 = vmatprep.subr.mxu0 0.0
        %1710 = vmatpush1.msra.mxu0 0.0
        %1711 = vmatprep.subr.mxu0 0.0
        %1712 = vmatpush1.msra.mxu0 0.0
        %1713 = vmatprep.subr.mxu0 0.0
        %1714 = vmatpush1.msra.mxu0 0.0
        %1715 = vmatprep.subr.mxu0 0.0
        %1716 = vmatpush1.msra.mxu0 0.0
        %1717 = vmatprep.subr.mxu0 0.0
        %1718 = vmatpush1.msra.mxu0 0.0
        %1719 = vmatprep.subr.mxu0 0.0
        %1720 = vmatpush1.msra.mxu0 0.0
        %1721 = vmatprep.subr.mxu0 0.0
        %1722 = vmatpush1.msra.mxu0 0.0
        %1723 = vmatprep.subr.mxu0 0.0
        %1724 = vmatpush1.msra.mxu0 0.0
        %1725 = vmatprep.subr.mxu0 0.0
        %1726 = vmatpush1.msra.mxu0 0.0
        %1727 = vmatprep.subr.mxu0 0.0
        %1728 = vmatpush1.msra.mxu0 0.0
        %1729 = vmatprep.subr.mxu0 0.0
        %1730 = vmatpush1.msra.mxu0 0.0
        %1731 = vmatprep.subr.mxu0 0.0
        %1732 = vmatpush1.msra.mxu0 0.0
        %1733 = vmatprep.subr.mxu0 0.0
        %1734 = vmatpush1.msra.mxu0 0.0
        %1735 = vmatprep.subr.mxu0 0.0
        %1736 = vmatpush1.msra.mxu0 0.0
        %1737 = vmatprep.mubr.f32.mxu0 0.0
        %1738 = vmatmul.mubr.f32.gmra.mrb[0].mxu0 %v1671
        %v1739 = vpop.f32.mrb[0].mxu0
        %v1740 = vadd.f32 0.0, %v1739
        %v1741 = vpop.f32.mrb[0].mxu0
        %1742 = vdwg.mxu0
        %v1743 = vlaneseq
        %v1744 = vshrl.u32 %v1743, 7
        %v1745 = vsub.s32 0, %v1744
        %v1746 = vrot.slane %v422, %v1745
        %v1747 = vlaneseq
        %v1748 = vshrl.u32 %v1747, 7
        %v1749 = vsub.s32 0, %v1748
        %v1750 = vrot.slane %v423, %v1749
        %v1751 = vlaneseq
        %v1752 = vshrl.u32 %v1751, 7
        %v1753 = vsub.s32 0, %v1752
        %v1754 = vrot.slane %v424, %v1753
        %v1755 = vlaneseq
        %v1756 = vshrl.u32 %v1755, 7
        %v1757 = vsub.s32 0, %v1756
        %v1758 = vrot.slane %v425, %v1757
        %v1759 = vmul.f32 %v1521, %v1746
        %v1760 = vmul.f32 %v1594, %v1750
        %v1761 = vmul.f32 %v1667, %v1754
        %v1762 = vmul.f32 %v1740, %v1758
        %v1763 = vadd.f32 %v1759, 0.0
        %v1764 = vadd.f32 %v1760, 0.0
        %v1765 = vadd.f32 %v1761, 0.0
        %v1766 = vadd.f32 %v1762, 0.0
        %v1767 = vadd.f32 %v1521, 0.0
        %v1768 = vadd.f32 %v1594, 0.0
        %v1769 = vadd.f32 %v1667, 0.0
        %v1770 = vadd.f32 %v1740, 0.0
        %v1775 = vrot.slane %v1433, 4
        %v1776 = vrot.slane %v1434, 4
        %v1777 = vrot.slane %v1435, 4
        %v1778 = vrot.slane %v1436, 4
        %v1783 = vsub.f32 %v1393, %v1775
        %v1784 = vsub.f32 %v1395, %v1776
        %v1785 = vsub.f32 %v1397, %v1777
        %v1786 = vsub.f32 %v1399, %v1778
        %v1787 = vmul.f32 %v1783, 1.442695
        %v1788 = vpow.pop %v1787
        %v1789 = vmul.f32 %v1784, 1.442695
        %v1790 = vpow.pop %v1789
        %v1791 = vmul.f32 %v1785, 1.442695
        %v1792 = vpow.pop %v1791
        %v1793 = vmul.f32 %v1786, 1.442695
        %v1794 = vpow.pop %v1793
        %v1796 = vrot.slane %v1788, 4
        %v1797 = vsel %vm1450, %v1796, 0
        %1799 = vmatprep.subr.mxu0 0.0
        %1800 = vmatpush1.msra.mxu0 %v1437
        %1801 = vmatprep.subr.mxu0 0.0
        %1802 = vmatpush1.msra.mxu0 0.0
        %1803 = vmatprep.subr.mxu0 0.0
        %1804 = vmatpush1.msra.mxu0 0.0
        %1805 = vmatprep.subr.mxu0 0.0
        %1806 = vmatpush1.msra.mxu0 0.0
        %1807 = vmatprep.subr.mxu0 0.0
        %1808 = vmatpush1.msra.mxu0 0.0
        %1809 = vmatprep.subr.mxu0 0.0
        %1810 = vmatpush1.msra.mxu0 0.0
        %1811 = vmatprep.subr.mxu0 0.0
        %1812 = vmatpush1.msra.mxu0 0.0
        %1813 = vmatprep.subr.mxu0 0.0
        %1814 = vmatpush1.msra.mxu0 0.0
        %1815 = vmatprep.subr.mxu0 0.0
        %1816 = vmatpush1.msra.mxu0 0.0
        %1817 = vmatprep.subr.mxu0 0.0
        %1818 = vmatpush1.msra.mxu0 0.0
        %1819 = vmatprep.subr.mxu0 0.0
        %1820 = vmatpush1.msra.mxu0 0.0
        %1821 = vmatprep.subr.mxu0 0.0
        %1822 = vmatpush1.msra.mxu0 0.0
        %1823 = vmatprep.subr.mxu0 0.0
        %1824 = vmatpush1.msra.mxu0 0.0
        %1825 = vmatprep.subr.mxu0 0.0
        %1826 = vmatpush1.msra.mxu0 0.0
        %1827 = vmatprep.subr.mxu0 0.0
        %1828 = vmatpush1.msra.mxu0 0.0
        %1829 = vmatprep.subr.mxu0 0.0
        %1830 = vmatpush1.msra.mxu0 0.0
        %1831 = vmatprep.subr.mxu0 0.0
        %1832 = vmatpush1.msra.mxu0 0.0
        %1833 = vmatprep.subr.mxu0 0.0
        %1834 = vmatpush1.msra.mxu0 0.0
        %1835 = vmatprep.subr.mxu0 0.0
        %1836 = vmatpush1.msra.mxu0 0.0
        %1837 = vmatprep.subr.mxu0 0.0
        %1838 = vmatpush1.msra.mxu0 0.0
        %1839 = vmatprep.subr.mxu0 0.0
        %1840 = vmatpush1.msra.mxu0 0.0
        %1841 = vmatprep.subr.mxu0 0.0
        %1842 = vmatpush1.msra.mxu0 0.0
        %1843 = vmatprep.subr.mxu0 0.0
        %1844 = vmatpush1.msra.mxu0 0.0
        %1845 = vmatprep.subr.mxu0 0.0
        %1846 = vmatpush1.msra.mxu0 0.0
        %1847 = vmatprep.subr.mxu0 0.0
        %1848 = vmatpush1.msra.mxu0 0.0
        %1849 = vmatprep.subr.mxu0 0.0
        %1850 = vmatpush1.msra.mxu0 0.0
        %1851 = vmatprep.subr.mxu0 0.0
        %1852 = vmatpush1.msra.mxu0 0.0
        %1853 = vmatprep.subr.mxu0 0.0
        %1854 = vmatpush1.msra.mxu0 0.0
        %1855 = vmatprep.subr.mxu0 0.0
        %1856 = vmatpush1.msra.mxu0 0.0
        %1857 = vmatprep.subr.mxu0 0.0
        %1858 = vmatpush1.msra.mxu0 0.0
        %1859 = vmatprep.subr.mxu0 0.0
        %1860 = vmatpush1.msra.mxu0 0.0
        %1861 = vmatprep.subr.mxu0 0.0
        %1862 = vmatpush1.msra.mxu0 0.0
        %1863 = vmatprep.mubr.f32.mxu0 0.0
        %1864 = vmatmul.mubr.f32.gmra.mrb[0].mxu0 %v1797
        %v1865 = vpop.f32.mrb[0].mxu0
        %v1866 = vadd.f32 0.0, %v1865
        %v1867 = vpop.f32.mrb[0].mxu0
        %1868 = vdwg.mxu0
        %v1870 = vrot.slane %v1790, 4
        %v1871 = vsel %vm1450, %v1870, 0
        %1873 = vmatprep.subr.mxu0 0.0
        %1874 = vmatpush1.msra.mxu0 %v1437
        %1875 = vmatprep.subr.mxu0 0.0
        %1876 = vmatpush1.msra.mxu0 0.0
        %1877 = vmatprep.subr.mxu0 0.0
        %1878 = vmatpush1.msra.mxu0 0.0
        %1879 = vmatprep.subr.mxu0 0.0
        %1880 = vmatpush1.msra.mxu0 0.0
        %1881 = vmatprep.subr.mxu0 0.0
        %1882 = vmatpush1.msra.mxu0 0.0
        %1883 = vmatprep.subr.mxu0 0.0
        %1884 = vmatpush1.msra.mxu0 0.0
        %1885 = vmatprep.subr.mxu0 0.0
        %1886 = vmatpush1.msra.mxu0 0.0
        %1887 = vmatprep.subr.mxu0 0.0
        %1888 = vmatpush1.msra.mxu0 0.0
        %1889 = vmatprep.subr.mxu0 0.0
        %1890 = vmatpush1.msra.mxu0 0.0
        %1891 = vmatprep.subr.mxu0 0.0
        %1892 = vmatpush1.msra.mxu0 0.0
        %1893 = vmatprep.subr.mxu0 0.0
        %1894 = vmatpush1.msra.mxu0 0.0
        %1895 = vmatprep.subr.mxu0 0.0
        %1896 = vmatpush1.msra.mxu0 0.0
        %1897 = vmatprep.subr.mxu0 0.0
        %1898 = vmatpush1.msra.mxu0 0.0
        %1899 = vmatprep.subr.mxu0 0.0
        %1900 = vmatpush1.msra.mxu0 0.0
        %1901 = vmatprep.subr.mxu0 0.0
        %1902 = vmatpush1.msra.mxu0 0.0
        %1903 = vmatprep.subr.mxu0 0.0
        %1904 = vmatpush1.msra.mxu0 0.0
        %1905 = vmatprep.subr.mxu0 0.0
        %1906 = vmatpush1.msra.mxu0 0.0
        %1907 = vmatprep.subr.mxu0 0.0
        %1908 = vmatpush1.msra.mxu0 0.0
        %1909 = vmatprep.subr.mxu0 0.0
        %1910 = vmatpush1.msra.mxu0 0.0
        %1911 = vmatprep.subr.mxu0 0.0
        %1912 = vmatpush1.msra.mxu0 0.0
        %1913 = vmatprep.subr.mxu0 0.0
        %1914 = vmatpush1.msra.mxu0 0.0
        %1915 = vmatprep.subr.mxu0 0.0
        %1916 = vmatpush1.msra.mxu0 0.0
        %1917 = vmatprep.subr.mxu0 0.0
        %1918 = vmatpush1.msra.mxu0 0.0
        %1919 = vmatprep.subr.mxu0 0.0
        %1920 = vmatpush1.msra.mxu0 0.0
        %1921 = vmatprep.subr.mxu0 0.0
        %1922 = vmatpush1.msra.mxu0 0.0
        %1923 = vmatprep.subr.mxu0 0.0
        %1924 = vmatpush1.msra.mxu0 0.0
        %1925 = vmatprep.subr.mxu0 0.0
        %1926 = vmatpush1.msra.mxu0 0.0
        %1927 = vmatprep.subr.mxu0 0.0
        %1928 = vmatpush1.msra.mxu0 0.0
        %1929 = vmatprep.subr.mxu0 0.0
        %1930 = vmatpush1.msra.mxu0 0.0
        %1931 = vmatprep.subr.mxu0 0.0
        %1932 = vmatpush1.msra.mxu0 0.0
        %1933 = vmatprep.subr.mxu0 0.0
        %1934 = vmatpush1.msra.mxu0 0.0
        %1935 = vmatprep.subr.mxu0 0.0
        %1936 = vmatpush1.msra.mxu0 0.0
        %1937 = vmatprep.mubr.f32.mxu0 0.0
        %1938 = vmatmul.mubr.f32.gmra.mrb[0].mxu0 %v1871
        %v1939 = vpop.f32.mrb[0].mxu0
        %v1940 = vadd.f32 0.0, %v1939
        %v1941 = vpop.f32.mrb[0].mxu0
        %1942 = vdwg.mxu0
        %v1944 = vrot.slane %v1792, 4
        %v1945 = vsel %vm1450, %v1944, 0
        %1947 = vmatprep.subr.mxu0 0.0
        %1948 = vmatpush1.msra.mxu0 %v1437
        %1949 = vmatprep.subr.mxu0 0.0
        %1950 = vmatpush1.msra.mxu0 0.0
        %1951 = vmatprep.subr.mxu0 0.0
        %1952 = vmatpush1.msra.mxu0 0.0
        %1953 = vmatprep.subr.mxu0 0.0
        %1954 = vmatpush1.msra.mxu0 0.0
        %1955 = vmatprep.subr.mxu0 0.0
        %1956 = vmatpush1.msra.mxu0 0.0
        %1957 = vmatprep.subr.mxu0 0.0
        %1958 = vmatpush1.msra.mxu0 0.0
        %1959 = vmatprep.subr.mxu0 0.0
        %1960 = vmatpush1.msra.mxu0 0.0
        %1961 = vmatprep.subr.mxu0 0.0
        %1962 = vmatpush1.msra.mxu0 0.0
        %1963 = vmatprep.subr.mxu0 0.0
        %1964 = vmatpush1.msra.mxu0 0.0
        %1965 = vmatprep.subr.mxu0 0.0
        %1966 = vmatpush1.msra.mxu0 0.0
        %1967 = vmatprep.subr.mxu0 0.0
        %1968 = vmatpush1.msra.mxu0 0.0
        %1969 = vmatprep.subr.mxu0 0.0
        %1970 = vmatpush1.msra.mxu0 0.0
        %1971 = vmatprep.subr.mxu0 0.0
        %1972 = vmatpush1.msra.mxu0 0.0
        %1973 = vmatprep.subr.mxu0 0.0
        %1974 = vmatpush1.msra.mxu0 0.0
        %1975 = vmatprep.subr.mxu0 0.0
        %1976 = vmatpush1.msra.mxu0 0.0
        %1977 = vmatprep.subr.mxu0 0.0
        %1978 = vmatpush1.msra.mxu0 0.0
        %1979 = vmatprep.subr.mxu0 0.0
        %1980 = vmatpush1.msra.mxu0 0.0
        %1981 = vmatprep.subr.mxu0 0.0
        %1982 = vmatpush1.msra.mxu0 0.0
        %1983 = vmatprep.subr.mxu0 0.0
        %1984 = vmatpush1.msra.mxu0 0.0
        %1985 = vmatprep.subr.mxu0 0.0
        %1986 = vmatpush1.msra.mxu0 0.0
        %1987 = vmatprep.subr.mxu0 0.0
        %1988 = vmatpush1.msra.mxu0 0.0
        %1989 = vmatprep.subr.mxu0 0.0
        %1990 = vmatpush1.msra.mxu0 0.0
        %1991 = vmatprep.subr.mxu0 0.0
        %1992 = vmatpush1.msra.mxu0 0.0
        %1993 = vmatprep.subr.mxu0 0.0
        %1994 = vmatpush1.msra.mxu0 0.0
        %1995 = vmatprep.subr.mxu0 0.0
        %1996 = vmatpush1.msra.mxu0 0.0
        %1997 = vmatprep.subr.mxu0 0.0
        %1998 = vmatpush1.msra.mxu0 0.0
        %1999 = vmatprep.subr.mxu0 0.0
        %2000 = vmatpush1.msra.mxu0 0.0
        %2001 = vmatprep.subr.mxu0 0.0
        %2002 = vmatpush1.msra.mxu0 0.0
        %2003 = vmatprep.subr.mxu0 0.0
        %2004 = vmatpush1.msra.mxu0 0.0
        %2005 = vmatprep.subr.mxu0 0.0
        %2006 = vmatpush1.msra.mxu0 0.0
        %2007 = vmatprep.subr.mxu0 0.0
        %2008 = vmatpush1.msra.mxu0 0.0
        %2009 = vmatprep.subr.mxu0 0.0
        %2010 = vmatpush1.msra.mxu0 0.0
        %2011 = vmatprep.mubr.f32.mxu0 0.0
        %2012 = vmatmul.mubr.f32.gmra.mrb[0].mxu0 %v1945
        %v2013 = vpop.f32.mrb[0].mxu0
        %v2014 = vadd.f32 0.0, %v2013
        %v2015 = vpop.f32.mrb[0].mxu0
        %2016 = vdwg.mxu0
        %v2018 = vrot.slane %v1794, 4
        %v2019 = vsel %vm1450, %v2018, 0
        %2021 = vmatprep.subr.mxu0 0.0
        %2022 = vmatpush1.msra.mxu0 %v1437
        %2023 = vmatprep.subr.mxu0 0.0
        %2024 = vmatpush1.msra.mxu0 0.0
        %2025 = vmatprep.subr.mxu0 0.0
        %2026 = vmatpush1.msra.mxu0 0.0
        %2027 = vmatprep.subr.mxu0 0.0
        %2028 = vmatpush1.msra.mxu0 0.0
        %2029 = vmatprep.subr.mxu0 0.0
        %2030 = vmatpush1.msra.mxu0 0.0
        %2031 = vmatprep.subr.mxu0 0.0
        %2032 = vmatpush1.msra.mxu0 0.0
        %2033 = vmatprep.subr.mxu0 0.0
        %2034 = vmatpush1.msra.mxu0 0.0
        %2035 = vmatprep.subr.mxu0 0.0
        %2036 = vmatpush1.msra.mxu0 0.0
        %2037 = vmatprep.subr.mxu0 0.0
        %2038 = vmatpush1.msra.mxu0 0.0
        %2039 = vmatprep.subr.mxu0 0.0
        %2040 = vmatpush1.msra.mxu0 0.0
        %2041 = vmatprep.subr.mxu0 0.0
        %2042 = vmatpush1.msra.mxu0 0.0
        %2043 = vmatprep.subr.mxu0 0.0
        %2044 = vmatpush1.msra.mxu0 0.0
        %2045 = vmatprep.subr.mxu0 0.0
        %2046 = vmatpush1.msra.mxu0 0.0
        %2047 = vmatprep.subr.mxu0 0.0
        %2048 = vmatpush1.msra.mxu0 0.0
        %2049 = vmatprep.subr.mxu0 0.0
        %2050 = vmatpush1.msra.mxu0 0.0
        %2051 = vmatprep.subr.mxu0 0.0
        %2052 = vmatpush1.msra.mxu0 0.0
        %2053 = vmatprep.subr.mxu0 0.0
        %2054 = vmatpush1.msra.mxu0 0.0
        %2055 = vmatprep.subr.mxu0 0.0
        %2056 = vmatpush1.msra.mxu0 0.0
        %2057 = vmatprep.subr.mxu0 0.0
        %2058 = vmatpush1.msra.mxu0 0.0
        %2059 = vmatprep.subr.mxu0 0.0
        %2060 = vmatpush1.msra.mxu0 0.0
        %2061 = vmatprep.subr.mxu0 0.0
        %2062 = vmatpush1.msra.mxu0 0.0
        %2063 = vmatprep.subr.mxu0 0.0
        %2064 = vmatpush1.msra.mxu0 0.0
        %2065 = vmatprep.subr.mxu0 0.0
        %2066 = vmatpush1.msra.mxu0 0.0
        %2067 = vmatprep.subr.mxu0 0.0
        %2068 = vmatpush1.msra.mxu0 0.0
        %2069 = vmatprep.subr.mxu0 0.0
        %2070 = vmatpush1.msra.mxu0 0.0
        %2071 = vmatprep.subr.mxu0 0.0
        %2072 = vmatpush1.msra.mxu0 0.0
        %2073 = vmatprep.subr.mxu0 0.0
        %2074 = vmatpush1.msra.mxu0 0.0
        %2075 = vmatprep.subr.mxu0 0.0
        %2076 = vmatpush1.msra.mxu0 0.0
        %2077 = vmatprep.subr.mxu0 0.0
        %2078 = vmatpush1.msra.mxu0 0.0
        %2079 = vmatprep.subr.mxu0 0.0
        %2080 = vmatpush1.msra.mxu0 0.0
        %2081 = vmatprep.subr.mxu0 0.0
        %2082 = vmatpush1.msra.mxu0 0.0
        %2083 = vmatprep.subr.mxu0 0.0
        %2084 = vmatpush1.msra.mxu0 0.0
        %2085 = vmatprep.mubr.f32.mxu0 0.0
        %2086 = vmatmul.mubr.f32.gmra.mrb[0].mxu0 %v2019
        %v2087 = vpop.f32.mrb[0].mxu0
        %v2088 = vadd.f32 0.0, %v2087
        %v2089 = vpop.f32.mrb[0].mxu0
        %2090 = vdwg.mxu0
        %v2091 = vlaneseq
        %v2092 = vshrl.u32 %v2091, 7
        %v2093 = vsub.s32 1, %v2092
        %v2094 = vrot.slane %v422, %v2093
        %v2095 = vlaneseq
        %v2096 = vshrl.u32 %v2095, 7
        %v2097 = vsub.s32 1, %v2096
        %v2098 = vrot.slane %v423, %v2097
        %v2099 = vlaneseq
        %v2100 = vshrl.u32 %v2099, 7
        %v2101 = vsub.s32 1, %v2100
        %v2102 = vrot.slane %v424, %v2101
        %v2103 = vlaneseq
        %v2104 = vshrl.u32 %v2103, 7
        %v2105 = vsub.s32 1, %v2104
        %v2106 = vrot.slane %v425, %v2105
        %v2107 = vmul.f32 %v1866, %v2094
        %v2108 = vmul.f32 %v1940, %v2098
        %v2109 = vmul.f32 %v2014, %v2102
        %v2110 = vmul.f32 %v2088, %v2106
        %v2111 = vadd.f32 %v1763, %v2107
        %v2112 = vadd.f32 %v1764, %v2108
        %v2113 = vadd.f32 %v1765, %v2109
        %v2114 = vadd.f32 %v1766, %v2110
        %v2115 = vadd.f32 %v1767, %v1866
        %v2116 = vadd.f32 %v1768, %v1940
        %v2117 = vadd.f32 %v1769, %v2014
        %v2118 = vadd.f32 %v1770, %v2088
        %v2119 = vsub.f32 %v1394, %v1433
        %v2120 = vsub.f32 %v1396, %v1434
        %v2121 = vsub.f32 %v1398, %v1435
        %v2122 = vsub.f32 %v1400, %v1436
        %v2123 = vmul.f32 %v2119, 1.442695
        %v2124 = vpow.pop %v2123
        %v2125 = vmul.f32 %v2120, 1.442695
        %v2126 = vpow.pop %v2125
        %v2127 = vmul.f32 %v2121, 1.442695
        %v2128 = vpow.pop %v2127
        %v2129 = vmul.f32 %v2122, 1.442695
        %v2130 = vpow.pop %v2129
        %v2132 = vsel %vm1450, %v2124, 0
        %2134 = vmatprep.subr.mxu0 0.0
        %2135 = vmatpush1.msra.mxu0 %v1437
        %2136 = vmatprep.subr.mxu0 0.0
        %2137 = vmatpush1.msra.mxu0 0.0
        %2138 = vmatprep.subr.mxu0 0.0
        %2139 = vmatpush1.msra.mxu0 0.0
        %2140 = vmatprep.subr.mxu0 0.0
        %2141 = vmatpush1.msra.mxu0 0.0
        %2142 = vmatprep.subr.mxu0 0.0
        %2143 = vmatpush1.msra.mxu0 0.0
        %2144 = vmatprep.subr.mxu0 0.0
        %2145 = vmatpush1.msra.mxu0 0.0
        %2146 = vmatprep.subr.mxu0 0.0
        %2147 = vmatpush1.msra.mxu0 0.0
        %2148 = vmatprep.subr.mxu0 0.0
        %2149 = vmatpush1.msra.mxu0 0.0
        %2150 = vmatprep.subr.mxu0 0.0
        %2151 = vmatpush1.msra.mxu0 0.0
        %2152 = vmatprep.subr.mxu0 0.0
        %2153 = vmatpush1.msra.mxu0 0.0
        %2154 = vmatprep.subr.mxu0 0.0
        %2155 = vmatpush1.msra.mxu0 0.0
        %2156 = vmatprep.subr.mxu0 0.0
        %2157 = vmatpush1.msra.mxu0 0.0
        %2158 = vmatprep.subr.mxu0 0.0
        %2159 = vmatpush1.msra.mxu0 0.0
        %2160 = vmatprep.subr.mxu0 0.0
        %2161 = vmatpush1.msra.mxu0 0.0
        %2162 = vmatprep.subr.mxu0 0.0
        %2163 = vmatpush1.msra.mxu0 0.0
        %2164 = vmatprep.subr.mxu0 0.0
        %2165 = vmatpush1.msra.mxu0 0.0
        %2166 = vmatprep.subr.mxu0 0.0
        %2167 = vmatpush1.msra.mxu0 0.0
        %2168 = vmatprep.subr.mxu0 0.0
        %2169 = vmatpush1.msra.mxu0 0.0
        %2170 = vmatprep.subr.mxu0 0.0
        %2171 = vmatpush1.msra.mxu0 0.0
        %2172 = vmatprep.subr.mxu0 0.0
        %2173 = vmatpush1.msra.mxu0 0.0
        %2174 = vmatprep.subr.mxu0 0.0
        %2175 = vmatpush1.msra.mxu0 0.0
        %2176 = vmatprep.subr.mxu0 0.0
        %2177 = vmatpush1.msra.mxu0 0.0
        %2178 = vmatprep.subr.mxu0 0.0
        %2179 = vmatpush1.msra.mxu0 0.0
        %2180 = vmatprep.subr.mxu0 0.0
        %2181 = vmatpush1.msra.mxu0 0.0
        %2182 = vmatprep.subr.mxu0 0.0
        %2183 = vmatpush1.msra.mxu0 0.0
        %2184 = vmatprep.subr.mxu0 0.0
        %2185 = vmatpush1.msra.mxu0 0.0
        %2186 = vmatprep.subr.mxu0 0.0
        %2187 = vmatpush1.msra.mxu0 0.0
        %2188 = vmatprep.subr.mxu0 0.0
        %2189 = vmatpush1.msra.mxu0 0.0
        %2190 = vmatprep.subr.mxu0 0.0
        %2191 = vmatpush1.msra.mxu0 0.0
        %2192 = vmatprep.subr.mxu0 0.0
        %2193 = vmatpush1.msra.mxu0 0.0
        %2194 = vmatprep.subr.mxu0 0.0
        %2195 = vmatpush1.msra.mxu0 0.0
        %2196 = vmatprep.subr.mxu0 0.0
        %2197 = vmatpush1.msra.mxu0 0.0
        %2198 = vmatprep.mubr.f32.mxu0 0.0
        %2199 = vmatmul.mubr.f32.gmra.mrb[0].mxu0 %v2132
        %v2200 = vpop.f32.mrb[0].mxu0
        %v2201 = vadd.f32 0.0, %v2200
        %v2202 = vpop.f32.mrb[0].mxu0
        %2203 = vdwg.mxu0
        %v2205 = vsel %vm1450, %v2126, 0
        %2207 = vmatprep.subr.mxu0 0.0
        %2208 = vmatpush1.msra.mxu0 %v1437
        %2209 = vmatprep.subr.mxu0 0.0
        %2210 = vmatpush1.msra.mxu0 0.0
        %2211 = vmatprep.subr.mxu0 0.0
        %2212 = vmatpush1.msra.mxu0 0.0
        %2213 = vmatprep.subr.mxu0 0.0
        %2214 = vmatpush1.msra.mxu0 0.0
        %2215 = vmatprep.subr.mxu0 0.0
        %2216 = vmatpush1.msra.mxu0 0.0
        %2217 = vmatprep.subr.mxu0 0.0
        %2218 = vmatpush1.msra.mxu0 0.0
        %2219 = vmatprep.subr.mxu0 0.0
        %2220 = vmatpush1.msra.mxu0 0.0
        %2221 = vmatprep.subr.mxu0 0.0
        %2222 = vmatpush1.msra.mxu0 0.0
        %2223 = vmatprep.subr.mxu0 0.0
        %2224 = vmatpush1.msra.mxu0 0.0
        %2225 = vmatprep.subr.mxu0 0.0
        %2226 = vmatpush1.msra.mxu0 0.0
        %2227 = vmatprep.subr.mxu0 0.0
        %2228 = vmatpush1.msra.mxu0 0.0
        %2229 = vmatprep.subr.mxu0 0.0
        %2230 = vmatpush1.msra.mxu0 0.0
        %2231 = vmatprep.subr.mxu0 0.0
        %2232 = vmatpush1.msra.mxu0 0.0
        %2233 = vmatprep.subr.mxu0 0.0
        %2234 = vmatpush1.msra.mxu0 0.0
        %2235 = vmatprep.subr.mxu0 0.0
        %2236 = vmatpush1.msra.mxu0 0.0
        %2237 = vmatprep.subr.mxu0 0.0
        %2238 = vmatpush1.msra.mxu0 0.0
        %2239 = vmatprep.subr.mxu0 0.0
        %2240 = vmatpush1.msra.mxu0 0.0
        %2241 = vmatprep.subr.mxu0 0.0
        %2242 = vmatpush1.msra.mxu0 0.0
        %2243 = vmatprep.subr.mxu0 0.0
        %2244 = vmatpush1.msra.mxu0 0.0
        %2245 = vmatprep.subr.mxu0 0.0
        %2246 = vmatpush1.msra.mxu0 0.0
        %2247 = vmatprep.subr.mxu0 0.0
        %2248 = vmatpush1.msra.mxu0 0.0
        %2249 = vmatprep.subr.mxu0 0.0
        %2250 = vmatpush1.msra.mxu0 0.0
        %2251 = vmatprep.subr.mxu0 0.0
        %2252 = vmatpush1.msra.mxu0 0.0
        %2253 = vmatprep.subr.mxu0 0.0
        %2254 = vmatpush1.msra.mxu0 0.0
        %2255 = vmatprep.subr.mxu0 0.0
        %2256 = vmatpush1.msra.mxu0 0.0
        %2257 = vmatprep.subr.mxu0 0.0
        %2258 = vmatpush1.msra.mxu0 0.0
        %2259 = vmatprep.subr.mxu0 0.0
        %2260 = vmatpush1.msra.mxu0 0.0
        %2261 = vmatprep.subr.mxu0 0.0
        %2262 = vmatpush1.msra.mxu0 0.0
        %2263 = vmatprep.subr.mxu0 0.0
        %2264 = vmatpush1.msra.mxu0 0.0
        %2265 = vmatprep.subr.mxu0 0.0
        %2266 = vmatpush1.msra.mxu0 0.0
        %2267 = vmatprep.subr.mxu0 0.0
        %2268 = vmatpush1.msra.mxu0 0.0
        %2269 = vmatprep.subr.mxu0 0.0
        %2270 = vmatpush1.msra.mxu0 0.0
        %2271 = vmatprep.mubr.f32.mxu0 0.0
        %2272 = vmatmul.mubr.f32.gmra.mrb[0].mxu0 %v2205
        %v2273 = vpop.f32.mrb[0].mxu0
        %v2274 = vadd.f32 0.0, %v2273
        %v2275 = vpop.f32.mrb[0].mxu0
        %2276 = vdwg.mxu0
        %v2278 = vsel %vm1450, %v2128, 0
        %2280 = vmatprep.subr.mxu0 0.0
        %2281 = vmatpush1.msra.mxu0 %v1437
        %2282 = vmatprep.subr.mxu0 0.0
        %2283 = vmatpush1.msra.mxu0 0.0
        %2284 = vmatprep.subr.mxu0 0.0
        %2285 = vmatpush1.msra.mxu0 0.0
        %2286 = vmatprep.subr.mxu0 0.0
        %2287 = vmatpush1.msra.mxu0 0.0
        %2288 = vmatprep.subr.mxu0 0.0
        %2289 = vmatpush1.msra.mxu0 0.0
        %2290 = vmatprep.subr.mxu0 0.0
        %2291 = vmatpush1.msra.mxu0 0.0
        %2292 = vmatprep.subr.mxu0 0.0
        %2293 = vmatpush1.msra.mxu0 0.0
        %2294 = vmatprep.subr.mxu0 0.0
        %2295 = vmatpush1.msra.mxu0 0.0
        %2296 = vmatprep.subr.mxu0 0.0
        %2297 = vmatpush1.msra.mxu0 0.0
        %2298 = vmatprep.subr.mxu0 0.0
        %2299 = vmatpush1.msra.mxu0 0.0
        %2300 = vmatprep.subr.mxu0 0.0
        %2301 = vmatpush1.msra.mxu0 0.0
        %2302 = vmatprep.subr.mxu0 0.0
        %2303 = vmatpush1.msra.mxu0 0.0
        %2304 = vmatprep.subr.mxu0 0.0
        %2305 = vmatpush1.msra.mxu0 0.0
        %2306 = vmatprep.subr.mxu0 0.0
        %2307 = vmatpush1.msra.mxu0 0.0
        %2308 = vmatprep.subr.mxu0 0.0
        %2309 = vmatpush1.msra.mxu0 0.0
        %2310 = vmatprep.subr.mxu0 0.0
        %2311 = vmatpush1.msra.mxu0 0.0
        %2312 = vmatprep.subr.mxu0 0.0
        %2313 = vmatpush1.msra.mxu0 0.0
        %2314 = vmatprep.subr.mxu0 0.0
        %2315 = vmatpush1.msra.mxu0 0.0
        %2316 = vmatprep.subr.mxu0 0.0
        %2317 = vmatpush1.msra.mxu0 0.0
        %2318 = vmatprep.subr.mxu0 0.0
        %2319 = vmatpush1.msra.mxu0 0.0
        %2320 = vmatprep.subr.mxu0 0.0
        %2321 = vmatpush1.msra.mxu0 0.0
        %2322 = vmatprep.subr.mxu0 0.0
        %2323 = vmatpush1.msra.mxu0 0.0
        %2324 = vmatprep.subr.mxu0 0.0
        %2325 = vmatpush1.msra.mxu0 0.0
        %2326 = vmatprep.subr.mxu0 0.0
        %2327 = vmatpush1.msra.mxu0 0.0
        %2328 = vmatprep.subr.mxu0 0.0
        %2329 = vmatpush1.msra.mxu0 0.0
        %2330 = vmatprep.subr.mxu0 0.0
        %2331 = vmatpush1.msra.mxu0 0.0
        %2332 = vmatprep.subr.mxu0 0.0
        %2333 = vmatpush1.msra.mxu0 0.0
        %2334 = vmatprep.subr.mxu0 0.0
        %2335 = vmatpush1.msra.mxu0 0.0
        %2336 = vmatprep.subr.mxu0 0.0
        %2337 = vmatpush1.msra.mxu0 0.0
        %2338 = vmatprep.subr.mxu0 0.0
        %2339 = vmatpush1.msra.mxu0 0.0
        %2340 = vmatprep.subr.mxu0 0.0
        %2341 = vmatpush1.msra.mxu0 0.0
        %2342 = vmatprep.subr.mxu0 0.0
        %2343 = vmatpush1.msra.mxu0 0.0
        %2344 = vmatprep.mubr.f32.mxu0 0.0
        %2345 = vmatmul.mubr.f32.gmra.mrb[0].mxu0 %v2278
        %v2346 = vpop.f32.mrb[0].mxu0
        %v2347 = vadd.f32 0.0, %v2346
        %v2348 = vpop.f32.mrb[0].mxu0
        %2349 = vdwg.mxu0
        %v2351 = vsel %vm1450, %v2130, 0
        %2353 = vmatprep.subr.mxu0 0.0
        %2354 = vmatpush1.msra.mxu0 %v1437
        %2355 = vmatprep.subr.mxu0 0.0
        %2356 = vmatpush1.msra.mxu0 0.0
        %2357 = vmatprep.subr.mxu0 0.0
        %2358 = vmatpush1.msra.mxu0 0.0
        %2359 = vmatprep.subr.mxu0 0.0
        %2360 = vmatpush1.msra.mxu0 0.0
        %2361 = vmatprep.subr.mxu0 0.0
        %2362 = vmatpush1.msra.mxu0 0.0
        %2363 = vmatprep.subr.mxu0 0.0
        %2364 = vmatpush1.msra.mxu0 0.0
        %2365 = vmatprep.subr.mxu0 0.0
        %2366 = vmatpush1.msra.mxu0 0.0
        %2367 = vmatprep.subr.mxu0 0.0
        %2368 = vmatpush1.msra.mxu0 0.0
        %2369 = vmatprep.subr.mxu0 0.0
        %2370 = vmatpush1.msra.mxu0 0.0
        %2371 = vmatprep.subr.mxu0 0.0
        %2372 = vmatpush1.msra.mxu0 0.0
        %2373 = vmatprep.subr.mxu0 0.0
        %2374 = vmatpush1.msra.mxu0 0.0
        %2375 = vmatprep.subr.mxu0 0.0
        %2376 = vmatpush1.msra.mxu0 0.0
        %2377 = vmatprep.subr.mxu0 0.0
        %2378 = vmatpush1.msra.mxu0 0.0
        %2379 = vmatprep.subr.mxu0 0.0
        %2380 = vmatpush1.msra.mxu0 0.0
        %2381 = vmatprep.subr.mxu0 0.0
        %2382 = vmatpush1.msra.mxu0 0.0
        %2383 = vmatprep.subr.mxu0 0.0
        %2384 = vmatpush1.msra.mxu0 0.0
        %2385 = vmatprep.subr.mxu0 0.0
        %2386 = vmatpush1.msra.mxu0 0.0
        %2387 = vmatprep.subr.mxu0 0.0
        %2388 = vmatpush1.msra.mxu0 0.0
        %2389 = vmatprep.subr.mxu0 0.0
        %2390 = vmatpush1.msra.mxu0 0.0
        %2391 = vmatprep.subr.mxu0 0.0
        %2392 = vmatpush1.msra.mxu0 0.0
        %2393 = vmatprep.subr.mxu0 0.0
        %2394 = vmatpush1.msra.mxu0 0.0
        %2395 = vmatprep.subr.mxu0 0.0
        %2396 = vmatpush1.msra.mxu0 0.0
        %2397 = vmatprep.subr.mxu0 0.0
        %2398 = vmatpush1.msra.mxu0 0.0
        %2399 = vmatprep.subr.mxu0 0.0
        %2400 = vmatpush1.msra.mxu0 0.0
        %2401 = vmatprep.subr.mxu0 0.0
        %2402 = vmatpush1.msra.mxu0 0.0
        %2403 = vmatprep.subr.mxu0 0.0
        %2404 = vmatpush1.msra.mxu0 0.0
        %2405 = vmatprep.subr.mxu0 0.0
        %2406 = vmatpush1.msra.mxu0 0.0
        %2407 = vmatprep.subr.mxu0 0.0
        %2408 = vmatpush1.msra.mxu0 0.0
        %2409 = vmatprep.subr.mxu0 0.0
        %2410 = vmatpush1.msra.mxu0 0.0
        %2411 = vmatprep.subr.mxu0 0.0
        %2412 = vmatpush1.msra.mxu0 0.0
        %2413 = vmatprep.subr.mxu0 0.0
        %2414 = vmatpush1.msra.mxu0 0.0
        %2415 = vmatprep.subr.mxu0 0.0
        %2416 = vmatpush1.msra.mxu0 0.0
        %2417 = vmatprep.mubr.f32.mxu0 0.0
        %2418 = vmatmul.mubr.f32.gmra.mrb[0].mxu0 %v2351
        %v2419 = vpop.f32.mrb[0].mxu0
        %v2420 = vadd.f32 0.0, %v2419
        %v2421 = vpop.f32.mrb[0].mxu0
        %2422 = vdwg.mxu0
        %v2423 = vlaneseq
        %v2424 = vshrl.u32 %v2423, 7
        %v2425 = vsub.s32 2, %v2424
        %v2426 = vrot.slane %v422, %v2425
        %v2427 = vlaneseq
        %v2428 = vshrl.u32 %v2427, 7
        %v2429 = vsub.s32 2, %v2428
        %v2430 = vrot.slane %v423, %v2429
        %v2431 = vlaneseq
        %v2432 = vshrl.u32 %v2431, 7
        %v2433 = vsub.s32 2, %v2432
        %v2434 = vrot.slane %v424, %v2433
        %v2435 = vlaneseq
        %v2436 = vshrl.u32 %v2435, 7
        %v2437 = vsub.s32 2, %v2436
        %v2438 = vrot.slane %v425, %v2437
        %v2439 = vmul.f32 %v2201, %v2426
        %v2440 = vmul.f32 %v2274, %v2430
        %v2441 = vmul.f32 %v2347, %v2434
        %v2442 = vmul.f32 %v2420, %v2438
        %v2443 = vadd.f32 %v2111, %v2439
        %v2444 = vadd.f32 %v2112, %v2440
        %v2445 = vadd.f32 %v2113, %v2441
        %v2446 = vadd.f32 %v2114, %v2442
        %v2447 = vadd.f32 %v2115, %v2201
        %v2448 = vadd.f32 %v2116, %v2274
        %v2449 = vadd.f32 %v2117, %v2347
        %v2450 = vadd.f32 %v2118, %v2420
        %v2451 = vsub.f32 %v1394, %v1775
        %v2452 = vsub.f32 %v1396, %v1776
        %v2453 = vsub.f32 %v1398, %v1777
        %v2454 = vsub.f32 %v1400, %v1778
        %v2455 = vmul.f32 %v2451, 1.442695
        %v2456 = vpow.pop %v2455
        %v2457 = vmul.f32 %v2452, 1.442695
        %v2458 = vpow.pop %v2457
        %v2459 = vmul.f32 %v2453, 1.442695
        %v2460 = vpow.pop %v2459
        %v2461 = vmul.f32 %v2454, 1.442695
        %v2462 = vpow.pop %v2461
        %v2464 = vrot.slane %v2456, 4
        %v2465 = vsel %vm1450, %v2464, 0
        %2467 = vmatprep.subr.mxu0 0.0
        %2468 = vmatpush1.msra.mxu0 %v1437
        %2469 = vmatprep.subr.mxu0 0.0
        %2470 = vmatpush1.msra.mxu0 0.0
        %2471 = vmatprep.subr.mxu0 0.0
        %2472 = vmatpush1.msra.mxu0 0.0
        %2473 = vmatprep.subr.mxu0 0.0
        %2474 = vmatpush1.msra.mxu0 0.0
        %2475 = vmatprep.subr.mxu0 0.0
        %2476 = vmatpush1.msra.mxu0 0.0
        %2477 = vmatprep.subr.mxu0 0.0
        %2478 = vmatpush1.msra.mxu0 0.0
        %2479 = vmatprep.subr.mxu0 0.0
        %2480 = vmatpush1.msra.mxu0 0.0
        %2481 = vmatprep.subr.mxu0 0.0
        %2482 = vmatpush1.msra.mxu0 0.0
        %2483 = vmatprep.subr.mxu0 0.0
        %2484 = vmatpush1.msra.mxu0 0.0
        %2485 = vmatprep.subr.mxu0 0.0
        %2486 = vmatpush1.msra.mxu0 0.0
        %2487 = vmatprep.subr.mxu0 0.0
        %2488 = vmatpush1.msra.mxu0 0.0
        %2489 = vmatprep.subr.mxu0 0.0
        %2490 = vmatpush1.msra.mxu0 0.0
        %2491 = vmatprep.subr.mxu0 0.0
        %2492 = vmatpush1.msra.mxu0 0.0
        %2493 = vmatprep.subr.mxu0 0.0
        %2494 = vmatpush1.msra.mxu0 0.0
        %2495 = vmatprep.subr.mxu0 0.0
        %2496 = vmatpush1.msra.mxu0 0.0
        %2497 = vmatprep.subr.mxu0 0.0
        %2498 = vmatpush1.msra.mxu0 0.0
        %2499 = vmatprep.subr.mxu0 0.0
        %2500 = vmatpush1.msra.mxu0 0.0
        %2501 = vmatprep.subr.mxu0 0.0
        %2502 = vmatpush1.msra.mxu0 0.0
        %2503 = vmatprep.subr.mxu0 0.0
        %2504 = vmatpush1.msra.mxu0 0.0
        %2505 = vmatprep.subr.mxu0 0.0
        %2506 = vmatpush1.msra.mxu0 0.0
        %2507 = vmatprep.subr.mxu0 0.0
        %2508 = vmatpush1.msra.mxu0 0.0
        %2509 = vmatprep.subr.mxu0 0.0
        %2510 = vmatpush1.msra.mxu0 0.0
        %2511 = vmatprep.subr.mxu0 0.0
        %2512 = vmatpush1.msra.mxu0 0.0
        %2513 = vmatprep.subr.mxu0 0.0
        %2514 = vmatpush1.msra.mxu0 0.0
        %2515 = vmatprep.subr.mxu0 0.0
        %2516 = vmatpush1.msra.mxu0 0.0
        %2517 = vmatprep.subr.mxu0 0.0
        %2518 = vmatpush1.msra.mxu0 0.0
        %2519 = vmatprep.subr.mxu0 0.0
        %2520 = vmatpush1.msra.mxu0 0.0
        %2521 = vmatprep.subr.mxu0 0.0
        %2522 = vmatpush1.msra.mxu0 0.0
        %2523 = vmatprep.subr.mxu0 0.0
        %2524 = vmatpush1.msra.mxu0 0.0
        %2525 = vmatprep.subr.mxu0 0.0
        %2526 = vmatpush1.msra.mxu0 0.0
        %2527 = vmatprep.subr.mxu0 0.0
        %2528 = vmatpush1.msra.mxu0 0.0
        %2529 = vmatprep.subr.mxu0 0.0
        %2530 = vmatpush1.msra.mxu0 0.0
        %2531 = vmatprep.mubr.f32.mxu0 0.0
        %2532 = vmatmul.mubr.f32.gmra.mrb[0].mxu0 %v2465
        %v2533 = vpop.f32.mrb[0].mxu0
        %v2534 = vadd.f32 0.0, %v2533
        %v2535 = vpop.f32.mrb[0].mxu0
        %2536 = vdwg.mxu0
        %v2538 = vrot.slane %v2458, 4
        %v2539 = vsel %vm1450, %v2538, 0
        %2541 = vmatprep.subr.mxu0 0.0
        %2542 = vmatpush1.msra.mxu0 %v1437
        %2543 = vmatprep.subr.mxu0 0.0
        %2544 = vmatpush1.msra.mxu0 0.0
        %2545 = vmatprep.subr.mxu0 0.0
        %2546 = vmatpush1.msra.mxu0 0.0
        %2547 = vmatprep.subr.mxu0 0.0
        %2548 = vmatpush1.msra.mxu0 0.0
        %2549 = vmatprep.subr.mxu0 0.0
        %2550 = vmatpush1.msra.mxu0 0.0
        %2551 = vmatprep.subr.mxu0 0.0
        %2552 = vmatpush1.msra.mxu0 0.0
        %2553 = vmatprep.subr.mxu0 0.0
        %2554 = vmatpush1.msra.mxu0 0.0
        %2555 = vmatprep.subr.mxu0 0.0
        %2556 = vmatpush1.msra.mxu0 0.0
        %2557 = vmatprep.subr.mxu0 0.0
        %2558 = vmatpush1.msra.mxu0 0.0
        %2559 = vmatprep.subr.mxu0 0.0
        %2560 = vmatpush1.msra.mxu0 0.0
        %2561 = vmatprep.subr.mxu0 0.0
        %2562 = vmatpush1.msra.mxu0 0.0
        %2563 = vmatprep.subr.mxu0 0.0
        %2564 = vmatpush1.msra.mxu0 0.0
        %2565 = vmatprep.subr.mxu0 0.0
        %2566 = vmatpush1.msra.mxu0 0.0
        %2567 = vmatprep.subr.mxu0 0.0
        %2568 = vmatpush1.msra.mxu0 0.0
        %2569 = vmatprep.subr.mxu0 0.0
        %2570 = vmatpush1.msra.mxu0 0.0
        %2571 = vmatprep.subr.mxu0 0.0
        %2572 = vmatpush1.msra.mxu0 0.0
        %2573 = vmatprep.subr.mxu0 0.0
        %2574 = vmatpush1.msra.mxu0 0.0
        %2575 = vmatprep.subr.mxu0 0.0
        %2576 = vmatpush1.msra.mxu0 0.0
        %2577 = vmatprep.subr.mxu0 0.0
        %2578 = vmatpush1.msra.mxu0 0.0
        %2579 = vmatprep.subr.mxu0 0.0
        %2580 = vmatpush1.msra.mxu0 0.0
        %2581 = vmatprep.subr.mxu0 0.0
        %2582 = vmatpush1.msra.mxu0 0.0
        %2583 = vmatprep.subr.mxu0 0.0
        %2584 = vmatpush1.msra.mxu0 0.0
        %2585 = vmatprep.subr.mxu0 0.0
        %2586 = vmatpush1.msra.mxu0 0.0
        %2587 = vmatprep.subr.mxu0 0.0
        %2588 = vmatpush1.msra.mxu0 0.0
        %2589 = vmatprep.subr.mxu0 0.0
        %2590 = vmatpush1.msra.mxu0 0.0
        %2591 = vmatprep.subr.mxu0 0.0
        %2592 = vmatpush1.msra.mxu0 0.0
        %2593 = vmatprep.subr.mxu0 0.0
        %2594 = vmatpush1.msra.mxu0 0.0
        %2595 = vmatprep.subr.mxu0 0.0
        %2596 = vmatpush1.msra.mxu0 0.0
        %2597 = vmatprep.subr.mxu0 0.0
        %2598 = vmatpush1.msra.mxu0 0.0
        %2599 = vmatprep.subr.mxu0 0.0
        %2600 = vmatpush1.msra.mxu0 0.0
        %2601 = vmatprep.subr.mxu0 0.0
        %2602 = vmatpush1.msra.mxu0 0.0
        %2603 = vmatprep.subr.mxu0 0.0
        %2604 = vmatpush1.msra.mxu0 0.0
        %2605 = vmatprep.mubr.f32.mxu0 0.0
        %2606 = vmatmul.mubr.f32.gmra.mrb[0].mxu0 %v2539
        %v2607 = vpop.f32.mrb[0].mxu0
        %v2608 = vadd.f32 0.0, %v2607
        %v2609 = vpop.f32.mrb[0].mxu0
        %2610 = vdwg.mxu0
        %v2612 = vrot.slane %v2460, 4
        %v2613 = vsel %vm1450, %v2612, 0
        %2615 = vmatprep.subr.mxu0 0.0
        %2616 = vmatpush1.msra.mxu0 %v1437
        %2617 = vmatprep.subr.mxu0 0.0
        %2618 = vmatpush1.msra.mxu0 0.0
        %2619 = vmatprep.subr.mxu0 0.0
        %2620 = vmatpush1.msra.mxu0 0.0
        %2621 = vmatprep.subr.mxu0 0.0
        %2622 = vmatpush1.msra.mxu0 0.0
        %2623 = vmatprep.subr.mxu0 0.0
        %2624 = vmatpush1.msra.mxu0 0.0
        %2625 = vmatprep.subr.mxu0 0.0
        %2626 = vmatpush1.msra.mxu0 0.0
        %2627 = vmatprep.subr.mxu0 0.0
        %2628 = vmatpush1.msra.mxu0 0.0
        %2629 = vmatprep.subr.mxu0 0.0
        %2630 = vmatpush1.msra.mxu0 0.0
        %2631 = vmatprep.subr.mxu0 0.0
        %2632 = vmatpush1.msra.mxu0 0.0
        %2633 = vmatprep.subr.mxu0 0.0
        %2634 = vmatpush1.msra.mxu0 0.0
        %2635 = vmatprep.subr.mxu0 0.0
        %2636 = vmatpush1.msra.mxu0 0.0
        %2637 = vmatprep.subr.mxu0 0.0
        %2638 = vmatpush1.msra.mxu0 0.0
        %2639 = vmatprep.subr.mxu0 0.0
        %2640 = vmatpush1.msra.mxu0 0.0
        %2641 = vmatprep.subr.mxu0 0.0
        %2642 = vmatpush1.msra.mxu0 0.0
        %2643 = vmatprep.subr.mxu0 0.0
        %2644 = vmatpush1.msra.mxu0 0.0
        %2645 = vmatprep.subr.mxu0 0.0
        %2646 = vmatpush1.msra.mxu0 0.0
        %2647 = vmatprep.subr.mxu0 0.0
        %2648 = vmatpush1.msra.mxu0 0.0
        %2649 = vmatprep.subr.mxu0 0.0
        %2650 = vmatpush1.msra.mxu0 0.0
        %2651 = vmatprep.subr.mxu0 0.0
        %2652 = vmatpush1.msra.mxu0 0.0
        %2653 = vmatprep.subr.mxu0 0.0
        %2654 = vmatpush1.msra.mxu0 0.0
        %2655 = vmatprep.subr.mxu0 0.0
        %2656 = vmatpush1.msra.mxu0 0.0
        %2657 = vmatprep.subr.mxu0 0.0
        %2658 = vmatpush1.msra.mxu0 0.0
        %2659 = vmatprep.subr.mxu0 0.0
        %2660 = vmatpush1.msra.mxu0 0.0
        %2661 = vmatprep.subr.mxu0 0.0
        %2662 = vmatpush1.msra.mxu0 0.0
        %2663 = vmatprep.subr.mxu0 0.0
        %2664 = vmatpush1.msra.mxu0 0.0
        %2665 = vmatprep.subr.mxu0 0.0
        %2666 = vmatpush1.msra.mxu0 0.0
        %2667 = vmatprep.subr.mxu0 0.0
        %2668 = vmatpush1.msra.mxu0 0.0
        %2669 = vmatprep.subr.mxu0 0.0
        %2670 = vmatpush1.msra.mxu0 0.0
        %2671 = vmatprep.subr.mxu0 0.0
        %2672 = vmatpush1.msra.mxu0 0.0
        %2673 = vmatprep.subr.mxu0 0.0
        %2674 = vmatpush1.msra.mxu0 0.0
        %2675 = vmatprep.subr.mxu0 0.0
        %2676 = vmatpush1.msra.mxu0 0.0
        %2677 = vmatprep.subr.mxu0 0.0
        %2678 = vmatpush1.msra.mxu0 0.0
        %2679 = vmatprep.mubr.f32.mxu0 0.0
        %2680 = vmatmul.mubr.f32.gmra.mrb[0].mxu0 %v2613
        %v2681 = vpop.f32.mrb[0].mxu0
        %v2682 = vadd.f32 0.0, %v2681
        %v2683 = vpop.f32.mrb[0].mxu0
        %2684 = vdwg.mxu0
        %v2686 = vrot.slane %v2462, 4
        %v2687 = vsel %vm1450, %v2686, 0
        %2689 = vmatprep.subr.mxu0 0.0
        %2690 = vmatpush1.msra.mxu0 %v1437
        %2691 = vmatprep.subr.mxu0 0.0
        %2692 = vmatpush1.msra.mxu0 0.0
        %2693 = vmatprep.subr.mxu0 0.0
        %2694 = vmatpush1.msra.mxu0 0.0
        %2695 = vmatprep.subr.mxu0 0.0
        %2696 = vmatpush1.msra.mxu0 0.0
        %2697 = vmatprep.subr.mxu0 0.0
        %2698 = vmatpush1.msra.mxu0 0.0
        %2699 = vmatprep.subr.mxu0 0.0
        %2700 = vmatpush1.msra.mxu0 0.0
        %2701 = vmatprep.subr.mxu0 0.0
        %2702 = vmatpush1.msra.mxu0 0.0
        %2703 = vmatprep.subr.mxu0 0.0
        %2704 = vmatpush1.msra.mxu0 0.0
        %2705 = vmatprep.subr.mxu0 0.0
        %2706 = vmatpush1.msra.mxu0 0.0
        %2707 = vmatprep.subr.mxu0 0.0
        %2708 = vmatpush1.msra.mxu0 0.0
        %2709 = vmatprep.subr.mxu0 0.0
        %2710 = vmatpush1.msra.mxu0 0.0
        %2711 = vmatprep.subr.mxu0 0.0
        %2712 = vmatpush1.msra.mxu0 0.0
        %2713 = vmatprep.subr.mxu0 0.0
        %2714 = vmatpush1.msra.mxu0 0.0
        %2715 = vmatprep.subr.mxu0 0.0
        %2716 = vmatpush1.msra.mxu0 0.0
        %2717 = vmatprep.subr.mxu0 0.0
        %2718 = vmatpush1.msra.mxu0 0.0
        %2719 = vmatprep.subr.mxu0 0.0
        %2720 = vmatpush1.msra.mxu0 0.0
        %2721 = vmatprep.subr.mxu0 0.0
        %2722 = vmatpush1.msra.mxu0 0.0
        %2723 = vmatprep.subr.mxu0 0.0
        %2724 = vmatpush1.msra.mxu0 0.0
        %2725 = vmatprep.subr.mxu0 0.0
        %2726 = vmatpush1.msra.mxu0 0.0
        %2727 = vmatprep.subr.mxu0 0.0
        %2728 = vmatpush1.msra.mxu0 0.0
        %2729 = vmatprep.subr.mxu0 0.0
        %2730 = vmatpush1.msra.mxu0 0.0
        %2731 = vmatprep.subr.mxu0 0.0
        %2732 = vmatpush1.msra.mxu0 0.0
        %2733 = vmatprep.subr.mxu0 0.0
        %2734 = vmatpush1.msra.mxu0 0.0
        %2735 = vmatprep.subr.mxu0 0.0
        %2736 = vmatpush1.msra.mxu0 0.0
        %2737 = vmatprep.subr.mxu0 0.0
        %2738 = vmatpush1.msra.mxu0 0.0
        %2739 = vmatprep.subr.mxu0 0.0
        %2740 = vmatpush1.msra.mxu0 0.0
        %2741 = vmatprep.subr.mxu0 0.0
        %2742 = vmatpush1.msra.mxu0 0.0
        %2743 = vmatprep.subr.mxu0 0.0
        %2744 = vmatpush1.msra.mxu0 0.0
        %2745 = vmatprep.subr.mxu0 0.0
        %2746 = vmatpush1.msra.mxu0 0.0
        %2747 = vmatprep.subr.mxu0 0.0
        %2748 = vmatpush1.msra.mxu0 0.0
        %2749 = vmatprep.subr.mxu0 0.0
        %2750 = vmatpush1.msra.mxu0 0.0
        %2751 = vmatprep.subr.mxu0 0.0
        %2752 = vmatpush1.msra.mxu0 0.0
        %2753 = vmatprep.mubr.f32.mxu0 0.0
        %2754 = vmatmul.mubr.f32.gmra.mrb[0].mxu0 %v2687
        %v2755 = vpop.f32.mrb[0].mxu0
        %v2756 = vadd.f32 0.0, %v2755
        %v2757 = vpop.f32.mrb[0].mxu0
        %2758 = vdwg.mxu0
        %v2759 = vlaneseq
        %v2760 = vshrl.u32 %v2759, 7
        %v2761 = vsub.s32 3, %v2760
        %v2762 = vrot.slane %v422, %v2761
        %v2763 = vlaneseq
        %v2764 = vshrl.u32 %v2763, 7
        %v2765 = vsub.s32 3, %v2764
        %v2766 = vrot.slane %v423, %v2765
        %v2767 = vlaneseq
        %v2768 = vshrl.u32 %v2767, 7
        %v2769 = vsub.s32 3, %v2768
        %v2770 = vrot.slane %v424, %v2769
        %v2771 = vlaneseq
        %v2772 = vshrl.u32 %v2771, 7
        %v2773 = vsub.s32 3, %v2772
        %v2774 = vrot.slane %v425, %v2773
        %v2775 = vmul.f32 %v2534, %v2762
        %v2776 = vmul.f32 %v2608, %v2766
        %v2777 = vmul.f32 %v2682, %v2770
        %v2778 = vmul.f32 %v2756, %v2774
        %v2779 = vadd.f32 %v2443, %v2775
        %v2780 = vadd.f32 %v2444, %v2776
        %v2781 = vadd.f32 %v2445, %v2777
        %v2782 = vadd.f32 %v2446, %v2778
        %v2783 = vadd.f32 %v2447, %v2534
        %v2784 = vadd.f32 %v2448, %v2608
        %v2785 = vadd.f32 %v2449, %v2682
        %v2786 = vadd.f32 %v2450, %v2756
        %v2787 = vrcp.pop %v2783
        %v2788 = vrcp.pop %v2784
        %v2789 = vrcp.pop %v2785
        %v2790 = vrcp.pop %v2786
        %v2791 = vmul.f32 %v2779, %v2787
        %v2792 = vmul.f32 %v2780, %v2788
        %v2793 = vmul.f32 %v2781, %v2789
        %v2794 = vmul.f32 %v2782, %v2790
        %v2795 = vld [vmem:[#allocation13] sm:$0xff]
        %v2796 = vld [vmem:[#allocation13 + $0x8] sm:$0xff]
        %v2797 = vld [vmem:[#allocation13 + $0x10] sm:$0xff]
        %v2798 = vld [vmem:[#allocation13 + $0x18] sm:$0xff]
        %v2799 = vld [vmem:[#allocation14] sm:$0x1]
        %v2801 = vlaneseq
        %v2802 = vshrl.u32 %v2801, 7
        %v2803 = vsub.s32 0, %v2802
        %v2804 = vrot.slane %v2799, %v2803
        %v2807 = vsel %vm435, %v2791, 0
        %2809 = vmatprep.subr.mxu0 0.0
        %2810 = vmatpush1.msra.mxu0 %v2795
        %2811 = vmatprep.subr.mxu0 0.0
        %2812 = vmatpush1.msra.mxu0 %v2796
        %2813 = vmatprep.subr.mxu0 0.0
        %2814 = vmatpush1.msra.mxu0 %v2797
        %2815 = vmatprep.subr.mxu0 0.0
        %2816 = vmatpush1.msra.mxu0 %v2798
        %2817 = vmatprep.subr.mxu0 0.0
        %2818 = vmatpush1.msra.mxu0 0.0
        %2819 = vmatprep.subr.mxu0 0.0
        %2820 = vmatpush1.msra.mxu0 0.0
        %2821 = vmatprep.subr.mxu0 0.0
        %2822 = vmatpush1.msra.mxu0 0.0
        %2823 = vmatprep.subr.mxu0 0.0
        %2824 = vmatpush1.msra.mxu0 0.0
        %2825 = vmatprep.subr.mxu0 0.0
        %2826 = vmatpush1.msra.mxu0 0.0
        %2827 = vmatprep.subr.mxu0 0.0
        %2828 = vmatpush1.msra.mxu0 0.0
        %2829 = vmatprep.subr.mxu0 0.0
        %2830 = vmatpush1.msra.mxu0 0.0
        %2831 = vmatprep.subr.mxu0 0.0
        %2832 = vmatpush1.msra.mxu0 0.0
        %2833 = vmatprep.subr.mxu0 0.0
        %2834 = vmatpush1.msra.mxu0 0.0
        %2835 = vmatprep.subr.mxu0 0.0
        %2836 = vmatpush1.msra.mxu0 0.0
        %2837 = vmatprep.subr.mxu0 0.0
        %2838 = vmatpush1.msra.mxu0 0.0
        %2839 = vmatprep.subr.mxu0 0.0
        %2840 = vmatpush1.msra.mxu0 0.0
        %2841 = vmatprep.subr.mxu0 0.0
        %2842 = vmatpush1.msra.mxu0 0.0
        %2843 = vmatprep.subr.mxu0 0.0
        %2844 = vmatpush1.msra.mxu0 0.0
        %2845 = vmatprep.subr.mxu0 0.0
        %2846 = vmatpush1.msra.mxu0 0.0
        %2847 = vmatprep.subr.mxu0 0.0
        %2848 = vmatpush1.msra.mxu0 0.0
        %2849 = vmatprep.subr.mxu0 0.0
        %2850 = vmatpush1.msra.mxu0 0.0
        %2851 = vmatprep.subr.mxu0 0.0
        %2852 = vmatpush1.msra.mxu0 0.0
        %2853 = vmatprep.subr.mxu0 0.0
        %2854 = vmatpush1.msra.mxu0 0.0
        %2855 = vmatprep.subr.mxu0 0.0
        %2856 = vmatpush1.msra.mxu0 0.0
        %2857 = vmatprep.subr.mxu0 0.0
        %2858 = vmatpush1.msra.mxu0 0.0
        %2859 = vmatprep.subr.mxu0 0.0
        %2860 = vmatpush1.msra.mxu0 0.0
        %2861 = vmatprep.subr.mxu0 0.0
        %2862 = vmatpush1.msra.mxu0 0.0
        %2863 = vmatprep.subr.mxu0 0.0
        %2864 = vmatpush1.msra.mxu0 0.0
        %2865 = vmatprep.subr.mxu0 0.0
        %2866 = vmatpush1.msra.mxu0 0.0
        %2867 = vmatprep.subr.mxu0 0.0
        %2868 = vmatpush1.msra.mxu0 0.0
        %2869 = vmatprep.subr.mxu0 0.0
        %2870 = vmatpush1.msra.mxu0 0.0
        %2871 = vmatprep.subr.mxu0 0.0
        %2872 = vmatpush1.msra.mxu0 0.0
        %2873 = vmatprep.mubr.f32.mxu0 0.0
        %2874 = vmatmul.mubr.f32.gmra.mrb[0].mxu0 %v2807
        %v2875 = vpop.f32.mrb[0].mxu0
        %v2876 = vadd.f32 %v2804, %v2875
        %v2877 = vpop.f32.mrb[0].mxu0
        %2878 = vdwg.mxu0
        %v2880 = vsel %vm435, %v2792, 0
        %2882 = vmatprep.subr.mxu0 0.0
        %2883 = vmatpush1.msra.mxu0 %v2795
        %2884 = vmatprep.subr.mxu0 0.0
        %2885 = vmatpush1.msra.mxu0 %v2796
        %2886 = vmatprep.subr.mxu0 0.0
        %2887 = vmatpush1.msra.mxu0 %v2797
        %2888 = vmatprep.subr.mxu0 0.0
        %2889 = vmatpush1.msra.mxu0 %v2798
        %2890 = vmatprep.subr.mxu0 0.0
        %2891 = vmatpush1.msra.mxu0 0.0
        %2892 = vmatprep.subr.mxu0 0.0
        %2893 = vmatpush1.msra.mxu0 0.0
        %2894 = vmatprep.subr.mxu0 0.0
        %2895 = vmatpush1.msra.mxu0 0.0
        %2896 = vmatprep.subr.mxu0 0.0
        %2897 = vmatpush1.msra.mxu0 0.0
        %2898 = vmatprep.subr.mxu0 0.0
        %2899 = vmatpush1.msra.mxu0 0.0
        %2900 = vmatprep.subr.mxu0 0.0
        %2901 = vmatpush1.msra.mxu0 0.0
        %2902 = vmatprep.subr.mxu0 0.0
        %2903 = vmatpush1.msra.mxu0 0.0
        %2904 = vmatprep.subr.mxu0 0.0
        %2905 = vmatpush1.msra.mxu0 0.0
        %2906 = vmatprep.subr.mxu0 0.0
        %2907 = vmatpush1.msra.mxu0 0.0
        %2908 = vmatprep.subr.mxu0 0.0
        %2909 = vmatpush1.msra.mxu0 0.0
        %2910 = vmatprep.subr.mxu0 0.0
        %2911 = vmatpush1.msra.mxu0 0.0
        %2912 = vmatprep.subr.mxu0 0.0
        %2913 = vmatpush1.msra.mxu0 0.0
        %2914 = vmatprep.subr.mxu0 0.0
        %2915 = vmatpush1.msra.mxu0 0.0
        %2916 = vmatprep.subr.mxu0 0.0
        %2917 = vmatpush1.msra.mxu0 0.0
        %2918 = vmatprep.subr.mxu0 0.0
        %2919 = vmatpush1.msra.mxu0 0.0
        %2920 = vmatprep.subr.mxu0 0.0
        %2921 = vmatpush1.msra.mxu0 0.0
        %2922 = vmatprep.subr.mxu0 0.0
        %2923 = vmatpush1.msra.mxu0 0.0
        %2924 = vmatprep.subr.mxu0 0.0
        %2925 = vmatpush1.msra.mxu0 0.0
        %2926 = vmatprep.subr.mxu0 0.0
        %2927 = vmatpush1.msra.mxu0 0.0
        %2928 = vmatprep.subr.mxu0 0.0
        %2929 = vmatpush1.msra.mxu0 0.0
        %2930 = vmatprep.subr.mxu0 0.0
        %2931 = vmatpush1.msra.mxu0 0.0
        %2932 = vmatprep.subr.mxu0 0.0
        %2933 = vmatpush1.msra.mxu0 0.0
        %2934 = vmatprep.subr.mxu0 0.0
        %2935 = vmatpush1.msra.mxu0 0.0
        %2936 = vmatprep.subr.mxu0 0.0
        %2937 = vmatpush1.msra.mxu0 0.0
        %2938 = vmatprep.subr.mxu0 0.0
        %2939 = vmatpush1.msra.mxu0 0.0
        %2940 = vmatprep.subr.mxu0 0.0
        %2941 = vmatpush1.msra.mxu0 0.0
        %2942 = vmatprep.subr.mxu0 0.0
        %2943 = vmatpush1.msra.mxu0 0.0
        %2944 = vmatprep.subr.mxu0 0.0
        %2945 = vmatpush1.msra.mxu0 0.0
        %2946 = vmatprep.mubr.f32.mxu0 0.0
        %2947 = vmatmul.mubr.f32.gmra.mrb[0].mxu0 %v2880
        %v2948 = vpop.f32.mrb[0].mxu0
        %v2949 = vadd.f32 %v2804, %v2948
        %v2950 = vpop.f32.mrb[0].mxu0
        %2951 = vdwg.mxu0
        %v2953 = vsel %vm435, %v2793, 0
        %2955 = vmatprep.subr.mxu0 0.0
        %2956 = vmatpush1.msra.mxu0 %v2795
        %2957 = vmatprep.subr.mxu0 0.0
        %2958 = vmatpush1.msra.mxu0 %v2796
        %2959 = vmatprep.subr.mxu0 0.0
        %2960 = vmatpush1.msra.mxu0 %v2797
        %2961 = vmatprep.subr.mxu0 0.0
        %2962 = vmatpush1.msra.mxu0 %v2798
        %2963 = vmatprep.subr.mxu0 0.0
        %2964 = vmatpush1.msra.mxu0 0.0
        %2965 = vmatprep.subr.mxu0 0.0
        %2966 = vmatpush1.msra.mxu0 0.0
        %2967 = vmatprep.subr.mxu0 0.0
        %2968 = vmatpush1.msra.mxu0 0.0
        %2969 = vmatprep.subr.mxu0 0.0
        %2970 = vmatpush1.msra.mxu0 0.0
        %2971 = vmatprep.subr.mxu0 0.0
        %2972 = vmatpush1.msra.mxu0 0.0
        %2973 = vmatprep.subr.mxu0 0.0
        %2974 = vmatpush1.msra.mxu0 0.0
        %2975 = vmatprep.subr.mxu0 0.0
        %2976 = vmatpush1.msra.mxu0 0.0
        %2977 = vmatprep.subr.mxu0 0.0
        %2978 = vmatpush1.msra.mxu0 0.0
        %2979 = vmatprep.subr.mxu0 0.0
        %2980 = vmatpush1.msra.mxu0 0.0
        %2981 = vmatprep.subr.mxu0 0.0
        %2982 = vmatpush1.msra.mxu0 0.0
        %2983 = vmatprep.subr.mxu0 0.0
        %2984 = vmatpush1.msra.mxu0 0.0
        %2985 = vmatprep.subr.mxu0 0.0
        %2986 = vmatpush1.msra.mxu0 0.0
        %2987 = vmatprep.subr.mxu0 0.0
        %2988 = vmatpush1.msra.mxu0 0.0
        %2989 = vmatprep.subr.mxu0 0.0
        %2990 = vmatpush1.msra.mxu0 0.0
        %2991 = vmatprep.subr.mxu0 0.0
        %2992 = vmatpush1.msra.mxu0 0.0
        %2993 = vmatprep.subr.mxu0 0.0
        %2994 = vmatpush1.msra.mxu0 0.0
        %2995 = vmatprep.subr.mxu0 0.0
        %2996 = vmatpush1.msra.mxu0 0.0
        %2997 = vmatprep.subr.mxu0 0.0
        %2998 = vmatpush1.msra.mxu0 0.0
        %2999 = vmatprep.subr.mxu0 0.0
        %3000 = vmatpush1.msra.mxu0 0.0
        %3001 = vmatprep.subr.mxu0 0.0
        %3002 = vmatpush1.msra.mxu0 0.0
        %3003 = vmatprep.subr.mxu0 0.0
        %3004 = vmatpush1.msra.mxu0 0.0
        %3005 = vmatprep.subr.mxu0 0.0
        %3006 = vmatpush1.msra.mxu0 0.0
        %3007 = vmatprep.subr.mxu0 0.0
        %3008 = vmatpush1.msra.mxu0 0.0
        %3009 = vmatprep.subr.mxu0 0.0
        %3010 = vmatpush1.msra.mxu0 0.0
        %3011 = vmatprep.subr.mxu0 0.0
        %3012 = vmatpush1.msra.mxu0 0.0
        %3013 = vmatprep.subr.mxu0 0.0
        %3014 = vmatpush1.msra.mxu0 0.0
        %3015 = vmatprep.subr.mxu0 0.0
        %3016 = vmatpush1.msra.mxu0 0.0
        %3017 = vmatprep.subr.mxu0 0.0
        %3018 = vmatpush1.msra.mxu0 0.0
        %3019 = vmatprep.mubr.f32.mxu0 0.0
        %3020 = vmatmul.mubr.f32.gmra.mrb[0].mxu0 %v2953
        %v3021 = vpop.f32.mrb[0].mxu0
        %v3022 = vadd.f32 %v2804, %v3021
        %v3023 = vpop.f32.mrb[0].mxu0
        %3024 = vdwg.mxu0
        %v3026 = vsel %vm435, %v2794, 0
        %3028 = vmatprep.subr.mxu0 0.0
        %3029 = vmatpush1.msra.mxu0 %v2795
        %3030 = vmatprep.subr.mxu0 0.0
        %3031 = vmatpush1.msra.mxu0 %v2796
        %3032 = vmatprep.subr.mxu0 0.0
        %3033 = vmatpush1.msra.mxu0 %v2797
        %3034 = vmatprep.subr.mxu0 0.0
        %3035 = vmatpush1.msra.mxu0 %v2798
        %3036 = vmatprep.subr.mxu0 0.0
        %3037 = vmatpush1.msra.mxu0 0.0
        %3038 = vmatprep.subr.mxu0 0.0
        %3039 = vmatpush1.msra.mxu0 0.0
        %3040 = vmatprep.subr.mxu0 0.0
        %3041 = vmatpush1.msra.mxu0 0.0
        %3042 = vmatprep.subr.mxu0 0.0
        %3043 = vmatpush1.msra.mxu0 0.0
        %3044 = vmatprep.subr.mxu0 0.0
        %3045 = vmatpush1.msra.mxu0 0.0
        %3046 = vmatprep.subr.mxu0 0.0
        %3047 = vmatpush1.msra.mxu0 0.0
        %3048 = vmatprep.subr.mxu0 0.0
        %3049 = vmatpush1.msra.mxu0 0.0
        %3050 = vmatprep.subr.mxu0 0.0
        %3051 = vmatpush1.msra.mxu0 0.0
        %3052 = vmatprep.subr.mxu0 0.0
        %3053 = vmatpush1.msra.mxu0 0.0
        %3054 = vmatprep.subr.mxu0 0.0
        %3055 = vmatpush1.msra.mxu0 0.0
        %3056 = vmatprep.subr.mxu0 0.0
        %3057 = vmatpush1.msra.mxu0 0.0
        %3058 = vmatprep.subr.mxu0 0.0
        %3059 = vmatpush1.msra.mxu0 0.0
        %3060 = vmatprep.subr.mxu0 0.0
        %3061 = vmatpush1.msra.mxu0 0.0
        %3062 = vmatprep.subr.mxu0 0.0
        %3063 = vmatpush1.msra.mxu0 0.0
        %3064 = vmatprep.subr.mxu0 0.0
        %3065 = vmatpush1.msra.mxu0 0.0
        %3066 = vmatprep.subr.mxu0 0.0
        %3067 = vmatpush1.msra.mxu0 0.0
        %3068 = vmatprep.subr.mxu0 0.0
        %3069 = vmatpush1.msra.mxu0 0.0
        %3070 = vmatprep.subr.mxu0 0.0
        %3071 = vmatpush1.msra.mxu0 0.0
        %3072 = vmatprep.subr.mxu0 0.0
        %3073 = vmatpush1.msra.mxu0 0.0
        %3074 = vmatprep.subr.mxu0 0.0
        %3075 = vmatpush1.msra.mxu0 0.0
        %3076 = vmatprep.subr.mxu0 0.0
        %3077 = vmatpush1.msra.mxu0 0.0
        %3078 = vmatprep.subr.mxu0 0.0
        %3079 = vmatpush1.msra.mxu0 0.0
        %3080 = vmatprep.subr.mxu0 0.0
        %3081 = vmatpush1.msra.mxu0 0.0
        %3082 = vmatprep.subr.mxu0 0.0
        %3083 = vmatpush1.msra.mxu0 0.0
        %3084 = vmatprep.subr.mxu0 0.0
        %3085 = vmatpush1.msra.mxu0 0.0
        %3086 = vmatprep.subr.mxu0 0.0
        %3087 = vmatpush1.msra.mxu0 0.0
        %3088 = vmatprep.subr.mxu0 0.0
        %3089 = vmatpush1.msra.mxu0 0.0
        %3090 = vmatprep.subr.mxu0 0.0
        %3091 = vmatpush1.msra.mxu0 0.0
        %3092 = vmatprep.mubr.f32.mxu0 0.0
        %3093 = vmatmul.mubr.f32.gmra.mrb[0].mxu0 %v3026
        %v3094 = vpop.f32.mrb[0].mxu0
        %v3095 = vadd.f32 %v2804, %v3094
        %v3096 = vpop.f32.mrb[0].mxu0
        %3097 = vdwg.mxu0
        %vm3098 = vcmask 257024
        %3099 = vst.msk [vmem:[%s419] sm:$0xf] %vm3098, %v2876
        %3100 = vst.msk [vmem:[%s419 + $0x4] sm:$0xf] %vm3098, %v2949
        %3101 = vst.msk [vmem:[%s419 + $0x8] sm:$0xf] %vm3098, %v3022
        %3102 = vst.msk [vmem:[%s419 + $0xc] sm:$0xf] %vm3098, %v3095
        %s3103 = sand.u32 %s210, 1
        %s3104 = scalar_lea.sflag [#allocation4], %s3103
        %s3105 = sand.u32 %s210, 1
        %s3106 = smul.addr %s3105, 16
        %s3107 = scalar_lea.vmem [#allocation16], %s3106
        // Predicated region
        $region85: #{dynamixer_forward.9} parent=51 // pred_check
          %p3108 = pneg %p220
        $region86: #{dynamixer_forward.9} parent=51 // pred_check_branch
          %3110 = sbr.rel (%p3108) target = $region88
        $region87: #{dynamixer_forward.9} parent=51 // pred_region
          %s3111 = smul.u32 4, %s29
          %s3113 = ssub.s32 256, 256
          %3114 = vsyncadd %s3104, %s3113
          %s3115 = smul.addr %s3111, 64
          %s3116 = scalar_lea.hbm %s8, %s3115
          %s3117 = sshll.u32 %s3107, 4
          %s3118 = int_to_ptr.vmem [resolvable:$true] %s3117
          %3123 = dma.vmem_to_hbm [thread:$0]  %s3118, 256, %s3116, %s3104, 64, 64, 4
        $region88: #{dynamixer_forward.9} parent=51 // pred_fallthru
          _
      $region52: #{dynamixer_forward.9} parent=5 // pred_fallthru
        _
      %p3124 = scmp.le.s32.totalorder 2, %s24
      // Predicated region
      $region89: #{dynamixer_forward.9} parent=5 // pred_check
        %p3125 = pneg %p3124
      $region90: #{dynamixer_forward.9} parent=5 // pred_check_branch
        %3127 = sbr.rel (%p3125) target = $region92
      $region91: #{dynamixer_forward.9} parent=5 // pred_region
        %s3128 = ssub.s32 %s24, 2
        // Predicated region
        $region93: #{dynamixer_forward.9} parent=91 // pred_check
          %p3129 = pneg %p226
        $region94: #{dynamixer_forward.9} parent=91 // pred_check_branch
          %3131 = sbr.rel (%p3129) target = $region96
        $region95: #{dynamixer_forward.9} parent=91 // pred_region
          %s3132 = sand.u32 %s211, 1
          %s3133 = scalar_lea.sflag [#allocation4], %s3132
          %s3134 = sand.u32 %s211, 1
          %s3135 = smul.addr %s3134, 16
          %s3136 = scalar_lea.vmem [#allocation16], %s3135
          %3137 = dma.done %s3133, 256
        $region96: #{dynamixer_forward.9} parent=91 // pred_fallthru
          _
      $region92: #{dynamixer_forward.9} parent=5 // pred_fallthru
        _
    $region6: #{dynamixer_forward.9} parent=1 // loop_footer
      %s28 = sadd.s32 1, %s24
    $region7: #{dynamixer_forward.9} parent=1 // loop_footer_branch
      %23 = sbr.rel target = $region3
    $region8: #{dynamixer_forward.9} parent=1 // loop_exit
      _
    %3138 = vsyncpa [#allocation3], 1
    %s3139 = scalar_lea.sflag [#allocation3], 1
    %3140 = vsyncpa %s3139, 1
    %3141 = vsyncpa [#allocation6], 1
    %3142 = vsyncpa [#allocation9], 1
    %3143 = vsyncpa [#allocation12], 1
    %3144 = vsyncpa [#allocation15], 1
    %3145 = vsyncpa [#allocation4], 1
    %s3146 = scalar_lea.sflag [#allocation4], 1
    %3147 = vsyncpa %s3146, 1

</llo_original>
